<compile_context>
chip_gen: v6e
topology: v6e:2x2x1
jax: 0.10.0
libtpu: 0.0.40
codegen_flags: <defaults>
</compile_context>

<pallas_src>
import functools
import math

import jax
import jax.numpy as jnp
from jax import lax
from jax.experimental import pallas as pl
from jax.experimental.pallas import tpu as pltpu

PAD = 0  # constants.PAD


# ----------------------------------------------------------------------------
# Fused Pallas kernel: encoder + decoder(+attention) + generator/NLL loss
# ----------------------------------------------------------------------------
def seq2seq_kernel(src_ref, tgt_ref, len_ref, tid_ref,
                   ewhh_ref, dwhh_ref, waT_ref, wcc_ref, wch_ref,
                   wg_ref, bg_ref,
                   loss_ref, mem_sc, dech_sc, *, inv_batch):
    """Shapes (B = padded batch = 8, S = src steps, Td = decoder steps = T):
      src_ref: (S*B, 4H)   pre-projected source inputs, time-major (row = t*B + b)
      tgt_ref: (Td*B, 4H)  pre-projected target inputs, time-major
      len_ref: (B, 1) i32  source lengths (0 for padded rows)
      tid_ref: (B*Td, 1) i32 shifted targets, batch-major (row = b*Td + t); PAD masked
      ewhh/dwhh: (H, 4H)   waT: (H, H) == wa.T   wcc/wch: (H, H)
      wg: (H, 128) lane-padded generator   bg: (1, 128) (-1e9 on pad columns)
      loss_ref: (1, 1) f32
      mem_sc: (B, S, H) VMEM scratch      dech_sc: (B, Td, H) VMEM scratch
    """
    B, S, H = mem_sc.shape
    Td = dech_sc.shape[1]

    lens = len_ref[...]                 # (B, 1) i32 (hoisted)
    ewhh = ewhh_ref[...]
    dwhh = dwhh_ref[...]

    def lstm_step(pre, h, c, whh):
        # pre = x_t @ W_ih + b (folded into the embedding table in the wrapper);
        # only the recurrent matmul + gate math sits on the serial chain.
        g = pre + jnp.dot(h, whh, preferred_element_type=jnp.float32)    # (B, 4H)
        sg = jax.nn.sigmoid(g)          # full-vreg EUP
        tg = jnp.tanh(g)                # full-vreg EUP
        c_new = sg[:, H:2 * H] * c + sg[:, 0:H] * tg[:, 2 * H:3 * H]
        h_new = sg[:, 3 * H:4 * H] * jnp.tanh(c_new)
        return h_new, c_new

    # ---------------- encoder (packed-sequence semantics via length mask) ----------------
    h = jnp.zeros((B, H), jnp.float32)
    c = jnp.zeros((B, H), jnp.float32)
    for t in range(S):                                                   # static unroll
        h_new, c_new = lstm_step(src_ref[t * B:(t + 1) * B, :], h, c, ewhh)
        keep = t < lens                                                  # (B, 1) bool
        h = jnp.where(keep, h_new, h)
        c = jnp.where(keep, c_new, c)
        mem_sc[:, t:t + 1, :] = jnp.where(keep, h_new, 0.0)[:, None, :]  # zero past length

    # ---------------- decoder LSTM only (attention hoisted off the serial chain) ---------
    for t in range(Td):                                                  # static unroll
        h, c = lstm_step(tgt_ref[t * B:(t + 1) * B, :], h, c, dwhh)
        dech_sc[:, t:t + 1, :] = h[:, None, :]

    # ---------------- batched Luong 'general' attention over all decoder steps -----------
    mem_b = mem_sc[...]                                                  # (B, S, H)
    dech_b = dech_sc[...]                                                # (B, Td, H)
    # score(h_t, m_s) = h_t . (Wa m_s) -> precompute memW = mem @ Wa^T once.
    memW_b = jnp.dot(mem_b.reshape(B * S, H), waT_ref[...],
                     preferred_element_type=jnp.float32).reshape(B, S, H)
    neg = jnp.where(lax.broadcasted_iota(jnp.int32, (B, S), 1) < lens,
                    0.0, -1e9)                                           # (B, S)

    scores = jnp.einsum('bth,bsh->bts', dech_b, memW_b,
                        preferred_element_type=jnp.float32) + neg[:, None, :]
    m = jnp.max(scores, axis=-1, keepdims=True)
    e = jnp.exp(scores - m)
    align = e * pl.reciprocal(jnp.sum(e, axis=-1, keepdims=True), approx=True)
    ctx = jnp.einsum('bts,bsh->bth', align, mem_b,
                     preferred_element_type=jnp.float32)                 # (B, Td, H)

    # linear_out on [ctx; h] without the lane concat: ctx@wc_ctx + h@wc_h.
    ctx_f = ctx.reshape(B * Td, H)
    dech_f = dech_b.reshape(B * Td, H)
    attn_h = jnp.tanh(
        jnp.dot(ctx_f, wcc_ref[...], preferred_element_type=jnp.float32)
        + jnp.dot(dech_f, wch_ref[...], preferred_element_type=jnp.float32))

    # ---------------- generator + log-softmax + masked NLL (one batched matmul) ----------
    logits = jnp.dot(attn_h, wg_ref[...],
                     preferred_element_type=jnp.float32) + bg_ref[...]   # (B*Td, 128)
    mmax = jnp.max(logits, axis=-1, keepdims=True)
    logp = logits - (mmax + jnp.log(jnp.sum(jnp.exp(logits - mmax),
                                            axis=-1, keepdims=True)))
    tid = tid_ref[...]                                                   # (B*Td, 1)
    onehot = lax.broadcasted_iota(jnp.int32, logits.shape, 1) == tid
    nll = -jnp.sum(jnp.where(onehot, logp, 0.0), axis=-1, keepdims=True)
    msk = (tid != PAD).astype(jnp.float32)
    # loss = ml_loss.sum(1).mean() over the REAL batch = sum_{b,t}(nll*mask) / B_real
    loss_ref[...] = jnp.sum(nll * msk, axis=(0, 1), keepdims=True) * inv_batch


# ----------------------------------------------------------------------------
# Wrapper (embedding-folded gathers + padding / layout glue are plain JAX)
# ----------------------------------------------------------------------------
def seq2seq_forward(p, source_rep, source_len, target_rep, target_len, target_seq):
    """Mirrors Seq2seq.forward (copy_attn=False). Returns scalar loss."""
    del target_len  # unused by the forward pass (loss masks PAD instead)
    B, S = source_rep.shape
    T = target_rep.shape[1]
    H = p['enc_whh'].shape[0]
    V = p['wg'].shape[1]
    B_pad = 8            # sublane quantum
    V_pad = 128          # lane quantum for generator

    # Fold the embedding into the input projections: gather emb@W_ih+b tables directly.
    hd = lambda a, b: jnp.dot(a, b, precision=lax.Precision.HIGHEST)
    enc_tab = hd(p['emb'], p['enc_wih']) + p['enc_b']     # (VOCAB, 4H)
    dec_tab = hd(p['emb'], p['dec_wih']) + p['dec_b']     # (VOCAB, 4H)

    # Pad batch to 8: padded rows get PAD tokens, source_len=0, tid=PAD (masked in loss).
    pb = B_pad - B
    src_pad = jnp.pad(source_rep, ((0, pb), (0, 0)))                       # PAD==0
    tgt_pad = jnp.pad(target_rep, ((0, pb), (0, 0)))
    seq_pad = jnp.pad(target_seq, ((0, pb), (0, 0)))
    len_pad = jnp.pad(source_len.astype(jnp.int32), (0, pb))

    # Time-major-flat pre-projected inputs (row = t*B_pad + b).
    src_pre = jnp.transpose(enc_tab[src_pad], (1, 0, 2)).reshape(S * B_pad, 4 * H)
    # Decoder runs all T steps (like the module); the last step is masked in the loss.
    tgt_pre = jnp.transpose(dec_tab[tgt_pad], (1, 0, 2)).reshape(T * B_pad, 4 * H)
    len_b1 = len_pad.reshape(B_pad, 1)
    # Batch-major-flat shifted targets, padded with one extra PAD column for step T-1.
    tid = jnp.pad(seq_pad[:, 1:], ((0, 0), (0, 1))).astype(jnp.int32).reshape(B_pad * T, 1)

    # Lane-pad the generator: zero weights + (-1e9) bias on pad columns (softmax unchanged).
    wg_p = jnp.pad(p['wg'], ((0, 0), (0, V_pad - V)))
    bg_p = jnp.pad(p['bg'], ((0, 0), (0, V_pad - V)), constant_values=-1e9)

    vmem = pl.BlockSpec(memory_space=pltpu.MemorySpace.VMEM)
    kernel = functools.partial(seq2seq_kernel, inv_batch=1.0 / B)
    loss = pl.pallas_call(
        kernel,
        out_shape=jax.ShapeDtypeStruct((1, 1), jnp.float32),
        in_specs=[vmem] * 11,
        out_specs=vmem,
        scratch_shapes=[pltpu.VMEM((B_pad, S, H), jnp.float32),    # encoder memory bank
                        pltpu.VMEM((B_pad, T, H), jnp.float32)],   # decoder hiddens
    )(src_pre, tgt_pre, len_b1, tid,
      p['enc_whh'], p['dec_whh'],
      jnp.transpose(p['wa']), p['wc'][:H, :], p['wc'][H:, :],
      wg_p, bg_p)
    return loss[0, 0]


# ----------------------------------------------------------------------------
# Pure-JAX reference (same math, batch-major, B unpadded) for validation
# ----------------------------------------------------------------------------
def _hd(a, b):
    return jnp.dot(a, b, precision=lax.Precision.HIGHEST)


def _lstm_cell_ref(x, h, c, wih, whh, b):
    H = whh.shape[0]
    gates = _hd(x, wih) + _hd(h, whh) + b
    i = jax.nn.sigmoid(gates[:, 0:H])
    f = jax.nn.sigmoid(gates[:, H:2 * H])
    g = jnp.tanh(gates[:, 2 * H:3 * H])
    o = jax.nn.sigmoid(gates[:, 3 * H:4 * H])
    c_new = f * c + i * g
    h_new = o * jnp.tanh(c_new)
    return h_new, c_new


def ref_forward(p, source_rep, source_len, target_rep, target_seq):
    B, S = source_rep.shape
    T = target_rep.shape[1]
    H = p['enc_whh'].shape[0]
    x = p['emb'][source_rep]                                  # (B, S, E)
    h = jnp.zeros((B, H), jnp.float32)
    c = jnp.zeros((B, H), jnp.float32)
    mem = []
    for t in range(S):
        hn, cn = _lstm_cell_ref(x[:, t], h, c, p['enc_wih'], p['enc_whh'], p['enc_b'])
        m = (t < source_len)[:, None].astype(jnp.float32)
        h = m * hn + (1.0 - m) * h
        c = m * cn + (1.0 - m) * c
        mem.append(m * hn)
    mem = jnp.stack(mem, axis=1)                              # (B, S, H)

    y = p['emb'][target_rep]                                  # (B, T, E)
    valid = jnp.arange(S)[None, :] < source_len[:, None]      # (B, S)
    outs = []
    for t in range(T):
        h, c = _lstm_cell_ref(y[:, t], h, c, p['dec_wih'], p['dec_whh'], p['dec_b'])
        q = _hd(h, p['wa'])
        sc = jnp.einsum('bh,bsh->bs', q, mem,
                        precision=lax.Precision.HIGHEST) + jnp.where(valid, 0.0, -1e9)
        mmax = sc.max(axis=1, keepdims=True)
        e = jnp.exp(sc - mmax)
        al = e / e.sum(axis=1, keepdims=True)
        ctx = jnp.einsum('bs,bsh->bh', al, mem, precision=lax.Precision.HIGHEST)
        outs.append(jnp.tanh(_hd(jnp.concatenate([ctx, h], axis=1), p['wc'])))
    dec = jnp.stack(outs, axis=1)                             # (B, T, H)

    logits = jnp.einsum('bth,hv->btv', dec[:, :-1], p['wg'],
                        precision=lax.Precision.HIGHEST) + p['bg'][None]
    mmax = logits.max(-1, keepdims=True)
    logp = logits - (mmax + jnp.log(jnp.exp(logits - mmax).sum(-1, keepdims=True)))
    tgt = target_seq[:, 1:]
    nll = -jnp.take_along_axis(logp, tgt[..., None], axis=-1)[..., 0]
    msk = (tgt != PAD).astype(jnp.float32)
    return (nll * msk).sum(axis=1).mean()


# ----------------------------------------------------------------------------
# Parameter / data construction
# ----------------------------------------------------------------------------
def init_params(key, vocab, E, H, V_tgt):
    ks = jax.random.split(key, 11)
    s = 0.1
    n = lambda k, shp: (jax.random.normal(k, shp, jnp.float32) * s)
    return {
        'emb':     n(ks[0], (vocab, E)),
        'enc_wih': n(ks[1], (E, 4 * H)),
        'enc_whh': n(ks[2], (H, 4 * H)),
        'enc_b':   n(ks[3], (1, 4 * H)),
        'dec_wih': n(ks[4], (E, 4 * H)),
        'dec_whh': n(ks[5], (H, 4 * H)),
        'dec_b':   n(ks[6], (1, 4 * H)),
        'wa':      n(ks[7], (H, H)),          # GlobalAttention 'general', bias=False
        'wc':      n(ks[8], (2 * H, H)),      # linear_out, bias=False
        'wg':      n(ks[9], (H, V_tgt)),      # generator
        'bg':      n(ks[10], (1, V_tgt)),
    }


if __name__ == "__main__":
    B, S, T = 2, 8, 8
    E, H = 16, 32
    VOCAB = 48          # shared src/tgt vocab (embedder reused for both in the module)

    key = jax.random.PRNGKey(0)
    kp, k1, k2 = jax.random.split(key, 3)
    params = init_params(kp, VOCAB, E, H, VOCAB)

    source_rep = jax.random.randint(k1, (B, S), 1, VOCAB, dtype=jnp.int32)
    source_len = jnp.array([8, 6], dtype=jnp.int32)
    target_len = jnp.array([8, 5], dtype=jnp.int32)
    tgt_raw = jax.random.randint(k2, (B, T), 1, VOCAB, dtype=jnp.int32)
    tgt_mask = jnp.arange(T)[None, :] < target_len[:, None]
    target_seq = jnp.where(tgt_mask, tgt_raw, PAD)
    target_rep = target_seq                                    # same tokens fed to embedder

    loss = seq2seq_forward(params, source_rep, source_len,
                           target_rep, target_len, target_seq)
    loss = jax.block_until_ready(loss)

    ref = ref_forward(params, source_rep, source_len, target_rep, target_seq)
    lk, lr = float(loss), float(ref)
    assert math.isfinite(lk), "kernel loss is not finite"
    assert abs(lk - lr) <= 1e-3 * max(1.0, abs(lr)), f"mismatch: kernel={lk} ref={lr}"
    print("KERNEL_OK")
</pallas_src>

<mosaic_0001>
module attributes {stable_mosaic.version = 11 : i64} {
  func.func @seq2seq_kernel(%arg0: memref<64x128xf32, #tpu.memory_space<vmem>>, %arg1: memref<64x128xf32, #tpu.memory_space<vmem>>, %arg2: memref<8x1xi32, #tpu.memory_space<vmem>>, %arg3: memref<64x1xi32, #tpu.memory_space<vmem>>, %arg4: memref<32x128xf32, #tpu.memory_space<vmem>>, %arg5: memref<32x128xf32, #tpu.memory_space<vmem>>, %arg6: memref<32x32xf32, #tpu.memory_space<vmem>>, %arg7: memref<32x32xf32, #tpu.memory_space<vmem>>, %arg8: memref<32x32xf32, #tpu.memory_space<vmem>>, %arg9: memref<32x128xf32, #tpu.memory_space<vmem>>, %arg10: memref<1x128xf32, #tpu.memory_space<vmem>>, %arg11: memref<1x1xf32, #tpu.memory_space<vmem>>, %arg12: memref<8x8x32xf32, #tpu.memory_space<vmem>>, %arg13: memref<8x8x32xf32, #tpu.memory_space<vmem>>) attributes {dimension_semantics = [], scalar_prefetch = 0 : i64, scratch_operands = 2 : i64, tpu.core_type = #tpu.core_type<tc>} {
    %c0 = arith.constant 0 : index
    %c0_0 = arith.constant 0 : index
    %0 = vector.load %arg2[%c0, %c0_0] : memref<8x1xi32, #tpu.memory_space<vmem>>, vector<8x1xi32>
    %c0_1 = arith.constant 0 : index
    %c0_2 = arith.constant 0 : index
    %1 = vector.load %arg4[%c0_1, %c0_2] : memref<32x128xf32, #tpu.memory_space<vmem>>, vector<32x128xf32>
    %c0_3 = arith.constant 0 : index
    %c0_4 = arith.constant 0 : index
    %2 = vector.load %arg5[%c0_3, %c0_4] : memref<32x128xf32, #tpu.memory_space<vmem>>, vector<32x128xf32>
    %cst = arith.constant 0.000000e+00 : f32
    %3 = vector.broadcast %cst : f32 to vector<8x32xf32>
    %cst_5 = arith.constant 0.000000e+00 : f32
    %4 = vector.broadcast %cst_5 : f32 to vector<8x32xf32>
    %c0_6 = arith.constant 0 : index
    %c0_7 = arith.constant 0 : index
    %5 = vector.load %arg0[%c0_6, %c0_7] : memref<64x128xf32, #tpu.memory_space<vmem>>, vector<8x128xf32>
    %cst_8 = arith.constant dense<0.000000e+00> : vector<8x128xf32>
    %6 = tpu.matmul %3, %1, %cst_8 {dimension_numbers = #tpu.dot_dimension_numbers<[1], [0], [0], [1], [0, 0, 1, 1], [], []>} : vector<8x32xf32>, vector<32x128xf32>, vector<8x128xf32> -> vector<8x128xf32>
    %7 = arith.addf %5, %6 : vector<8x128xf32>
    %8 = arith.negf %7 : vector<8x128xf32>
    %9 = math.exp %8 : vector<8x128xf32>
    %cst_9 = arith.constant 1.000000e+00 : f32
    %10 = vector.broadcast %cst_9 : f32 to vector<8x128xf32>
    %11 = arith.addf %10, %9 : vector<8x128xf32>
    %12 = arith.divf %10, %11 : vector<8x128xf32>
    %13 = math.tanh %7 : vector<8x128xf32>
    %14 = vector.extract_strided_slice %12 {offsets = [0, 32], sizes = [8, 32], strides = [1, 1]} : vector<8x128xf32> to vector<8x32xf32>
    %15 = arith.mulf %14, %4 : vector<8x32xf32>
    %16 = vector.extract_strided_slice %12 {offsets = [0, 0], sizes = [8, 32], strides = [1, 1]} : vector<8x128xf32> to vector<8x32xf32>
    %17 = vector.extract_strided_slice %13 {offsets = [0, 64], sizes = [8, 32], strides = [1, 1]} : vector<8x128xf32> to vector<8x32xf32>
    %18 = arith.mulf %16, %17 : vector<8x32xf32>
    %19 = arith.addf %15, %18 : vector<8x32xf32>
    %20 = vector.extract_strided_slice %12 {offsets = [0, 96], sizes = [8, 32], strides = [1, 1]} : vector<8x128xf32> to vector<8x32xf32>
    %21 = math.tanh %19 : vector<8x32xf32>
    %22 = arith.mulf %20, %21 : vector<8x32xf32>
    %c0_i32 = arith.constant 0 : i32
    %23 = vector.broadcast %c0_i32 : i32 to vector<8x1xi32>
    %24 = arith.cmpi sgt, %0, %23 : vector<8x1xi32>
    %25 = vector.shape_cast %24 : vector<8x1xi1> to vector<8x1xi1>
    %26 = vector.broadcast %25 : vector<8x1xi1> to vector<8x32xi1>
    %27 = arith.select %26, %22, %3 : vector<8x32xi1>, vector<8x32xf32>
    %28 = vector.shape_cast %24 : vector<8x1xi1> to vector<8x1xi1>
    %29 = vector.broadcast %28 : vector<8x1xi1> to vector<8x32xi1>
    %30 = arith.select %29, %19, %4 : vector<8x32xi1>, vector<8x32xf32>
    %cst_10 = arith.constant 0.000000e+00 : f32
    %31 = vector.shape_cast %24 : vector<8x1xi1> to vector<8x1xi1>
    %32 = vector.broadcast %31 : vector<8x1xi1> to vector<8x32xi1>
    %33 = vector.broadcast %cst_10 : f32 to vector<8x32xf32>
    %34 = arith.select %32, %22, %33 : vector<8x32xi1>, vector<8x32xf32>
    %35 = vector.shape_cast %34 : vector<8x32xf32> to vector<8x1x32xf32>
    %c0_11 = arith.constant 0 : index
    %c0_12 = arith.constant 0 : index
    %c0_13 = arith.constant 0 : index
    %36 = vector.load %arg12[%c0_11, %c0_12, %c0_13] : memref<8x8x32xf32, #tpu.memory_space<vmem>>, vector<8x1x32xf32>
    tpu.vector_store %arg12[%c0_11, %c0_12, %c0_13], %35 {strides = array<i32>} : memref<8x8x32xf32, #tpu.memory_space<vmem>>, vector<8x1x32xf32>,
    %c8 = arith.constant 8 : index
    %c0_14 = arith.constant 0 : index
    %37 = vector.load %arg0[%c8, %c0_14] : memref<64x128xf32, #tpu.memory_space<vmem>>, vector<8x128xf32>
    %cst_15 = arith.constant dense<0.000000e+00> : vector<8x128xf32>
    %38 = tpu.matmul %27, %1, %cst_15 {dimension_numbers = #tpu.dot_dimension_numbers<[1], [0], [0], [1], [0, 0, 1, 1], [], []>} : vector<8x32xf32>, vector<32x128xf32>, vector<8x128xf32> -> vector<8x128xf32>
    %39 = arith.addf %37, %38 : vector<8x128xf32>
    %40 = arith.negf %39 : vector<8x128xf32>
    %41 = math.exp %40 : vector<8x128xf32>
    %cst_16 = arith.constant 1.000000e+00 : f32
    %42 = vector.broadcast %cst_16 : f32 to vector<8x128xf32>
    %43 = arith.addf %42, %41 : vector<8x128xf32>
    %44 = arith.divf %42, %43 : vector<8x128xf32>
    %45 = math.tanh %39 : vector<8x128xf32>
    %46 = vector.extract_strided_slice %44 {offsets = [0, 32], sizes = [8, 32], strides = [1, 1]} : vector<8x128xf32> to vector<8x32xf32>
    %47 = arith.mulf %46, %30 : vector<8x32xf32>
    %48 = vector.extract_strided_slice %44 {offsets = [0, 0], sizes = [8, 32], strides = [1, 1]} : vector<8x128xf32> to vector<8x32xf32>
    %49 = vector.extract_strided_slice %45 {offsets = [0, 64], sizes = [8, 32], strides = [1, 1]} : vector<8x128xf32> to vector<8x32xf32>
    %50 = arith.mulf %48, %49 : vector<8x32xf32>
    %51 = arith.addf %47, %50 : vector<8x32xf32>
    %52 = vector.extract_strided_slice %44 {offsets = [0, 96], sizes = [8, 32], strides = [1, 1]} : vector<8x128xf32> to vector<8x32xf32>
    %53 = math.tanh %51 : vector<8x32xf32>
    %54 = arith.mulf %52, %53 : vector<8x32xf32>
    %c1_i32 = arith.constant 1 : i32
    %55 = vector.broadcast %c1_i32 : i32 to vector<8x1xi32>
    %56 = arith.cmpi sgt, %0, %55 : vector<8x1xi32>
    %57 = vector.shape_cast %56 : vector<8x1xi1> to vector<8x1xi1>
    %58 = vector.broadcast %57 : vector<8x1xi1> to vector<8x32xi1>
    %59 = arith.select %58, %54, %27 : vector<8x32xi1>, vector<8x32xf32>
    %60 = vector.shape_cast %56 : vector<8x1xi1> to vector<8x1xi1>
    %61 = vector.broadcast %60 : vector<8x1xi1> to vector<8x32xi1>
    %62 = arith.select %61, %51, %30 : vector<8x32xi1>, vector<8x32xf32>
    %cst_17 = arith.constant 0.000000e+00 : f32
    %63 = vector.shape_cast %56 : vector<8x1xi1> to vector<8x1xi1>
    %64 = vector.broadcast %63 : vector<8x1xi1> to vector<8x32xi1>
    %65 = vector.broadcast %cst_17 : f32 to vector<8x32xf32>
    %66 = arith.select %64, %54, %65 : vector<8x32xi1>, vector<8x32xf32>
    %67 = vector.shape_cast %66 : vector<8x32xf32> to vector<8x1x32xf32>
    %c0_18 = arith.constant 0 : index
    %c1 = arith.constant 1 : index
    %c0_19 = arith.constant 0 : index
    %68 = vector.load %arg12[%c0_18, %c1, %c0_19] : memref<8x8x32xf32, #tpu.memory_space<vmem>>, vector<8x1x32xf32>
    tpu.vector_store %arg12[%c0_18, %c1, %c0_19], %67 {strides = array<i32>} : memref<8x8x32xf32, #tpu.memory_space<vmem>>, vector<8x1x32xf32>,
    %c16 = arith.constant 16 : index
    %c0_20 = arith.constant 0 : index
    %69 = vector.load %arg0[%c16, %c0_20] : memref<64x128xf32, #tpu.memory_space<vmem>>, vector<8x128xf32>
    %cst_21 = arith.constant dense<0.000000e+00> : vector<8x128xf32>
    %70 = tpu.matmul %59, %1, %cst_21 {dimension_numbers = #tpu.dot_dimension_numbers<[1], [0], [0], [1], [0, 0, 1, 1], [], []>} : vector<8x32xf32>, vector<32x128xf32>, vector<8x128xf32> -> vector<8x128xf32>
    %71 = arith.addf %69, %70 : vector<8x128xf32>
    %72 = arith.negf %71 : vector<8x128xf32>
    %73 = math.exp %72 : vector<8x128xf32>
    %cst_22 = arith.constant 1.000000e+00 : f32
    %74 = vector.broadcast %cst_22 : f32 to vector<8x128xf32>
    %75 = arith.addf %74, %73 : vector<8x128xf32>
    %76 = arith.divf %74, %75 : vector<8x128xf32>
    %77 = math.tanh %71 : vector<8x128xf32>
    %78 = vector.extract_strided_slice %76 {offsets = [0, 32], sizes = [8, 32], strides = [1, 1]} : vector<8x128xf32> to vector<8x32xf32>
    %79 = arith.mulf %78, %62 : vector<8x32xf32>
    %80 = vector.extract_strided_slice %76 {offsets = [0, 0], sizes = [8, 32], strides = [1, 1]} : vector<8x128xf32> to vector<8x32xf32>
    %81 = vector.extract_strided_slice %77 {offsets = [0, 64], sizes = [8, 32], strides = [1, 1]} : vector<8x128xf32> to vector<8x32xf32>
    %82 = arith.mulf %80, %81 : vector<8x32xf32>
    %83 = arith.addf %79, %82 : vector<8x32xf32>
    %84 = vector.extract_strided_slice %76 {offsets = [0, 96], sizes = [8, 32], strides = [1, 1]} : vector<8x128xf32> to vector<8x32xf32>
    %85 = math.tanh %83 : vector<8x32xf32>
    %86 = arith.mulf %84, %85 : vector<8x32xf32>
    %c2_i32 = arith.constant 2 : i32
    %87 = vector.broadcast %c2_i32 : i32 to vector<8x1xi32>
    %88 = arith.cmpi sgt, %0, %87 : vector<8x1xi32>
    %89 = vector.shape_cast %88 : vector<8x1xi1> to vector<8x1xi1>
    %90 = vector.broadcast %89 : vector<8x1xi1> to vector<8x32xi1>
    %91 = arith.select %90, %86, %59 : vector<8x32xi1>, vector<8x32xf32>
    %92 = vector.shape_cast %88 : vector<8x1xi1> to vector<8x1xi1>
    %93 = vector.broadcast %92 : vector<8x1xi1> to vector<8x32xi1>
    %94 = arith.select %93, %83, %62 : vector<8x32xi1>, vector<8x32xf32>
    %cst_23 = arith.constant 0.000000e+00 : f32
    %95 = vector.shape_cast %88 : vector<8x1xi1> to vector<8x1xi1>
    %96 = vector.broadcast %95 : vector<8x1xi1> to vector<8x32xi1>
    %97 = vector.broadcast %cst_23 : f32 to vector<8x32xf32>
    %98 = arith.select %96, %86, %97 : vector<8x32xi1>, vector<8x32xf32>
    %99 = vector.shape_cast %98 : vector<8x32xf32> to vector<8x1x32xf32>
    %c0_24 = arith.constant 0 : index
    %c2 = arith.constant 2 : index
    %c0_25 = arith.constant 0 : index
    %100 = vector.load %arg12[%c0_24, %c2, %c0_25] : memref<8x8x32xf32, #tpu.memory_space<vmem>>, vector<8x1x32xf32>
    tpu.vector_store %arg12[%c0_24, %c2, %c0_25], %99 {strides = array<i32>} : memref<8x8x32xf32, #tpu.memory_space<vmem>>, vector<8x1x32xf32>,
    %c24 = arith.constant 24 : index
    %c0_26 = arith.constant 0 : index
    %101 = vector.load %arg0[%c24, %c0_26] : memref<64x128xf32, #tpu.memory_space<vmem>>, vector<8x128xf32>
    %cst_27 = arith.constant dense<0.000000e+00> : vector<8x128xf32>
    %102 = tpu.matmul %91, %1, %cst_27 {dimension_numbers = #tpu.dot_dimension_numbers<[1], [0], [0], [1], [0, 0, 1, 1], [], []>} : vector<8x32xf32>, vector<32x128xf32>, vector<8x128xf32> -> vector<8x128xf32>
    %103 = arith.addf %101, %102 : vector<8x128xf32>
    %104 = arith.negf %103 : vector<8x128xf32>
    %105 = math.exp %104 : vector<8x128xf32>
    %cst_28 = arith.constant 1.000000e+00 : f32
    %106 = vector.broadcast %cst_28 : f32 to vector<8x128xf32>
    %107 = arith.addf %106, %105 : vector<8x128xf32>
    %108 = arith.divf %106, %107 : vector<8x128xf32>
    %109 = math.tanh %103 : vector<8x128xf32>
    %110 = vector.extract_strided_slice %108 {offsets = [0, 32], sizes = [8, 32], strides = [1, 1]} : vector<8x128xf32> to vector<8x32xf32>
    %111 = arith.mulf %110, %94 : vector<8x32xf32>
    %112 = vector.extract_strided_slice %108 {offsets = [0, 0], sizes = [8, 32], strides = [1, 1]} : vector<8x128xf32> to vector<8x32xf32>
    %113 = vector.extract_strided_slice %109 {offsets = [0, 64], sizes = [8, 32], strides = [1, 1]} : vector<8x128xf32> to vector<8x32xf32>
    %114 = arith.mulf %112, %113 : vector<8x32xf32>
    %115 = arith.addf %111, %114 : vector<8x32xf32>
    %116 = vector.extract_strided_slice %108 {offsets = [0, 96], sizes = [8, 32], strides = [1, 1]} : vector<8x128xf32> to vector<8x32xf32>
    %117 = math.tanh %115 : vector<8x32xf32>
    %118 = arith.mulf %116, %117 : vector<8x32xf32>
    %c3_i32 = arith.constant 3 : i32
    %119 = vector.broadcast %c3_i32 : i32 to vector<8x1xi32>
    %120 = arith.cmpi sgt, %0, %119 : vector<8x1xi32>
    %121 = vector.shape_cast %120 : vector<8x1xi1> to vector<8x1xi1>
    %122 = vector.broadcast %121 : vector<8x1xi1> to vector<8x32xi1>
    %123 = arith.select %122, %118, %91 : vector<8x32xi1>, vector<8x32xf32>
    %124 = vector.shape_cast %120 : vector<8x1xi1> to vector<8x1xi1>
    %125 = vector.broadcast %124 : vector<8x1xi1> to vector<8x32xi1>
    %126 = arith.select %125, %115, %94 : vector<8x32xi1>, vector<8x32xf32>
    %cst_29 = arith.constant 0.000000e+00 : f32
    %127 = vector.shape_cast %120 : vector<8x1xi1> to vector<8x1xi1>
    %128 = vector.broadcast %127 : vector<8x1xi1> to vector<8x32xi1>
    %129 = vector.broadcast %cst_29 : f32 to vector<8x32xf32>
    %130 = arith.select %128, %118, %129 : vector<8x32xi1>, vector<8x32xf32>
    %131 = vector.shape_cast %130 : vector<8x32xf32> to vector<8x1x32xf32>
    %c0_30 = arith.constant 0 : index
    %c3 = arith.constant 3 : index
    %c0_31 = arith.constant 0 : index
    %132 = vector.load %arg12[%c0_30, %c3, %c0_31] : memref<8x8x32xf32, #tpu.memory_space<vmem>>, vector<8x1x32xf32>
    tpu.vector_store %arg12[%c0_30, %c3, %c0_31], %131 {strides = array<i32>} : memref<8x8x32xf32, #tpu.memory_space<vmem>>, vector<8x1x32xf32>,
    %c32 = arith.constant 32 : index
    %c0_32 = arith.constant 0 : index
    %133 = vector.load %arg0[%c32, %c0_32] : memref<64x128xf32, #tpu.memory_space<vmem>>, vector<8x128xf32>
    %cst_33 = arith.constant dense<0.000000e+00> : vector<8x128xf32>
    %134 = tpu.matmul %123, %1, %cst_33 {dimension_numbers = #tpu.dot_dimension_numbers<[1], [0], [0], [1], [0, 0, 1, 1], [], []>} : vector<8x32xf32>, vector<32x128xf32>, vector<8x128xf32> -> vector<8x128xf32>
    %135 = arith.addf %133, %134 : vector<8x128xf32>
    %136 = arith.negf %135 : vector<8x128xf32>
    %137 = math.exp %136 : vector<8x128xf32>
    %cst_34 = arith.constant 1.000000e+00 : f32
    %138 = vector.broadcast %cst_34 : f32 to vector<8x128xf32>
    %139 = arith.addf %138, %137 : vector<8x128xf32>
    %140 = arith.divf %138, %139 : vector<8x128xf32>
    %141 = math.tanh %135 : vector<8x128xf32>
    %142 = vector.extract_strided_slice %140 {offsets = [0, 32], sizes = [8, 32], strides = [1, 1]} : vector<8x128xf32> to vector<8x32xf32>
    %143 = arith.mulf %142, %126 : vector<8x32xf32>
    %144 = vector.extract_strided_slice %140 {offsets = [0, 0], sizes = [8, 32], strides = [1, 1]} : vector<8x128xf32> to vector<8x32xf32>
    %145 = vector.extract_strided_slice %141 {offsets = [0, 64], sizes = [8, 32], strides = [1, 1]} : vector<8x128xf32> to vector<8x32xf32>
    %146 = arith.mulf %144, %145 : vector<8x32xf32>
    %147 = arith.addf %143, %146 : vector<8x32xf32>
    %148 = vector.extract_strided_slice %140 {offsets = [0, 96], sizes = [8, 32], strides = [1, 1]} : vector<8x128xf32> to vector<8x32xf32>
    %149 = math.tanh %147 : vector<8x32xf32>
    %150 = arith.mulf %148, %149 : vector<8x32xf32>
    %c4_i32 = arith.constant 4 : i32
    %151 = vector.broadcast %c4_i32 : i32 to vector<8x1xi32>
    %152 = arith.cmpi sgt, %0, %151 : vector<8x1xi32>
    %153 = vector.shape_cast %152 : vector<8x1xi1> to vector<8x1xi1>
    %154 = vector.broadcast %153 : vector<8x1xi1> to vector<8x32xi1>
    %155 = arith.select %154, %150, %123 : vector<8x32xi1>, vector<8x32xf32>
    %156 = vector.shape_cast %152 : vector<8x1xi1> to vector<8x1xi1>
    %157 = vector.broadcast %156 : vector<8x1xi1> to vector<8x32xi1>
    %158 = arith.select %157, %147, %126 : vector<8x32xi1>, vector<8x32xf32>
    %cst_35 = arith.constant 0.000000e+00 : f32
    %159 = vector.shape_cast %152 : vector<8x1xi1> to vector<8x1xi1>
    %160 = vector.broadcast %159 : vector<8x1xi1> to vector<8x32xi1>
    %161 = vector.broadcast %cst_35 : f32 to vector<8x32xf32>
    %162 = arith.select %160, %150, %161 : vector<8x32xi1>, vector<8x32xf32>
    %163 = vector.shape_cast %162 : vector<8x32xf32> to vector<8x1x32xf32>
    %c0_36 = arith.constant 0 : index
    %c4 = arith.constant 4 : index
    %c0_37 = arith.constant 0 : index
    %164 = vector.load %arg12[%c0_36, %c4, %c0_37] : memref<8x8x32xf32, #tpu.memory_space<vmem>>, vector<8x1x32xf32>
    tpu.vector_store %arg12[%c0_36, %c4, %c0_37], %163 {strides = array<i32>} : memref<8x8x32xf32, #tpu.memory_space<vmem>>, vector<8x1x32xf32>,
    %c40 = arith.constant 40 : index
    %c0_38 = arith.constant 0 : index
    %165 = vector.load %arg0[%c40, %c0_38] : memref<64x128xf32, #tpu.memory_space<vmem>>, vector<8x128xf32>
    %cst_39 = arith.constant dense<0.000000e+00> : vector<8x128xf32>
    %166 = tpu.matmul %155, %1, %cst_39 {dimension_numbers = #tpu.dot_dimension_numbers<[1], [0], [0], [1], [0, 0, 1, 1], [], []>} : vector<8x32xf32>, vector<32x128xf32>, vector<8x128xf32> -> vector<8x128xf32>
    %167 = arith.addf %165, %166 : vector<8x128xf32>
    %168 = arith.negf %167 : vector<8x128xf32>
    %169 = math.exp %168 : vector<8x128xf32>
    %cst_40 = arith.constant 1.000000e+00 : f32
    %170 = vector.broadcast %cst_40 : f32 to vector<8x128xf32>
    %171 = arith.addf %170, %169 : vector<8x128xf32>
    %172 = arith.divf %170, %171 : vector<8x128xf32>
    %173 = math.tanh %167 : vector<8x128xf32>
    %174 = vector.extract_strided_slice %172 {offsets = [0, 32], sizes = [8, 32], strides = [1, 1]} : vector<8x128xf32> to vector<8x32xf32>
    %175 = arith.mulf %174, %158 : vector<8x32xf32>
    %176 = vector.extract_strided_slice %172 {offsets = [0, 0], sizes = [8, 32], strides = [1, 1]} : vector<8x128xf32> to vector<8x32xf32>
    %177 = vector.extract_strided_slice %173 {offsets = [0, 64], sizes = [8, 32], strides = [1, 1]} : vector<8x128xf32> to vector<8x32xf32>
    %178 = arith.mulf %176, %177 : vector<8x32xf32>
    %179 = arith.addf %175, %178 : vector<8x32xf32>
    %180 = vector.extract_strided_slice %172 {offsets = [0, 96], sizes = [8, 32], strides = [1, 1]} : vector<8x128xf32> to vector<8x32xf32>
    %181 = math.tanh %179 : vector<8x32xf32>
    %182 = arith.mulf %180, %181 : vector<8x32xf32>
    %c5_i32 = arith.constant 5 : i32
    %183 = vector.broadcast %c5_i32 : i32 to vector<8x1xi32>
    %184 = arith.cmpi sgt, %0, %183 : vector<8x1xi32>
    %185 = vector.shape_cast %184 : vector<8x1xi1> to vector<8x1xi1>
    %186 = vector.broadcast %185 : vector<8x1xi1> to vector<8x32xi1>
    %187 = arith.select %186, %182, %155 : vector<8x32xi1>, vector<8x32xf32>
    %188 = vector.shape_cast %184 : vector<8x1xi1> to vector<8x1xi1>
    %189 = vector.broadcast %188 : vector<8x1xi1> to vector<8x32xi1>
    %190 = arith.select %189, %179, %158 : vector<8x32xi1>, vector<8x32xf32>
    %cst_41 = arith.constant 0.000000e+00 : f32
    %191 = vector.shape_cast %184 : vector<8x1xi1> to vector<8x1xi1>
    %192 = vector.broadcast %191 : vector<8x1xi1> to vector<8x32xi1>
    %193 = vector.broadcast %cst_41 : f32 to vector<8x32xf32>
    %194 = arith.select %192, %182, %193 : vector<8x32xi1>, vector<8x32xf32>
    %195 = vector.shape_cast %194 : vector<8x32xf32> to vector<8x1x32xf32>
    %c0_42 = arith.constant 0 : index
    %c5 = arith.constant 5 : index
    %c0_43 = arith.constant 0 : index
    %196 = vector.load %arg12[%c0_42, %c5, %c0_43] : memref<8x8x32xf32, #tpu.memory_space<vmem>>, vector<8x1x32xf32>
    tpu.vector_store %arg12[%c0_42, %c5, %c0_43], %195 {strides = array<i32>} : memref<8x8x32xf32, #tpu.memory_space<vmem>>, vector<8x1x32xf32>,
    %c48 = arith.constant 48 : index
    %c0_44 = arith.constant 0 : index
    %197 = vector.load %arg0[%c48, %c0_44] : memref<64x128xf32, #tpu.memory_space<vmem>>, vector<8x128xf32>
    %cst_45 = arith.constant dense<0.000000e+00> : vector<8x128xf32>
    %198 = tpu.matmul %187, %1, %cst_45 {dimension_numbers = #tpu.dot_dimension_numbers<[1], [0], [0], [1], [0, 0, 1, 1], [], []>} : vector<8x32xf32>, vector<32x128xf32>, vector<8x128xf32> -> vector<8x128xf32>
    %199 = arith.addf %197, %198 : vector<8x128xf32>
    %200 = arith.negf %199 : vector<8x128xf32>
    %201 = math.exp %200 : vector<8x128xf32>
    %cst_46 = arith.constant 1.000000e+00 : f32
    %202 = vector.broadcast %cst_46 : f32 to vector<8x128xf32>
    %203 = arith.addf %202, %201 : vector<8x128xf32>
    %204 = arith.divf %202, %203 : vector<8x128xf32>
    %205 = math.tanh %199 : vector<8x128xf32>
    %206 = vector.extract_strided_slice %204 {offsets = [0, 32], sizes = [8, 32], strides = [1, 1]} : vector<8x128xf32> to vector<8x32xf32>
    %207 = arith.mulf %206, %190 : vector<8x32xf32>
    %208 = vector.extract_strided_slice %204 {offsets = [0, 0], sizes = [8, 32], strides = [1, 1]} : vector<8x128xf32> to vector<8x32xf32>
    %209 = vector.extract_strided_slice %205 {offsets = [0, 64], sizes = [8, 32], strides = [1, 1]} : vector<8x128xf32> to vector<8x32xf32>
    %210 = arith.mulf %208, %209 : vector<8x32xf32>
    %211 = arith.addf %207, %210 : vector<8x32xf32>
    %212 = vector.extract_strided_slice %204 {offsets = [0, 96], sizes = [8, 32], strides = [1, 1]} : vector<8x128xf32> to vector<8x32xf32>
    %213 = math.tanh %211 : vector<8x32xf32>
    %214 = arith.mulf %212, %213 : vector<8x32xf32>
    %c6_i32 = arith.constant 6 : i32
    %215 = vector.broadcast %c6_i32 : i32 to vector<8x1xi32>
    %216 = arith.cmpi sgt, %0, %215 : vector<8x1xi32>
    %217 = vector.shape_cast %216 : vector<8x1xi1> to vector<8x1xi1>
    %218 = vector.broadcast %217 : vector<8x1xi1> to vector<8x32xi1>
    %219 = arith.select %218, %214, %187 : vector<8x32xi1>, vector<8x32xf32>
    %220 = vector.shape_cast %216 : vector<8x1xi1> to vector<8x1xi1>
    %221 = vector.broadcast %220 : vector<8x1xi1> to vector<8x32xi1>
    %222 = arith.select %221, %211, %190 : vector<8x32xi1>, vector<8x32xf32>
    %cst_47 = arith.constant 0.000000e+00 : f32
    %223 = vector.shape_cast %216 : vector<8x1xi1> to vector<8x1xi1>
    %224 = vector.broadcast %223 : vector<8x1xi1> to vector<8x32xi1>
    %225 = vector.broadcast %cst_47 : f32 to vector<8x32xf32>
    %226 = arith.select %224, %214, %225 : vector<8x32xi1>, vector<8x32xf32>
    %227 = vector.shape_cast %226 : vector<8x32xf32> to vector<8x1x32xf32>
    %c0_48 = arith.constant 0 : index
    %c6 = arith.constant 6 : index
    %c0_49 = arith.constant 0 : index
    %228 = vector.load %arg12[%c0_48, %c6, %c0_49] : memref<8x8x32xf32, #tpu.memory_space<vmem>>, vector<8x1x32xf32>
    tpu.vector_store %arg12[%c0_48, %c6, %c0_49], %227 {strides = array<i32>} : memref<8x8x32xf32, #tpu.memory_space<vmem>>, vector<8x1x32xf32>,
    %c56 = arith.constant 56 : index
    %c0_50 = arith.constant 0 : index
    %229 = vector.load %arg0[%c56, %c0_50] : memref<64x128xf32, #tpu.memory_space<vmem>>, vector<8x128xf32>
    %cst_51 = arith.constant dense<0.000000e+00> : vector<8x128xf32>
    %230 = tpu.matmul %219, %1, %cst_51 {dimension_numbers = #tpu.dot_dimension_numbers<[1], [0], [0], [1], [0, 0, 1, 1], [], []>} : vector<8x32xf32>, vector<32x128xf32>, vector<8x128xf32> -> vector<8x128xf32>
    %231 = arith.addf %229, %230 : vector<8x128xf32>
    %232 = arith.negf %231 : vector<8x128xf32>
    %233 = math.exp %232 : vector<8x128xf32>
    %cst_52 = arith.constant 1.000000e+00 : f32
    %234 = vector.broadcast %cst_52 : f32 to vector<8x128xf32>
    %235 = arith.addf %234, %233 : vector<8x128xf32>
    %236 = arith.divf %234, %235 : vector<8x128xf32>
    %237 = math.tanh %231 : vector<8x128xf32>
    %238 = vector.extract_strided_slice %236 {offsets = [0, 32], sizes = [8, 32], strides = [1, 1]} : vector<8x128xf32> to vector<8x32xf32>
    %239 = arith.mulf %238, %222 : vector<8x32xf32>
    %240 = vector.extract_strided_slice %236 {offsets = [0, 0], sizes = [8, 32], strides = [1, 1]} : vector<8x128xf32> to vector<8x32xf32>
    %241 = vector.extract_strided_slice %237 {offsets = [0, 64], sizes = [8, 32], strides = [1, 1]} : vector<8x128xf32> to vector<8x32xf32>
    %242 = arith.mulf %240, %241 : vector<8x32xf32>
    %243 = arith.addf %239, %242 : vector<8x32xf32>
    %244 = vector.extract_strided_slice %236 {offsets = [0, 96], sizes = [8, 32], strides = [1, 1]} : vector<8x128xf32> to vector<8x32xf32>
    %245 = math.tanh %243 : vector<8x32xf32>
    %246 = arith.mulf %244, %245 : vector<8x32xf32>
    %c7_i32 = arith.constant 7 : i32
    %247 = vector.broadcast %c7_i32 : i32 to vector<8x1xi32>
    %248 = arith.cmpi sgt, %0, %247 : vector<8x1xi32>
    %249 = vector.shape_cast %248 : vector<8x1xi1> to vector<8x1xi1>
    %250 = vector.broadcast %249 : vector<8x1xi1> to vector<8x32xi1>
    %251 = arith.select %250, %246, %219 : vector<8x32xi1>, vector<8x32xf32>
    %252 = vector.shape_cast %248 : vector<8x1xi1> to vector<8x1xi1>
    %253 = vector.broadcast %252 : vector<8x1xi1> to vector<8x32xi1>
    %254 = arith.select %253, %243, %222 : vector<8x32xi1>, vector<8x32xf32>
    %cst_53 = arith.constant 0.000000e+00 : f32
    %255 = vector.shape_cast %248 : vector<8x1xi1> to vector<8x1xi1>
    %256 = vector.broadcast %255 : vector<8x1xi1> to vector<8x32xi1>
    %257 = vector.broadcast %cst_53 : f32 to vector<8x32xf32>
    %258 = arith.select %256, %246, %257 : vector<8x32xi1>, vector<8x32xf32>
    %259 = vector.shape_cast %258 : vector<8x32xf32> to vector<8x1x32xf32>
    %c0_54 = arith.constant 0 : index
    %c7 = arith.constant 7 : index
    %c0_55 = arith.constant 0 : index
    %260 = vector.load %arg12[%c0_54, %c7, %c0_55] : memref<8x8x32xf32, #tpu.memory_space<vmem>>, vector<8x1x32xf32>
    tpu.vector_store %arg12[%c0_54, %c7, %c0_55], %259 {strides = array<i32>} : memref<8x8x32xf32, #tpu.memory_space<vmem>>, vector<8x1x32xf32>,
    %c0_56 = arith.constant 0 : index
    %c0_57 = arith.constant 0 : index
    %261 = vector.load %arg1[%c0_56, %c0_57] : memref<64x128xf32, #tpu.memory_space<vmem>>, vector<8x128xf32>
    %cst_58 = arith.constant dense<0.000000e+00> : vector<8x128xf32>
    %262 = tpu.matmul %251, %2, %cst_58 {dimension_numbers = #tpu.dot_dimension_numbers<[1], [0], [0], [1], [0, 0, 1, 1], [], []>} : vector<8x32xf32>, vector<32x128xf32>, vector<8x128xf32> -> vector<8x128xf32>
    %263 = arith.addf %261, %262 : vector<8x128xf32>
    %264 = arith.negf %263 : vector<8x128xf32>
    %265 = math.exp %264 : vector<8x128xf32>
    %cst_59 = arith.constant 1.000000e+00 : f32
    %266 = vector.broadcast %cst_59 : f32 to vector<8x128xf32>
    %267 = arith.addf %266, %265 : vector<8x128xf32>
    %268 = arith.divf %266, %267 : vector<8x128xf32>
    %269 = math.tanh %263 : vector<8x128xf32>
    %270 = vector.extract_strided_slice %268 {offsets = [0, 32], sizes = [8, 32], strides = [1, 1]} : vector<8x128xf32> to vector<8x32xf32>
    %271 = arith.mulf %270, %254 : vector<8x32xf32>
    %272 = vector.extract_strided_slice %268 {offsets = [0, 0], sizes = [8, 32], strides = [1, 1]} : vector<8x128xf32> to vector<8x32xf32>
    %273 = vector.extract_strided_slice %269 {offsets = [0, 64], sizes = [8, 32], strides = [1, 1]} : vector<8x128xf32> to vector<8x32xf32>
    %274 = arith.mulf %272, %273 : vector<8x32xf32>
    %275 = arith.addf %271, %274 : vector<8x32xf32>
    %276 = vector.extract_strided_slice %268 {offsets = [0, 96], sizes = [8, 32], strides = [1, 1]} : vector<8x128xf32> to vector<8x32xf32>
    %277 = math.tanh %275 : vector<8x32xf32>
    %278 = arith.mulf %276, %277 : vector<8x32xf32>
    %279 = vector.shape_cast %278 : vector<8x32xf32> to vector<8x1x32xf32>
    %c0_60 = arith.constant 0 : index
    %c0_61 = arith.constant 0 : index
    %c0_62 = arith.constant 0 : index
    %280 = vector.load %arg13[%c0_60, %c0_61, %c0_62] : memref<8x8x32xf32, #tpu.memory_space<vmem>>, vector<8x1x32xf32>
    tpu.vector_store %arg13[%c0_60, %c0_61, %c0_62], %279 {strides = array<i32>} : memref<8x8x32xf32, #tpu.memory_space<vmem>>, vector<8x1x32xf32>,
    %c8_63 = arith.constant 8 : index
    %c0_64 = arith.constant 0 : index
    %281 = vector.load %arg1[%c8_63, %c0_64] : memref<64x128xf32, #tpu.memory_space<vmem>>, vector<8x128xf32>
    %cst_65 = arith.constant dense<0.000000e+00> : vector<8x128xf32>
    %282 = tpu.matmul %278, %2, %cst_65 {dimension_numbers = #tpu.dot_dimension_numbers<[1], [0], [0], [1], [0, 0, 1, 1], [], []>} : vector<8x32xf32>, vector<32x128xf32>, vector<8x128xf32> -> vector<8x128xf32>
    %283 = arith.addf %281, %282 : vector<8x128xf32>
    %284 = arith.negf %283 : vector<8x128xf32>
    %285 = math.exp %284 : vector<8x128xf32>
    %cst_66 = arith.constant 1.000000e+00 : f32
    %286 = vector.broadcast %cst_66 : f32 to vector<8x128xf32>
    %287 = arith.addf %286, %285 : vector<8x128xf32>
    %288 = arith.divf %286, %287 : vector<8x128xf32>
    %289 = math.tanh %283 : vector<8x128xf32>
    %290 = vector.extract_strided_slice %288 {offsets = [0, 32], sizes = [8, 32], strides = [1, 1]} : vector<8x128xf32> to vector<8x32xf32>
    %291 = arith.mulf %290, %275 : vector<8x32xf32>
    %292 = vector.extract_strided_slice %288 {offsets = [0, 0], sizes = [8, 32], strides = [1, 1]} : vector<8x128xf32> to vector<8x32xf32>
    %293 = vector.extract_strided_slice %289 {offsets = [0, 64], sizes = [8, 32], strides = [1, 1]} : vector<8x128xf32> to vector<8x32xf32>
    %294 = arith.mulf %292, %293 : vector<8x32xf32>
    %295 = arith.addf %291, %294 : vector<8x32xf32>
    %296 = vector.extract_strided_slice %288 {offsets = [0, 96], sizes = [8, 32], strides = [1, 1]} : vector<8x128xf32> to vector<8x32xf32>
    %297 = math.tanh %295 : vector<8x32xf32>
    %298 = arith.mulf %296, %297 : vector<8x32xf32>
    %299 = vector.shape_cast %298 : vector<8x32xf32> to vector<8x1x32xf32>
    %c0_67 = arith.constant 0 : index
    %c1_68 = arith.constant 1 : index
    %c0_69 = arith.constant 0 : index
    %300 = vector.load %arg13[%c0_67, %c1_68, %c0_69] : memref<8x8x32xf32, #tpu.memory_space<vmem>>, vector<8x1x32xf32>
    tpu.vector_store %arg13[%c0_67, %c1_68, %c0_69], %299 {strides = array<i32>} : memref<8x8x32xf32, #tpu.memory_space<vmem>>, vector<8x1x32xf32>,
    %c16_70 = arith.constant 16 : index
    %c0_71 = arith.constant 0 : index
    %301 = vector.load %arg1[%c16_70, %c0_71] : memref<64x128xf32, #tpu.memory_space<vmem>>, vector<8x128xf32>
    %cst_72 = arith.constant dense<0.000000e+00> : vector<8x128xf32>
    %302 = tpu.matmul %298, %2, %cst_72 {dimension_numbers = #tpu.dot_dimension_numbers<[1], [0], [0], [1], [0, 0, 1, 1], [], []>} : vector<8x32xf32>, vector<32x128xf32>, vector<8x128xf32> -> vector<8x128xf32>
    %303 = arith.addf %301, %302 : vector<8x128xf32>
    %304 = arith.negf %303 : vector<8x128xf32>
    %305 = math.exp %304 : vector<8x128xf32>
    %cst_73 = arith.constant 1.000000e+00 : f32
    %306 = vector.broadcast %cst_73 : f32 to vector<8x128xf32>
    %307 = arith.addf %306, %305 : vector<8x128xf32>
    %308 = arith.divf %306, %307 : vector<8x128xf32>
    %309 = math.tanh %303 : vector<8x128xf32>
    %310 = vector.extract_strided_slice %308 {offsets = [0, 32], sizes = [8, 32], strides = [1, 1]} : vector<8x128xf32> to vector<8x32xf32>
    %311 = arith.mulf %310, %295 : vector<8x32xf32>
    %312 = vector.extract_strided_slice %308 {offsets = [0, 0], sizes = [8, 32], strides = [1, 1]} : vector<8x128xf32> to vector<8x32xf32>
    %313 = vector.extract_strided_slice %309 {offsets = [0, 64], sizes = [8, 32], strides = [1, 1]} : vector<8x128xf32> to vector<8x32xf32>
    %314 = arith.mulf %312, %313 : vector<8x32xf32>
    %315 = arith.addf %311, %314 : vector<8x32xf32>
    %316 = vector.extract_strided_slice %308 {offsets = [0, 96], sizes = [8, 32], strides = [1, 1]} : vector<8x128xf32> to vector<8x32xf32>
    %317 = math.tanh %315 : vector<8x32xf32>
    %318 = arith.mulf %316, %317 : vector<8x32xf32>
    %319 = vector.shape_cast %318 : vector<8x32xf32> to vector<8x1x32xf32>
    %c0_74 = arith.constant 0 : index
    %c2_75 = arith.constant 2 : index
    %c0_76 = arith.constant 0 : index
    %320 = vector.load %arg13[%c0_74, %c2_75, %c0_76] : memref<8x8x32xf32, #tpu.memory_space<vmem>>, vector<8x1x32xf32>
    tpu.vector_store %arg13[%c0_74, %c2_75, %c0_76], %319 {strides = array<i32>} : memref<8x8x32xf32, #tpu.memory_space<vmem>>, vector<8x1x32xf32>,
    %c24_77 = arith.constant 24 : index
    %c0_78 = arith.constant 0 : index
    %321 = vector.load %arg1[%c24_77, %c0_78] : memref<64x128xf32, #tpu.memory_space<vmem>>, vector<8x128xf32>
    %cst_79 = arith.constant dense<0.000000e+00> : vector<8x128xf32>
    %322 = tpu.matmul %318, %2, %cst_79 {dimension_numbers = #tpu.dot_dimension_numbers<[1], [0], [0], [1], [0, 0, 1, 1], [], []>} : vector<8x32xf32>, vector<32x128xf32>, vector<8x128xf32> -> vector<8x128xf32>
    %323 = arith.addf %321, %322 : vector<8x128xf32>
    %324 = arith.negf %323 : vector<8x128xf32>
    %325 = math.exp %324 : vector<8x128xf32>
    %cst_80 = arith.constant 1.000000e+00 : f32
    %326 = vector.broadcast %cst_80 : f32 to vector<8x128xf32>
    %327 = arith.addf %326, %325 : vector<8x128xf32>
    %328 = arith.divf %326, %327 : vector<8x128xf32>
    %329 = math.tanh %323 : vector<8x128xf32>
    %330 = vector.extract_strided_slice %328 {offsets = [0, 32], sizes = [8, 32], strides = [1, 1]} : vector<8x128xf32> to vector<8x32xf32>
    %331 = arith.mulf %330, %315 : vector<8x32xf32>
    %332 = vector.extract_strided_slice %328 {offsets = [0, 0], sizes = [8, 32], strides = [1, 1]} : vector<8x128xf32> to vector<8x32xf32>
    %333 = vector.extract_strided_slice %329 {offsets = [0, 64], sizes = [8, 32], strides = [1, 1]} : vector<8x128xf32> to vector<8x32xf32>
    %334 = arith.mulf %332, %333 : vector<8x32xf32>
    %335 = arith.addf %331, %334 : vector<8x32xf32>
    %336 = vector.extract_strided_slice %328 {offsets = [0, 96], sizes = [8, 32], strides = [1, 1]} : vector<8x128xf32> to vector<8x32xf32>
    %337 = math.tanh %335 : vector<8x32xf32>
    %338 = arith.mulf %336, %337 : vector<8x32xf32>
    %339 = vector.shape_cast %338 : vector<8x32xf32> to vector<8x1x32xf32>
    %c0_81 = arith.constant 0 : index
    %c3_82 = arith.constant 3 : index
    %c0_83 = arith.constant 0 : index
    %340 = vector.load %arg13[%c0_81, %c3_82, %c0_83] : memref<8x8x32xf32, #tpu.memory_space<vmem>>, vector<8x1x32xf32>
    tpu.vector_store %arg13[%c0_81, %c3_82, %c0_83], %339 {strides = array<i32>} : memref<8x8x32xf32, #tpu.memory_space<vmem>>, vector<8x1x32xf32>,
    %c32_84 = arith.constant 32 : index
    %c0_85 = arith.constant 0 : index
    %341 = vector.load %arg1[%c32_84, %c0_85] : memref<64x128xf32, #tpu.memory_space<vmem>>, vector<8x128xf32>
    %cst_86 = arith.constant dense<0.000000e+00> : vector<8x128xf32>
    %342 = tpu.matmul %338, %2, %cst_86 {dimension_numbers = #tpu.dot_dimension_numbers<[1], [0], [0], [1], [0, 0, 1, 1], [], []>} : vector<8x32xf32>, vector<32x128xf32>, vector<8x128xf32> -> vector<8x128xf32>
    %343 = arith.addf %341, %342 : vector<8x128xf32>
    %344 = arith.negf %343 : vector<8x128xf32>
    %345 = math.exp %344 : vector<8x128xf32>
    %cst_87 = arith.constant 1.000000e+00 : f32
    %346 = vector.broadcast %cst_87 : f32 to vector<8x128xf32>
    %347 = arith.addf %346, %345 : vector<8x128xf32>
    %348 = arith.divf %346, %347 : vector<8x128xf32>
    %349 = math.tanh %343 : vector<8x128xf32>
    %350 = vector.extract_strided_slice %348 {offsets = [0, 32], sizes = [8, 32], strides = [1, 1]} : vector<8x128xf32> to vector<8x32xf32>
    %351 = arith.mulf %350, %335 : vector<8x32xf32>
    %352 = vector.extract_strided_slice %348 {offsets = [0, 0], sizes = [8, 32], strides = [1, 1]} : vector<8x128xf32> to vector<8x32xf32>
    %353 = vector.extract_strided_slice %349 {offsets = [0, 64], sizes = [8, 32], strides = [1, 1]} : vector<8x128xf32> to vector<8x32xf32>
    %354 = arith.mulf %352, %353 : vector<8x32xf32>
    %355 = arith.addf %351, %354 : vector<8x32xf32>
    %356 = vector.extract_strided_slice %348 {offsets = [0, 96], sizes = [8, 32], strides = [1, 1]} : vector<8x128xf32> to vector<8x32xf32>
    %357 = math.tanh %355 : vector<8x32xf32>
    %358 = arith.mulf %356, %357 : vector<8x32xf32>
    %359 = vector.shape_cast %358 : vector<8x32xf32> to vector<8x1x32xf32>
    %c0_88 = arith.constant 0 : index
    %c4_89 = arith.constant 4 : index
    %c0_90 = arith.constant 0 : index
    %360 = vector.load %arg13[%c0_88, %c4_89, %c0_90] : memref<8x8x32xf32, #tpu.memory_space<vmem>>, vector<8x1x32xf32>
    tpu.vector_store %arg13[%c0_88, %c4_89, %c0_90], %359 {strides = array<i32>} : memref<8x8x32xf32, #tpu.memory_space<vmem>>, vector<8x1x32xf32>,
    %c40_91 = arith.constant 40 : index
    %c0_92 = arith.constant 0 : index
    %361 = vector.load %arg1[%c40_91, %c0_92] : memref<64x128xf32, #tpu.memory_space<vmem>>, vector<8x128xf32>
    %cst_93 = arith.constant dense<0.000000e+00> : vector<8x128xf32>
    %362 = tpu.matmul %358, %2, %cst_93 {dimension_numbers = #tpu.dot_dimension_numbers<[1], [0], [0], [1], [0, 0, 1, 1], [], []>} : vector<8x32xf32>, vector<32x128xf32>, vector<8x128xf32> -> vector<8x128xf32>
    %363 = arith.addf %361, %362 : vector<8x128xf32>
    %364 = arith.negf %363 : vector<8x128xf32>
    %365 = math.exp %364 : vector<8x128xf32>
    %cst_94 = arith.constant 1.000000e+00 : f32
    %366 = vector.broadcast %cst_94 : f32 to vector<8x128xf32>
    %367 = arith.addf %366, %365 : vector<8x128xf32>
    %368 = arith.divf %366, %367 : vector<8x128xf32>
    %369 = math.tanh %363 : vector<8x128xf32>
    %370 = vector.extract_strided_slice %368 {offsets = [0, 32], sizes = [8, 32], strides = [1, 1]} : vector<8x128xf32> to vector<8x32xf32>
    %371 = arith.mulf %370, %355 : vector<8x32xf32>
    %372 = vector.extract_strided_slice %368 {offsets = [0, 0], sizes = [8, 32], strides = [1, 1]} : vector<8x128xf32> to vector<8x32xf32>
    %373 = vector.extract_strided_slice %369 {offsets = [0, 64], sizes = [8, 32], strides = [1, 1]} : vector<8x128xf32> to vector<8x32xf32>
    %374 = arith.mulf %372, %373 : vector<8x32xf32>
    %375 = arith.addf %371, %374 : vector<8x32xf32>
    %376 = vector.extract_strided_slice %368 {offsets = [0, 96], sizes = [8, 32], strides = [1, 1]} : vector<8x128xf32> to vector<8x32xf32>
    %377 = math.tanh %375 : vector<8x32xf32>
    %378 = arith.mulf %376, %377 : vector<8x32xf32>
    %379 = vector.shape_cast %378 : vector<8x32xf32> to vector<8x1x32xf32>
    %c0_95 = arith.constant 0 : index
    %c5_96 = arith.constant 5 : index
    %c0_97 = arith.constant 0 : index
    %380 = vector.load %arg13[%c0_95, %c5_96, %c0_97] : memref<8x8x32xf32, #tpu.memory_space<vmem>>, vector<8x1x32xf32>
    tpu.vector_store %arg13[%c0_95, %c5_96, %c0_97], %379 {strides = array<i32>} : memref<8x8x32xf32, #tpu.memory_space<vmem>>, vector<8x1x32xf32>,
    %c48_98 = arith.constant 48 : index
    %c0_99 = arith.constant 0 : index
    %381 = vector.load %arg1[%c48_98, %c0_99] : memref<64x128xf32, #tpu.memory_space<vmem>>, vector<8x128xf32>
    %cst_100 = arith.constant dense<0.000000e+00> : vector<8x128xf32>
    %382 = tpu.matmul %378, %2, %cst_100 {dimension_numbers = #tpu.dot_dimension_numbers<[1], [0], [0], [1], [0, 0, 1, 1], [], []>} : vector<8x32xf32>, vector<32x128xf32>, vector<8x128xf32> -> vector<8x128xf32>
    %383 = arith.addf %381, %382 : vector<8x128xf32>
    %384 = arith.negf %383 : vector<8x128xf32>
    %385 = math.exp %384 : vector<8x128xf32>
    %cst_101 = arith.constant 1.000000e+00 : f32
    %386 = vector.broadcast %cst_101 : f32 to vector<8x128xf32>
    %387 = arith.addf %386, %385 : vector<8x128xf32>
    %388 = arith.divf %386, %387 : vector<8x128xf32>
    %389 = math.tanh %383 : vector<8x128xf32>
    %390 = vector.extract_strided_slice %388 {offsets = [0, 32], sizes = [8, 32], strides = [1, 1]} : vector<8x128xf32> to vector<8x32xf32>
    %391 = arith.mulf %390, %375 : vector<8x32xf32>
    %392 = vector.extract_strided_slice %388 {offsets = [0, 0], sizes = [8, 32], strides = [1, 1]} : vector<8x128xf32> to vector<8x32xf32>
    %393 = vector.extract_strided_slice %389 {offsets = [0, 64], sizes = [8, 32], strides = [1, 1]} : vector<8x128xf32> to vector<8x32xf32>
    %394 = arith.mulf %392, %393 : vector<8x32xf32>
    %395 = arith.addf %391, %394 : vector<8x32xf32>
    %396 = vector.extract_strided_slice %388 {offsets = [0, 96], sizes = [8, 32], strides = [1, 1]} : vector<8x128xf32> to vector<8x32xf32>
    %397 = math.tanh %395 : vector<8x32xf32>
    %398 = arith.mulf %396, %397 : vector<8x32xf32>
    %399 = vector.shape_cast %398 : vector<8x32xf32> to vector<8x1x32xf32>
    %c0_102 = arith.constant 0 : index
    %c6_103 = arith.constant 6 : index
    %c0_104 = arith.constant 0 : index
    %400 = vector.load %arg13[%c0_102, %c6_103, %c0_104] : memref<8x8x32xf32, #tpu.memory_space<vmem>>, vector<8x1x32xf32>
    tpu.vector_store %arg13[%c0_102, %c6_103, %c0_104], %399 {strides = array<i32>} : memref<8x8x32xf32, #tpu.memory_space<vmem>>, vector<8x1x32xf32>,
    %c56_105 = arith.constant 56 : index
    %c0_106 = arith.constant 0 : index
    %401 = vector.load %arg1[%c56_105, %c0_106] : memref<64x128xf32, #tpu.memory_space<vmem>>, vector<8x128xf32>
    %cst_107 = arith.constant dense<0.000000e+00> : vector<8x128xf32>
    %402 = tpu.matmul %398, %2, %cst_107 {dimension_numbers = #tpu.dot_dimension_numbers<[1], [0], [0], [1], [0, 0, 1, 1], [], []>} : vector<8x32xf32>, vector<32x128xf32>, vector<8x128xf32> -> vector<8x128xf32>
    %403 = arith.addf %401, %402 : vector<8x128xf32>
    %404 = arith.negf %403 : vector<8x128xf32>
    %405 = math.exp %404 : vector<8x128xf32>
    %cst_108 = arith.constant 1.000000e+00 : f32
    %406 = vector.broadcast %cst_108 : f32 to vector<8x128xf32>
    %407 = arith.addf %406, %405 : vector<8x128xf32>
    %408 = arith.divf %406, %407 : vector<8x128xf32>
    %409 = math.tanh %403 : vector<8x128xf32>
    %410 = vector.extract_strided_slice %408 {offsets = [0, 32], sizes = [8, 32], strides = [1, 1]} : vector<8x128xf32> to vector<8x32xf32>
    %411 = arith.mulf %410, %395 : vector<8x32xf32>
    %412 = vector.extract_strided_slice %408 {offsets = [0, 0], sizes = [8, 32], strides = [1, 1]} : vector<8x128xf32> to vector<8x32xf32>
    %413 = vector.extract_strided_slice %409 {offsets = [0, 64], sizes = [8, 32], strides = [1, 1]} : vector<8x128xf32> to vector<8x32xf32>
    %414 = arith.mulf %412, %413 : vector<8x32xf32>
    %415 = arith.addf %411, %414 : vector<8x32xf32>
    %416 = vector.extract_strided_slice %408 {offsets = [0, 96], sizes = [8, 32], strides = [1, 1]} : vector<8x128xf32> to vector<8x32xf32>
    %417 = math.tanh %415 : vector<8x32xf32>
    %418 = arith.mulf %416, %417 : vector<8x32xf32>
    %419 = vector.shape_cast %418 : vector<8x32xf32> to vector<8x1x32xf32>
    %c0_109 = arith.constant 0 : index
    %c7_110 = arith.constant 7 : index
    %c0_111 = arith.constant 0 : index
    %420 = vector.load %arg13[%c0_109, %c7_110, %c0_111] : memref<8x8x32xf32, #tpu.memory_space<vmem>>, vector<8x1x32xf32>
    tpu.vector_store %arg13[%c0_109, %c7_110, %c0_111], %419 {strides = array<i32>} : memref<8x8x32xf32, #tpu.memory_space<vmem>>, vector<8x1x32xf32>,
    %c0_112 = arith.constant 0 : index
    %c0_113 = arith.constant 0 : index
    %c0_114 = arith.constant 0 : index
    %421 = vector.load %arg12[%c0_112, %c0_113, %c0_114] : memref<8x8x32xf32, #tpu.memory_space<vmem>>, vector<8x8x32xf32>
    %c0_115 = arith.constant 0 : index
    %c0_116 = arith.constant 0 : index
    %c0_117 = arith.constant 0 : index
    %422 = vector.load %arg13[%c0_115, %c0_116, %c0_117] : memref<8x8x32xf32, #tpu.memory_space<vmem>>, vector<8x8x32xf32>
    %423 = vector.shape_cast %421 : vector<8x8x32xf32> to vector<64x32xf32>
    %c0_118 = arith.constant 0 : index
    %c0_119 = arith.constant 0 : index
    %424 = vector.load %arg6[%c0_118, %c0_119] : memref<32x32xf32, #tpu.memory_space<vmem>>, vector<32x32xf32>
    %cst_120 = arith.constant dense<0.000000e+00> : vector<64x32xf32>
    %425 = tpu.matmul %423, %424, %cst_120 {dimension_numbers = #tpu.dot_dimension_numbers<[1], [0], [0], [1], [0, 0, 1, 1], [], []>} : vector<64x32xf32>, vector<32x32xf32>, vector<64x32xf32> -> vector<64x32xf32>
    %426 = vector.shape_cast %425 : vector<64x32xf32> to vector<8x8x32xf32>
    %427 = tpu.iota {dimensions = array<i32: 1>} : vector<8x8xi32>
    %428 = vector.broadcast %0 : vector<8x1xi32> to vector<8x8xi32>
    %429 = arith.cmpi slt, %427, %428 : vector<8x8xi32>
    %cst_121 = arith.constant 0.000000e+00 : f32
    %cst_122 = arith.constant -1.000000e+09 : f32
    %430 = vector.broadcast %cst_121 : f32 to vector<8x8xf32>
    %431 = vector.broadcast %cst_122 : f32 to vector<8x8xf32>
    %432 = arith.select %429, %430, %431 : vector<8x8xi1>, vector<8x8xf32>
    "tpu.trace_start"() <{level = 10 : i32, message = "bth,bsh->bts"}> : () -> ()
    %cst_123 = arith.constant dense<0.000000e+00> : vector<8x8x8xf32>
    %433 = tpu.matmul %422, %426, %cst_123 {dimension_numbers = #tpu.dot_dimension_numbers<[2], [2], [1], [1], [0, 0, 0, 1, 1, 1], [0], [0]>} : vector<8x8x32xf32>, vector<8x8x32xf32>, vector<8x8x8xf32> -> vector<8x8x8xf32>
    "tpu.trace_stop"() : () -> ()
    %434 = vector.shape_cast %432 : vector<8x8xf32> to vector<8x1x8xf32>
    %435 = vector.broadcast %434 : vector<8x1x8xf32> to vector<8x8x8xf32>
    %436 = arith.addf %433, %435 : vector<8x8x8xf32>
    %cst_124 = arith.constant dense<0xFF800000> : vector<8x8xf32>
    %437 = vector.multi_reduction <maximumf>, %436, %cst_124 [2] : vector<8x8x8xf32> to vector<8x8xf32>
    %438 = vector.shape_cast %437 : vector<8x8xf32> to vector<8x8x1xf32>
    %439 = vector.broadcast %438 : vector<8x8x1xf32> to vector<8x8x8xf32>
    %440 = arith.subf %436, %439 : vector<8x8x8xf32>
    %441 = math.exp %440 : vector<8x8x8xf32>
    %cst_125 = arith.constant dense<0.000000e+00> : vector<8x8xf32>
    %442 = vector.multi_reduction <add>, %441, %cst_125 [2] : vector<8x8x8xf32> to vector<8x8xf32>
    %443 = vector.shape_cast %442 : vector<8x8xf32> to vector<8x8x1xf32>
    %444 = tpu.reciprocal %443 {approx = true} : vector<8x8x1xf32> -> vector<8x8x1xf32>
    %445 = vector.broadcast %444 : vector<8x8x1xf32> to vector<8x8x8xf32>
    %446 = arith.mulf %441, %445 : vector<8x8x8xf32>
    "tpu.trace_start"() <{level = 10 : i32, message = "bts,bsh->bth"}> : () -> ()
    %cst_126 = arith.constant dense<0.000000e+00> : vector<8x8x32xf32>
    %447 = tpu.matmul %446, %421, %cst_126 {dimension_numbers = #tpu.dot_dimension_numbers<[2], [1], [1], [2], [0, 0, 0, 1, 1, 2], [0], [0]>} : vector<8x8x8xf32>, vector<8x8x32xf32>, vector<8x8x32xf32> -> vector<8x8x32xf32>
    "tpu.trace_stop"() : () -> ()
    %448 = vector.shape_cast %447 : vector<8x8x32xf32> to vector<64x32xf32>
    %449 = vector.shape_cast %422 : vector<8x8x32xf32> to vector<64x32xf32>
    %c0_127 = arith.constant 0 : index
    %c0_128 = arith.constant 0 : index
    %450 = vector.load %arg7[%c0_127, %c0_128] : memref<32x32xf32, #tpu.memory_space<vmem>>, vector<32x32xf32>
    %cst_129 = arith.constant dense<0.000000e+00> : vector<64x32xf32>
    %451 = tpu.matmul %448, %450, %cst_129 {dimension_numbers = #tpu.dot_dimension_numbers<[1], [0], [0], [1], [0, 0, 1, 1], [], []>} : vector<64x32xf32>, vector<32x32xf32>, vector<64x32xf32> -> vector<64x32xf32>
    %c0_130 = arith.constant 0 : index
    %c0_131 = arith.constant 0 : index
    %452 = vector.load %arg8[%c0_130, %c0_131] : memref<32x32xf32, #tpu.memory_space<vmem>>, vector<32x32xf32>
    %cst_132 = arith.constant dense<0.000000e+00> : vector<64x32xf32>
    %453 = tpu.matmul %449, %452, %cst_132 {dimension_numbers = #tpu.dot_dimension_numbers<[1], [0], [0], [1], [0, 0, 1, 1], [], []>} : vector<64x32xf32>, vector<32x32xf32>, vector<64x32xf32> -> vector<64x32xf32>
    %454 = arith.addf %451, %453 : vector<64x32xf32>
    %455 = math.tanh %454 : vector<64x32xf32>
    %c0_133 = arith.constant 0 : index
    %c0_134 = arith.constant 0 : index
    %456 = vector.load %arg9[%c0_133, %c0_134] : memref<32x128xf32, #tpu.memory_space<vmem>>, vector<32x128xf32>
    %cst_135 = arith.constant dense<0.000000e+00> : vector<64x128xf32>
    %457 = tpu.matmul %455, %456, %cst_135 {dimension_numbers = #tpu.dot_dimension_numbers<[1], [0], [0], [1], [0, 0, 1, 1], [], []>} : vector<64x32xf32>, vector<32x128xf32>, vector<64x128xf32> -> vector<64x128xf32>
    %c0_136 = arith.constant 0 : index
    %c0_137 = arith.constant 0 : index
    %458 = vector.load %arg10[%c0_136, %c0_137] : memref<1x128xf32, #tpu.memory_space<vmem>>, vector<1x128xf32>
    %459 = vector.broadcast %458 : vector<1x128xf32> to vector<64x128xf32>
    %460 = arith.addf %457, %459 : vector<64x128xf32>
    %cst_138 = arith.constant dense<0xFF800000> : vector<64xf32>
    %461 = vector.multi_reduction <maximumf>, %460, %cst_138 [1] : vector<64x128xf32> to vector<64xf32>
    %462 = vector.shape_cast %461 : vector<64xf32> to vector<64x1xf32>
    %463 = vector.broadcast %462 : vector<64x1xf32> to vector<64x128xf32>
    %464 = arith.subf %460, %463 : vector<64x128xf32>
    %465 = math.exp %464 : vector<64x128xf32>
    %cst_139 = arith.constant dense<0.000000e+00> : vector<64xf32>
    %466 = vector.multi_reduction <add>, %465, %cst_139 [1] : vector<64x128xf32> to vector<64xf32>
    %467 = vector.shape_cast %466 : vector<64xf32> to vector<64x1xf32>
    %468 = math.log %467 : vector<64x1xf32>
    %469 = arith.addf %462, %468 : vector<64x1xf32>
    %470 = vector.broadcast %469 : vector<64x1xf32> to vector<64x128xf32>
    %471 = arith.subf %460, %470 : vector<64x128xf32>
    %c0_140 = arith.constant 0 : index
    %c0_141 = arith.constant 0 : index
    %472 = vector.load %arg3[%c0_140, %c0_141] : memref<64x1xi32, #tpu.memory_space<vmem>>, vector<64x1xi32>
    %473 = tpu.iota {dimensions = array<i32: 1>} : vector<64x128xi32>
    %474 = vector.broadcast %472 : vector<64x1xi32> to vector<64x128xi32>
    %475 = arith.cmpi eq, %473, %474 : vector<64x128xi32>
    %cst_142 = arith.constant 0.000000e+00 : f32
    %476 = vector.broadcast %cst_142 : f32 to vector<64x128xf32>
    %477 = arith.select %475, %471, %476 : vector<64x128xi1>, vector<64x128xf32>
    %cst_143 = arith.constant dense<0.000000e+00> : vector<64xf32>
    %478 = vector.multi_reduction <add>, %477, %cst_143 [1] : vector<64x128xf32> to vector<64xf32>
    %479 = vector.shape_cast %478 : vector<64xf32> to vector<64x1xf32>
    %cst_144 = arith.constant 0.000000e+00 : f32
    %480 = vector.broadcast %cst_144 : f32 to vector<64x1xf32>
    %481 = arith.subf %480, %479 : vector<64x1xf32>
    %c0_i32_145 = arith.constant 0 : i32
    %482 = vector.broadcast %c0_i32_145 : i32 to vector<64x1xi32>
    %483 = arith.cmpi ne, %472, %482 : vector<64x1xi32>
    %484 = arith.extui %483 : vector<64x1xi1> to vector<64x1xi32>
    %485 = arith.sitofp %484 : vector<64x1xi32> to vector<64x1xf32>
    %486 = arith.mulf %481, %485 : vector<64x1xf32>
    %487 = vector.shape_cast %486 : vector<64x1xf32> to vector<1x64x1xf32>
    %cst_146 = arith.constant dense<0.000000e+00> : vector<1xf32>
    %488 = vector.multi_reduction <add>, %487, %cst_146 [1, 2] : vector<1x64x1xf32> to vector<1xf32>
    %489 = vector.shape_cast %488 : vector<1xf32> to vector<1x1x1xf32>
    %490 = vector.extract %489[0, 0, 0] : f32 from vector<1x1x1xf32>
    %491 = vector.broadcast %490 : f32 to vector<1x1xf32>
    %cst_147 = arith.constant 5.000000e-01 : f32
    %492 = vector.broadcast %cst_147 : f32 to vector<1x1xf32>
    %493 = arith.mulf %491, %492 : vector<1x1xf32>
    %c0_148 = arith.constant 0 : index
    %c0_149 = arith.constant 0 : index
    %494 = vector.load %arg11[%c0_148, %c0_149] : memref<1x1xf32, #tpu.memory_space<vmem>>, vector<1x1xf32>
    tpu.vector_store %arg11[%c0_148, %c0_149], %493 {strides = array<i32>} : memref<1x1xf32, #tpu.memory_space<vmem>>, vector<1x1xf32>,
    return
  }
}

</mosaic_0001>

<llo_original>
// kernel: tpu_custom_call.1
$region0: #{tpu_custom_call.1}
  #allocation0 [shape = 'u32[]', space=smem, size = 0x4, offset = 0x4, fixed_abs, tag = 'smem constant byte address 0x4 - core index']
  #allocation1 [shape = 'u32[144,128]{1,0:T(1,128)}', space=vmem, size = 0x12000, scoped, tag = 'internal scratch']
  #allocation2 [shape = 'f32[8,8,32]{2,1,0:T(8,128)}', space=vmem, size = 0x8000, scoped, tag = 'scratch operand']
  #allocation3 [shape = 'f32[8,8,32]{2,1,0:T(8,128)}', space=vmem, size = 0x8000, scoped, tag = 'scratch operand']
  %s0 = inlined_call_operand.vmem [shape: f32[64,128], index: 0, kind: input, shape index: {}]
  %s1 = inlined_call_operand.hbm [shape: f32[64,128], index: 1, kind: input, shape index: {}]
  %s2 = inlined_call_operand.vmem [shape: s32[8,1], index: 2, kind: input, shape index: {}]
  %s3 = inlined_call_operand.vmem [shape: s32[64,1], index: 3, kind: input, shape index: {}]
  %s4 = inlined_call_operand.hbm [shape: f32[32,128], index: 4, kind: input, shape index: {}]
  %s5 = inlined_call_operand.hbm [shape: f32[32,128], index: 5, kind: input, shape index: {}]
  %s6 = inlined_call_operand.hbm [shape: f32[32,32], index: 6, kind: input, shape index: {}]
  %s7 = inlined_call_operand.hbm [shape: f32[32,32], index: 7, kind: input, shape index: {}]
  %s8 = inlined_call_operand.hbm [shape: f32[32,32], index: 8, kind: input, shape index: {}]
  %s9 = inlined_call_operand.hbm [shape: f32[32,128], index: 9, kind: input, shape index: {}]
  %s10 = inlined_call_operand.vmem [shape: f32[1,128], index: 10, kind: input, shape index: {}]
  %s11 = inlined_call_operand.hbm [shape: f32[1,1], index: 11, kind: output, shape index: {}]
  %s12 = sld [smem:[#allocation0]]
  $region82: #{tpu_custom_call.1} parent=0
    _
  %s14 = ssub.s32 1, %s12
  %s15 = scalar_select 0, %s14, %s12
  $region1: #{tpu_custom_call.1} parent=0
    #allocation4 [shape = 'u8[32768]{0}', space=vmem, size = 0x8000, scoped, tag = 'input window, operand 1, single buffered']
    #allocation5 [shape = 's32[1]{0}', space=sflag, size = 0x4, scoped, tag = 'scoped memory for tpu_custom_call.1']
    #allocation6 [shape = 's32[1]{0}', space=sflag, size = 0x4, scoped, tag = 'scoped memory for tpu_custom_call.1']
    #allocation7 [shape = 'u8[16384]{0}', space=vmem, size = 0x4000, scoped, tag = 'input window, operand 4, single buffered']
    #allocation8 [shape = 's32[1]{0}', space=sflag, size = 0x4, scoped, tag = 'scoped memory for tpu_custom_call.1']
    #allocation9 [shape = 'u8[16384]{0}', space=vmem, size = 0x4000, scoped, tag = 'input window, operand 5, single buffered']
    #allocation10 [shape = 'u8[16384]{0}', space=vmem, size = 0x4000, scoped, tag = 'input window, operand 6, single buffered']
    #allocation11 [shape = 's32[1]{0}', space=sflag, size = 0x4, scoped, tag = 'scoped memory for tpu_custom_call.1']
    #allocation12 [shape = 'u8[16384]{0}', space=vmem, size = 0x4000, scoped, tag = 'input window, operand 7, single buffered']
    #allocation13 [shape = 'u8[16384]{0}', space=vmem, size = 0x4000, scoped, tag = 'input window, operand 8, single buffered']
    #allocation14 [shape = 's32[1]{0}', space=sflag, size = 0x4, scoped, tag = 'scoped memory for tpu_custom_call.1']
    #allocation15 [shape = 'u8[16384]{0}', space=vmem, size = 0x4000, scoped, tag = 'input window, operand 9, single buffered']
    #allocation16 [shape = 'u8[512]{0}', space=vmem, size = 0x400, scoped, tag = 'output window, operand 0, single buffered']
    %16 = vsyncpa [#allocation5], 0
    %17 = vsyncpa [#allocation8], 0
    %18 = vsyncpa [#allocation11], 0
    %19 = vsyncpa [#allocation14], 0
    %20 = vsyncpa [#allocation6], 0
    // Predicated region
    $region2: #{tpu_custom_call.1} parent=1 // pred_check
      _
    $region3: #{tpu_custom_call.1} parent=1 // pred_check_branch
      %22 = sbr.rel (0) target = $region5
    $region4: #{tpu_custom_call.1} parent=1 // pred_region
      _
    $region5: #{tpu_custom_call.1} parent=1 // pred_fallthru
      _
    // Predicated region
    $region6: #{tpu_custom_call.1} parent=1 // pred_check
      _
    $region7: #{tpu_custom_call.1} parent=1 // pred_check_branch
      %24 = sbr.rel (0) target = $region9
    $region8: #{tpu_custom_call.1} parent=1 // pred_region
      %s26 = ssub.s32 1024, 1024
      %27 = vsyncadd [#allocation5], %s26
      %s28 = sshll.u32 [#allocation4], 4
      %s29 = int_to_ptr.vmem [resolvable:$true] %s28
      %34 = dma.hbm_to_vmem [thread:$0]  %s1, 1024, %s29, [#allocation5], 128, 128, 8
    $region9: #{tpu_custom_call.1} parent=1 // pred_fallthru
      _
    // Predicated region
    $region10: #{tpu_custom_call.1} parent=1 // pred_check
      _
    $region11: #{tpu_custom_call.1} parent=1 // pred_check_branch
      %36 = sbr.rel (0) target = $region13
    $region12: #{tpu_custom_call.1} parent=1 // pred_region
      _
    $region13: #{tpu_custom_call.1} parent=1 // pred_fallthru
      _
    // Predicated region
    $region14: #{tpu_custom_call.1} parent=1 // pred_check
      _
    $region15: #{tpu_custom_call.1} parent=1 // pred_check_branch
      %38 = sbr.rel (0) target = $region17
    $region16: #{tpu_custom_call.1} parent=1 // pred_region
      _
    $region17: #{tpu_custom_call.1} parent=1 // pred_fallthru
      _
    // Predicated region
    $region18: #{tpu_custom_call.1} parent=1 // pred_check
      _
    $region19: #{tpu_custom_call.1} parent=1 // pred_check_branch
      %40 = sbr.rel (0) target = $region21
    $region20: #{tpu_custom_call.1} parent=1 // pred_region
      %s42 = ssub.s32 512, 512
      %43 = vsyncadd [#allocation8], %s42
      %s44 = sshll.u32 [#allocation7], 4
      %s45 = int_to_ptr.vmem [resolvable:$true] %s44
      %50 = dma.hbm_to_vmem [thread:$0]  %s4, 512, %s45, [#allocation8], 128, 128, 8
    $region21: #{tpu_custom_call.1} parent=1 // pred_fallthru
      _
    // Predicated region
    $region22: #{tpu_custom_call.1} parent=1 // pred_check
      _
    $region23: #{tpu_custom_call.1} parent=1 // pred_check_branch
      %52 = sbr.rel (0) target = $region25
    $region24: #{tpu_custom_call.1} parent=1 // pred_region
      %s54 = ssub.s32 512, 512
      %55 = vsyncadd [#allocation8], %s54
      %s56 = sshll.u32 [#allocation9], 4
      %s57 = int_to_ptr.vmem [resolvable:$true] %s56
      %62 = dma.hbm_to_vmem [thread:$0]  %s5, 512, %s57, [#allocation8], 128, 128, 8
    $region25: #{tpu_custom_call.1} parent=1 // pred_fallthru
      _
    // Predicated region
    $region26: #{tpu_custom_call.1} parent=1 // pred_check
      _
    $region27: #{tpu_custom_call.1} parent=1 // pred_check_branch
      %64 = sbr.rel (0) target = $region29
    $region28: #{tpu_custom_call.1} parent=1 // pred_region
      %s66 = ssub.s32 512, 512
      %67 = vsyncadd [#allocation11], %s66
      %s68 = sshll.u32 [#allocation10], 4
      %s69 = int_to_ptr.vmem [resolvable:$true] %s68
      %74 = dma.hbm_to_vmem [thread:$0]  %s6, 512, %s69, [#allocation11], 128, 128, 8
    $region29: #{tpu_custom_call.1} parent=1 // pred_fallthru
      _
    // Predicated region
    $region30: #{tpu_custom_call.1} parent=1 // pred_check
      _
    $region31: #{tpu_custom_call.1} parent=1 // pred_check_branch
      %76 = sbr.rel (0) target = $region33
    $region32: #{tpu_custom_call.1} parent=1 // pred_region
      %s78 = ssub.s32 512, 512
      %79 = vsyncadd [#allocation11], %s78
      %s80 = sshll.u32 [#allocation12], 4
      %s81 = int_to_ptr.vmem [resolvable:$true] %s80
      %86 = dma.hbm_to_vmem [thread:$0]  %s7, 512, %s81, [#allocation11], 128, 128, 8
    $region33: #{tpu_custom_call.1} parent=1 // pred_fallthru
      _
    // Predicated region
    $region34: #{tpu_custom_call.1} parent=1 // pred_check
      _
    $region35: #{tpu_custom_call.1} parent=1 // pred_check_branch
      %88 = sbr.rel (0) target = $region37
    $region36: #{tpu_custom_call.1} parent=1 // pred_region
      %s90 = ssub.s32 512, 512
      %91 = vsyncadd [#allocation14], %s90
      %s92 = sshll.u32 [#allocation13], 4
      %s93 = int_to_ptr.vmem [resolvable:$true] %s92
      %98 = dma.hbm_to_vmem [thread:$0]  %s8, 512, %s93, [#allocation14], 128, 128, 8
    $region37: #{tpu_custom_call.1} parent=1 // pred_fallthru
      _
    // Predicated region
    $region38: #{tpu_custom_call.1} parent=1 // pred_check
      _
    $region39: #{tpu_custom_call.1} parent=1 // pred_check_branch
      %100 = sbr.rel (0) target = $region41
    $region40: #{tpu_custom_call.1} parent=1 // pred_region
      %s102 = ssub.s32 512, 512
      %103 = vsyncadd [#allocation14], %s102
      %s104 = sshll.u32 [#allocation15], 4
      %s105 = int_to_ptr.vmem [resolvable:$true] %s104
      %110 = dma.hbm_to_vmem [thread:$0]  %s9, 512, %s105, [#allocation14], 128, 128, 8
    $region41: #{tpu_custom_call.1} parent=1 // pred_fallthru
      _
    // Predicated region
    $region42: #{tpu_custom_call.1} parent=1 // pred_check
      _
    $region43: #{tpu_custom_call.1} parent=1 // pred_check_branch
      %112 = sbr.rel (0) target = $region45
    $region44: #{tpu_custom_call.1} parent=1 // pred_region
      _
    $region45: #{tpu_custom_call.1} parent=1 // pred_fallthru
      _
    // Predicated region
    $region46: #{tpu_custom_call.1} parent=1 // pred_check
      _
    $region47: #{tpu_custom_call.1} parent=1 // pred_check_branch
      %114 = sbr.rel (0) target = $region49
    $region48: #{tpu_custom_call.1} parent=1 // pred_region
      %115 = dma.done [#allocation5], 1024
    $region49: #{tpu_custom_call.1} parent=1 // pred_fallthru
      _
    // Predicated region
    $region50: #{tpu_custom_call.1} parent=1 // pred_check
      _
    $region51: #{tpu_custom_call.1} parent=1 // pred_check_branch
      %117 = sbr.rel (0) target = $region53
    $region52: #{tpu_custom_call.1} parent=1 // pred_region
      %118 = dma.done [#allocation8], 512
    $region53: #{tpu_custom_call.1} parent=1 // pred_fallthru
      _
    // Predicated region
    $region54: #{tpu_custom_call.1} parent=1 // pred_check
      _
    $region55: #{tpu_custom_call.1} parent=1 // pred_check_branch
      %120 = sbr.rel (0) target = $region57
    $region56: #{tpu_custom_call.1} parent=1 // pred_region
      %121 = dma.done [#allocation8], 512
    $region57: #{tpu_custom_call.1} parent=1 // pred_fallthru
      _
    // Predicated region
    $region58: #{tpu_custom_call.1} parent=1 // pred_check
      _
    $region59: #{tpu_custom_call.1} parent=1 // pred_check_branch
      %123 = sbr.rel (0) target = $region61
    $region60: #{tpu_custom_call.1} parent=1 // pred_region
      %124 = dma.done [#allocation11], 512
    $region61: #{tpu_custom_call.1} parent=1 // pred_fallthru
      _
    // Predicated region
    $region62: #{tpu_custom_call.1} parent=1 // pred_check
      _
    $region63: #{tpu_custom_call.1} parent=1 // pred_check_branch
      %126 = sbr.rel (0) target = $region65
    $region64: #{tpu_custom_call.1} parent=1 // pred_region
      %127 = dma.done [#allocation11], 512
    $region65: #{tpu_custom_call.1} parent=1 // pred_fallthru
      _
    // Predicated region
    $region66: #{tpu_custom_call.1} parent=1 // pred_check
      _
    $region67: #{tpu_custom_call.1} parent=1 // pred_check_branch
      %129 = sbr.rel (0) target = $region69
    $region68: #{tpu_custom_call.1} parent=1 // pred_region
      %130 = dma.done [#allocation14], 512
    $region69: #{tpu_custom_call.1} parent=1 // pred_fallthru
      _
    // Predicated region
    $region70: #{tpu_custom_call.1} parent=1 // pred_check
      _
    $region71: #{tpu_custom_call.1} parent=1 // pred_check_branch
      %132 = sbr.rel (0) target = $region73
    $region72: #{tpu_custom_call.1} parent=1 // pred_region
      %133 = dma.done [#allocation14], 512
    $region73: #{tpu_custom_call.1} parent=1 // pred_fallthru
      _
    %v134 = vld [vmem:[%s2] sm:$0xff]
    %v135 = vld [vmem:[#allocation7] sm:$0xff]
    %v136 = vld [vmem:[#allocation7 + $0x8] sm:$0xff]
    %v137 = vld [vmem:[#allocation7 + $0x10] sm:$0xff]
    %v138 = vld [vmem:[#allocation7 + $0x18] sm:$0xff]
    %v139 = vld [vmem:[#allocation9] sm:$0xff]
    %v140 = vld [vmem:[#allocation9 + $0x8] sm:$0xff]
    %v141 = vld [vmem:[#allocation9 + $0x10] sm:$0xff]
    %v142 = vld [vmem:[#allocation9 + $0x18] sm:$0xff]
    %v143 = vld [vmem:[%s0] sm:$0xff]
    %vm144 = vcmask 261120
    %v146 = vsel %vm144, 0.0, 0
    %148 = vmatprep.subr.mxu0 0.0
    %149 = vmatpush1.msra.mxu0 0.0
    %150 = vmatprep.subr.mxu0 0.0
    %151 = vmatpush1.msra.mxu0 0.0
    %152 = vmatprep.subr.mxu0 0.0
    %153 = vmatpush1.msra.mxu0 0.0
    %154 = vmatprep.subr.mxu0 0.0
    %155 = vmatpush1.msra.mxu0 0.0
    %156 = vmatprep.subr.mxu0 0.0
    %157 = vmatpush1.msra.mxu0 0.0
    %158 = vmatprep.subr.mxu0 0.0
    %159 = vmatpush1.msra.mxu0 0.0
    %160 = vmatprep.subr.mxu0 0.0
    %161 = vmatpush1.msra.mxu0 0.0
    %162 = vmatprep.subr.mxu0 0.0
    %163 = vmatpush1.msra.mxu0 0.0
    %164 = vmatprep.subr.mxu0 0.0
    %165 = vmatpush1.msra.mxu0 0.0
    %166 = vmatprep.subr.mxu0 0.0
    %167 = vmatpush1.msra.mxu0 0.0
    %168 = vmatprep.subr.mxu0 0.0
    %169 = vmatpush1.msra.mxu0 0.0
    %170 = vmatprep.subr.mxu0 0.0
    %171 = vmatpush1.msra.mxu0 0.0
    %172 = vmatprep.subr.mxu0 0.0
    %173 = vmatpush1.msra.mxu0 %v138
    %174 = vmatprep.subr.mxu0 0.0
    %175 = vmatpush1.msra.mxu0 %v137
    %176 = vmatprep.subr.mxu0 0.0
    %177 = vmatpush1.msra.mxu0 %v136
    %178 = vmatprep.subr.mxu0 0.0
    %179 = vmatpush1.msra.mxu0 %v135
    %180 = vmatprep.subr.mxu0 0.0
    %181 = vmatpush2.msra.mxu0 0.0
    %182 = vmatprep.subr.mxu0 0.0
    %183 = vmatpush2.msra.mxu0 0.0
    %184 = vmatprep.subr.mxu0 0.0
    %185 = vmatpush2.msra.mxu0 0.0
    %186 = vmatprep.subr.mxu0 0.0
    %187 = vmatpush2.msra.mxu0 0.0
    %188 = vmatprep.subr.mxu0 0.0
    %189 = vmatpush2.msra.mxu0 0.0
    %190 = vmatprep.subr.mxu0 0.0
    %191 = vmatpush2.msra.mxu0 0.0
    %192 = vmatprep.subr.mxu0 0.0
    %193 = vmatpush2.msra.mxu0 0.0
    %194 = vmatprep.subr.mxu0 0.0
    %195 = vmatpush2.msra.mxu0 0.0
    %196 = vmatprep.subr.mxu0 0.0
    %197 = vmatpush2.msra.mxu0 0.0
    %198 = vmatprep.subr.mxu0 0.0
    %199 = vmatpush2.msra.mxu0 0.0
    %200 = vmatprep.subr.mxu0 0.0
    %201 = vmatpush2.msra.mxu0 0.0
    %202 = vmatprep.subr.mxu0 0.0
    %203 = vmatpush2.msra.mxu0 0.0
    %204 = vmatprep.subr.mxu0 0.0
    %205 = vmatpush2.msra.mxu0 0.0
    %206 = vmatprep.subr.mxu0 0.0
    %207 = vmatpush2.msra.mxu0 0.0
    %208 = vmatprep.subr.mxu0 0.0
    %209 = vmatpush2.msra.mxu0 0.0
    %210 = vmatprep.subr.mxu0 0.0
    %211 = vmatpush2.msra.mxu0 0.0
    %212 = vmatprep.mubr.f32.mxu0 0.0
    %213 = vmatmul.mubr.f32.gmra.mxu0 %v146
    %v214 = vpop.f32.mrf.mxu0
    %v215 = vadd.f32 0.0, %v214
    %v216 = vpop.f32.mrf.mxu0
    %217 = vdwg.mxu0
    %v218 = vadd.f32 %v143, %v215
    %v219 = vxor.u32 %v218, 2147483648
    %v220 = vmul.f32 %v219, 1.442695
    %v221 = vpow.pop %v220
    %v222 = vadd.f32 %v221, 1.0
    %v223 = vrcp.pop %v222
    %v224 = vmul.f32 1.0, %v223
    %v225 = vtanh.pop %v218
    %v226 = vmul.f32 %v224, 0.0
    %228 = vrot.lane.b32.xlu0 %v225, 64
    %v229 = vpop.permute.xlu0 %228
    %v231 = vmul.f32 %v224, %v229
    %233 = vrot.lane.b32.xlu0 %v231, 32
    %v234 = vpop.permute.xlu0 %233
    %v236 = vadd.f32 %v226, %v234
    %v237 = vtanh.pop %v236
    %239 = vrot.lane.b32.xlu0 %v237, 64
    %v240 = vpop.permute.xlu0 %239
    %v242 = vmul.f32 %v224, %v240
    %vm243 = vcmp.gt.s32.totalorder %v134, 0
    %v244 = vsel %vm243, 1, 0
    %245 = vset.pattern.permute.xlu0 0
    %246 = vperm.xlu0 %245, %v244
    %v247 = vpop.permute.xlu0 %246
    %vm248 = vcmp.eq.s32.totalorder %v247, 1
    %v249 = vsel %vm248, %v242, 0.0
    %v250 = vsel %vm248, %v236, 0.0
    %v252 = vcombine.high %v249, %v249
    %v254 = vunpack.c.l.s4 1966171168
    %v255 = vunpack.c.0.s8 %v254
    %v256 = vlaneseq
    %v257 = vshrl.u32 %v256, 7
    %v258 = vsub.s32 %v255, %v257
    %v259 = vrot.slane %v249, %v258
    %v261 = vunpack.c.l.s4 1966171168
    %v262 = vunpack.c.0.s8 %v261
    %v263 = vlaneseq
    %v264 = vshrl.u32 %v263, 7
    %v265 = vsub.s32 %v262, %v264
    %v266 = vrot.slane %v252, %v265
    %v267 = vcombine.high %v259, %v259
    %v268 = vcombine.high %v266, %v266
    %v270 = vunpack.c.l.s4 1966171168
    %v271 = vunpack.c.0.s8 %v270
    %v272 = vlaneseq
    %v273 = vshrl.u32 %v272, 7
    %v274 = vsub.s32 %v271, %v273
    %v275 = vrot.slane %v259, %v274
    %v277 = vunpack.c.l.s4 1966171168
    %v278 = vunpack.c.0.s8 %v277
    %v279 = vlaneseq
    %v280 = vshrl.u32 %v279, 7
    %v281 = vsub.s32 %v278, %v280
    %v282 = vrot.slane %v266, %v281
    %v284 = vunpack.c.l.s4 1966171168
    %v285 = vunpack.c.0.s8 %v284
    %v286 = vlaneseq
    %v287 = vshrl.u32 %v286, 7
    %v288 = vsub.s32 %v285, %v287
    %v289 = vrot.slane %v267, %v288
    %v291 = vunpack.c.l.s4 1966171168
    %v292 = vunpack.c.0.s8 %v291
    %v293 = vlaneseq
    %v294 = vshrl.u32 %v293, 7
    %v295 = vsub.s32 %v292, %v294
    %v296 = vrot.slane %v268, %v295
    %v297 = vcombine.high %v275, %v275
    %v298 = vcombine.high %v282, %v282
    %v299 = vcombine.high %v289, %v289
    %v300 = vcombine.high %v296, %v296
    %v301 = vlaneseq
    %v302 = vshrl.u32 %v301, 7
    %v303 = vsub.s32 0, %v302
    %v304 = vrot.slane %v275, %v303
    %v305 = vlaneseq
    %v306 = vshrl.u32 %v305, 7
    %v307 = vsub.s32 0, %v306
    %v308 = vrot.slane %v289, %v307
    %v309 = vlaneseq
    %v310 = vshrl.u32 %v309, 7
    %v311 = vsub.s32 0, %v310
    %v312 = vrot.slane %v297, %v311
    %v313 = vlaneseq
    %v314 = vshrl.u32 %v313, 7
    %v315 = vsub.s32 0, %v314
    %v316 = vrot.slane %v299, %v315
    %v317 = vlaneseq
    %v318 = vshrl.u32 %v317, 7
    %v319 = vsub.s32 0, %v318
    %v320 = vrot.slane %v282, %v319
    %v321 = vlaneseq
    %v322 = vshrl.u32 %v321, 7
    %v323 = vsub.s32 0, %v322
    %v324 = vrot.slane %v296, %v323
    %v325 = vlaneseq
    %v326 = vshrl.u32 %v325, 7
    %v327 = vsub.s32 0, %v326
    %v328 = vrot.slane %v298, %v327
    %v329 = vlaneseq
    %v330 = vshrl.u32 %v329, 7
    %v331 = vsub.s32 0, %v330
    %v332 = vrot.slane %v300, %v331
    %333 = vrot.lane.b32.xlu0 %v304, 32
    %v334 = vpop.permute.xlu0 %333
    %335 = vrot.lane.b32.xlu0 %v308, 32
    %v336 = vpop.permute.xlu0 %335
    %337 = vrot.lane.b32.xlu0 %v312, 32
    %v338 = vpop.permute.xlu0 %337
    %339 = vrot.lane.b32.xlu0 %v316, 32
    %v340 = vpop.permute.xlu0 %339
    %341 = vrot.lane.b32.xlu0 %v320, 32
    %v342 = vpop.permute.xlu0 %341
    %343 = vrot.lane.b32.xlu0 %v324, 32
    %v344 = vpop.permute.xlu0 %343
    %345 = vrot.lane.b32.xlu0 %v328, 32
    %v346 = vpop.permute.xlu0 %345
    %347 = vrot.lane.b32.xlu0 %v332, 32
    %v348 = vpop.permute.xlu0 %347
    %vm357 = vcmask 253952
    %358 = vst.msk [vmem:[#allocation2] sm:$0x1] %vm357, %v334
    %359 = vst.msk [vmem:[#allocation2 + $0x8] sm:$0x1] %vm357, %v336
    %360 = vst.msk [vmem:[#allocation2 + $0x10] sm:$0x1] %vm357, %v338
    %361 = vst.msk [vmem:[#allocation2 + $0x18] sm:$0x1] %vm357, %v340
    %362 = vst.msk [vmem:[#allocation2 + $0x20] sm:$0x1] %vm357, %v342
    %363 = vst.msk [vmem:[#allocation2 + $0x28] sm:$0x1] %vm357, %v344
    %364 = vst.msk [vmem:[#allocation2 + $0x30] sm:$0x1] %vm357, %v346
    %365 = vst.msk [vmem:[#allocation2 + $0x38] sm:$0x1] %vm357, %v348
    %v366 = vld [vmem:[%s0 + $0x8] sm:$0xff]
    %367 = vrot.lane.b32.xlu0 %v249, 32
    %v368 = vpop.permute.xlu0 %367
    %v369 = vsel %vm144, %v368, 0
    %371 = vmatprep.subr.mxu0 0.0
    %372 = vmatpush1.msra.mxu0 0.0
    %373 = vmatprep.subr.mxu0 0.0
    %374 = vmatpush1.msra.mxu0 0.0
    %375 = vmatprep.subr.mxu0 0.0
    %376 = vmatpush1.msra.mxu0 0.0
    %377 = vmatprep.subr.mxu0 0.0
    %378 = vmatpush1.msra.mxu0 0.0
    %379 = vmatprep.subr.mxu0 0.0
    %380 = vmatpush1.msra.mxu0 0.0
    %381 = vmatprep.subr.mxu0 0.0
    %382 = vmatpush1.msra.mxu0 0.0
    %383 = vmatprep.subr.mxu0 0.0
    %384 = vmatpush1.msra.mxu0 0.0
    %385 = vmatprep.subr.mxu0 0.0
    %386 = vmatpush1.msra.mxu0 0.0
    %387 = vmatprep.subr.mxu0 0.0
    %388 = vmatpush1.msra.mxu0 0.0
    %389 = vmatprep.subr.mxu0 0.0
    %390 = vmatpush1.msra.mxu0 0.0
    %391 = vmatprep.subr.mxu0 0.0
    %392 = vmatpush1.msra.mxu0 0.0
    %393 = vmatprep.subr.mxu0 0.0
    %394 = vmatpush1.msra.mxu0 0.0
    %395 = vmatprep.subr.mxu0 0.0
    %396 = vmatpush1.msra.mxu0 %v138
    %397 = vmatprep.subr.mxu0 0.0
    %398 = vmatpush1.msra.mxu0 %v137
    %399 = vmatprep.subr.mxu0 0.0
    %400 = vmatpush1.msra.mxu0 %v136
    %401 = vmatprep.subr.mxu0 0.0
    %402 = vmatpush1.msra.mxu0 %v135
    %403 = vmatprep.subr.mxu0 0.0
    %404 = vmatpush2.msra.mxu0 0.0
    %405 = vmatprep.subr.mxu0 0.0
    %406 = vmatpush2.msra.mxu0 0.0
    %407 = vmatprep.subr.mxu0 0.0
    %408 = vmatpush2.msra.mxu0 0.0
    %409 = vmatprep.subr.mxu0 0.0
    %410 = vmatpush2.msra.mxu0 0.0
    %411 = vmatprep.subr.mxu0 0.0
    %412 = vmatpush2.msra.mxu0 0.0
    %413 = vmatprep.subr.mxu0 0.0
    %414 = vmatpush2.msra.mxu0 0.0
    %415 = vmatprep.subr.mxu0 0.0
    %416 = vmatpush2.msra.mxu0 0.0
    %417 = vmatprep.subr.mxu0 0.0
    %418 = vmatpush2.msra.mxu0 0.0
    %419 = vmatprep.subr.mxu0 0.0
    %420 = vmatpush2.msra.mxu0 0.0
    %421 = vmatprep.subr.mxu0 0.0
    %422 = vmatpush2.msra.mxu0 0.0
    %423 = vmatprep.subr.mxu0 0.0
    %424 = vmatpush2.msra.mxu0 0.0
    %425 = vmatprep.subr.mxu0 0.0
    %426 = vmatpush2.msra.mxu0 0.0
    %427 = vmatprep.subr.mxu0 0.0
    %428 = vmatpush2.msra.mxu0 0.0
    %429 = vmatprep.subr.mxu0 0.0
    %430 = vmatpush2.msra.mxu0 0.0
    %431 = vmatprep.subr.mxu0 0.0
    %432 = vmatpush2.msra.mxu0 0.0
    %433 = vmatprep.subr.mxu0 0.0
    %434 = vmatpush2.msra.mxu0 0.0
    %435 = vmatprep.mubr.f32.mxu0 0.0
    %436 = vmatmul.mubr.f32.gmra.mxu0 %v369
    %v437 = vpop.f32.mrf.mxu0
    %v438 = vadd.f32 0.0, %v437
    %v439 = vpop.f32.mrf.mxu0
    %440 = vdwg.mxu0
    %v441 = vadd.f32 %v366, %v438
    %v442 = vxor.u32 %v441, 2147483648
    %v443 = vmul.f32 %v442, 1.442695
    %v444 = vpow.pop %v443
    %v445 = vadd.f32 %v444, 1.0
    %v446 = vrcp.pop %v445
    %v447 = vmul.f32 1.0, %v446
    %v448 = vtanh.pop %v441
    %v449 = vmul.f32 %v447, %v250
    %451 = vrot.lane.b32.xlu0 %v448, 64
    %v452 = vpop.permute.xlu0 %451
    %v454 = vmul.f32 %v447, %v452
    %456 = vrot.lane.b32.xlu0 %v454, 32
    %v457 = vpop.permute.xlu0 %456
    %v459 = vadd.f32 %v449, %v457
    %v460 = vtanh.pop %v459
    %462 = vrot.lane.b32.xlu0 %v460, 64
    %v463 = vpop.permute.xlu0 %462
    %v465 = vmul.f32 %v447, %v463
    %vm466 = vcmp.gt.s32.totalorder %v134, 1
    %v467 = vsel %vm466, 1, 0
    %468 = vset.pattern.permute.xlu0 0
    %469 = vperm.xlu0 %468, %v467
    %v470 = vpop.permute.xlu0 %469
    %vm471 = vcmp.eq.s32.totalorder %v470, 1
    %v472 = vsel %vm471, %v465, %v249
    %v473 = vsel %vm471, %v459, %v250
    %v474 = vsel %vm471, %v465, 0.0
    %v476 = vcombine.high %v474, %v474
    %v478 = vunpack.c.l.s4 1966171168
    %v479 = vunpack.c.0.s8 %v478
    %v480 = vlaneseq
    %v481 = vshrl.u32 %v480, 7
    %v482 = vsub.s32 %v479, %v481
    %v483 = vrot.slane %v474, %v482
    %v485 = vunpack.c.l.s4 1966171168
    %v486 = vunpack.c.0.s8 %v485
    %v487 = vlaneseq
    %v488 = vshrl.u32 %v487, 7
    %v489 = vsub.s32 %v486, %v488
    %v490 = vrot.slane %v476, %v489
    %v491 = vcombine.high %v483, %v483
    %v492 = vcombine.high %v490, %v490
    %v494 = vunpack.c.l.s4 1966171168
    %v495 = vunpack.c.0.s8 %v494
    %v496 = vlaneseq
    %v497 = vshrl.u32 %v496, 7
    %v498 = vsub.s32 %v495, %v497
    %v499 = vrot.slane %v483, %v498
    %v501 = vunpack.c.l.s4 1966171168
    %v502 = vunpack.c.0.s8 %v501
    %v503 = vlaneseq
    %v504 = vshrl.u32 %v503, 7
    %v505 = vsub.s32 %v502, %v504
    %v506 = vrot.slane %v490, %v505
    %v508 = vunpack.c.l.s4 1966171168
    %v509 = vunpack.c.0.s8 %v508
    %v510 = vlaneseq
    %v511 = vshrl.u32 %v510, 7
    %v512 = vsub.s32 %v509, %v511
    %v513 = vrot.slane %v491, %v512
    %v515 = vunpack.c.l.s4 1966171168
    %v516 = vunpack.c.0.s8 %v515
    %v517 = vlaneseq
    %v518 = vshrl.u32 %v517, 7
    %v519 = vsub.s32 %v516, %v518
    %v520 = vrot.slane %v492, %v519
    %v521 = vcombine.high %v499, %v499
    %v522 = vcombine.high %v506, %v506
    %v523 = vcombine.high %v513, %v513
    %v524 = vcombine.high %v520, %v520
    %v525 = vlaneseq
    %v526 = vshrl.u32 %v525, 7
    %v527 = vsub.s32 0, %v526
    %v528 = vrot.slane %v499, %v527
    %v529 = vlaneseq
    %v530 = vshrl.u32 %v529, 7
    %v531 = vsub.s32 0, %v530
    %v532 = vrot.slane %v513, %v531
    %v533 = vlaneseq
    %v534 = vshrl.u32 %v533, 7
    %v535 = vsub.s32 0, %v534
    %v536 = vrot.slane %v521, %v535
    %v537 = vlaneseq
    %v538 = vshrl.u32 %v537, 7
    %v539 = vsub.s32 0, %v538
    %v540 = vrot.slane %v523, %v539
    %v541 = vlaneseq
    %v542 = vshrl.u32 %v541, 7
    %v543 = vsub.s32 0, %v542
    %v544 = vrot.slane %v506, %v543
    %v545 = vlaneseq
    %v546 = vshrl.u32 %v545, 7
    %v547 = vsub.s32 0, %v546
    %v548 = vrot.slane %v520, %v547
    %v549 = vlaneseq
    %v550 = vshrl.u32 %v549, 7
    %v551 = vsub.s32 0, %v550
    %v552 = vrot.slane %v522, %v551
    %v553 = vlaneseq
    %v554 = vshrl.u32 %v553, 7
    %v555 = vsub.s32 0, %v554
    %v556 = vrot.slane %v524, %v555
    %557 = vrot.lane.b32.xlu0 %v528, 32
    %v558 = vpop.permute.xlu0 %557
    %559 = vrot.lane.b32.xlu0 %v532, 32
    %v560 = vpop.permute.xlu0 %559
    %561 = vrot.lane.b32.xlu0 %v536, 32
    %v562 = vpop.permute.xlu0 %561
    %563 = vrot.lane.b32.xlu0 %v540, 32
    %v564 = vpop.permute.xlu0 %563
    %565 = vrot.lane.b32.xlu0 %v544, 32
    %v566 = vpop.permute.xlu0 %565
    %567 = vrot.lane.b32.xlu0 %v548, 32
    %v568 = vpop.permute.xlu0 %567
    %569 = vrot.lane.b32.xlu0 %v552, 32
    %v570 = vpop.permute.xlu0 %569
    %571 = vrot.lane.b32.xlu0 %v556, 32
    %v572 = vpop.permute.xlu0 %571
    %581 = vst.msk [vmem:[#allocation2 + $0x1] sm:$0x1] %vm357, %v558
    %582 = vst.msk [vmem:[#allocation2 + $0x9] sm:$0x1] %vm357, %v560
    %583 = vst.msk [vmem:[#allocation2 + $0x11] sm:$0x1] %vm357, %v562
    %584 = vst.msk [vmem:[#allocation2 + $0x19] sm:$0x1] %vm357, %v564
    %585 = vst.msk [vmem:[#allocation2 + $0x21] sm:$0x1] %vm357, %v566
    %586 = vst.msk [vmem:[#allocation2 + $0x29] sm:$0x1] %vm357, %v568
    %587 = vst.msk [vmem:[#allocation2 + $0x31] sm:$0x1] %vm357, %v570
    %588 = vst.msk [vmem:[#allocation2 + $0x39] sm:$0x1] %vm357, %v572
    %v589 = vld [vmem:[%s0 + $0x10] sm:$0xff]
    %591 = vrot.lane.b32.xlu0 %v472, 32
    %v592 = vpop.permute.xlu0 %591
    %v593 = vsel %vm144, %v592, 0
    %595 = vmatprep.subr.mxu0 0.0
    %596 = vmatpush1.msra.mxu0 0.0
    %597 = vmatprep.subr.mxu0 0.0
    %598 = vmatpush1.msra.mxu0 0.0
    %599 = vmatprep.subr.mxu0 0.0
    %600 = vmatpush1.msra.mxu0 0.0
    %601 = vmatprep.subr.mxu0 0.0
    %602 = vmatpush1.msra.mxu0 0.0
    %603 = vmatprep.subr.mxu0 0.0
    %604 = vmatpush1.msra.mxu0 0.0
    %605 = vmatprep.subr.mxu0 0.0
    %606 = vmatpush1.msra.mxu0 0.0
    %607 = vmatprep.subr.mxu0 0.0
    %608 = vmatpush1.msra.mxu0 0.0
    %609 = vmatprep.subr.mxu0 0.0
    %610 = vmatpush1.msra.mxu0 0.0
    %611 = vmatprep.subr.mxu0 0.0
    %612 = vmatpush1.msra.mxu0 0.0
    %613 = vmatprep.subr.mxu0 0.0
    %614 = vmatpush1.msra.mxu0 0.0
    %615 = vmatprep.subr.mxu0 0.0
    %616 = vmatpush1.msra.mxu0 0.0
    %617 = vmatprep.subr.mxu0 0.0
    %618 = vmatpush1.msra.mxu0 0.0
    %619 = vmatprep.subr.mxu0 0.0
    %620 = vmatpush1.msra.mxu0 %v138
    %621 = vmatprep.subr.mxu0 0.0
    %622 = vmatpush1.msra.mxu0 %v137
    %623 = vmatprep.subr.mxu0 0.0
    %624 = vmatpush1.msra.mxu0 %v136
    %625 = vmatprep.subr.mxu0 0.0
    %626 = vmatpush1.msra.mxu0 %v135
    %627 = vmatprep.subr.mxu0 0.0
    %628 = vmatpush2.msra.mxu0 0.0
    %629 = vmatprep.subr.mxu0 0.0
    %630 = vmatpush2.msra.mxu0 0.0
    %631 = vmatprep.subr.mxu0 0.0
    %632 = vmatpush2.msra.mxu0 0.0
    %633 = vmatprep.subr.mxu0 0.0
    %634 = vmatpush2.msra.mxu0 0.0
    %635 = vmatprep.subr.mxu0 0.0
    %636 = vmatpush2.msra.mxu0 0.0
    %637 = vmatprep.subr.mxu0 0.0
    %638 = vmatpush2.msra.mxu0 0.0
    %639 = vmatprep.subr.mxu0 0.0
    %640 = vmatpush2.msra.mxu0 0.0
    %641 = vmatprep.subr.mxu0 0.0
    %642 = vmatpush2.msra.mxu0 0.0
    %643 = vmatprep.subr.mxu0 0.0
    %644 = vmatpush2.msra.mxu0 0.0
    %645 = vmatprep.subr.mxu0 0.0
    %646 = vmatpush2.msra.mxu0 0.0
    %647 = vmatprep.subr.mxu0 0.0
    %648 = vmatpush2.msra.mxu0 0.0
    %649 = vmatprep.subr.mxu0 0.0
    %650 = vmatpush2.msra.mxu0 0.0
    %651 = vmatprep.subr.mxu0 0.0
    %652 = vmatpush2.msra.mxu0 0.0
    %653 = vmatprep.subr.mxu0 0.0
    %654 = vmatpush2.msra.mxu0 0.0
    %655 = vmatprep.subr.mxu0 0.0
    %656 = vmatpush2.msra.mxu0 0.0
    %657 = vmatprep.subr.mxu0 0.0
    %658 = vmatpush2.msra.mxu0 0.0
    %659 = vmatprep.mubr.f32.mxu0 0.0
    %660 = vmatmul.mubr.f32.gmra.mxu0 %v593
    %v661 = vpop.f32.mrf.mxu0
    %v662 = vadd.f32 0.0, %v661
    %v663 = vpop.f32.mrf.mxu0
    %664 = vdwg.mxu0
    %v665 = vadd.f32 %v589, %v662
    %v666 = vxor.u32 %v665, 2147483648
    %v667 = vmul.f32 %v666, 1.442695
    %v668 = vpow.pop %v667
    %v669 = vadd.f32 %v668, 1.0
    %v670 = vrcp.pop %v669
    %v671 = vmul.f32 1.0, %v670
    %v672 = vtanh.pop %v665
    %v673 = vmul.f32 %v671, %v473
    %675 = vrot.lane.b32.xlu0 %v672, 64
    %v676 = vpop.permute.xlu0 %675
    %v678 = vmul.f32 %v671, %v676
    %680 = vrot.lane.b32.xlu0 %v678, 32
    %v681 = vpop.permute.xlu0 %680
    %v683 = vadd.f32 %v673, %v681
    %v684 = vtanh.pop %v683
    %686 = vrot.lane.b32.xlu0 %v684, 64
    %v687 = vpop.permute.xlu0 %686
    %v689 = vmul.f32 %v671, %v687
    %vm690 = vcmp.gt.s32.totalorder %v134, 2
    %v691 = vsel %vm690, 1, 0
    %692 = vset.pattern.permute.xlu0 0
    %693 = vperm.xlu0 %692, %v691
    %v694 = vpop.permute.xlu0 %693
    %vm695 = vcmp.eq.s32.totalorder %v694, 1
    %v696 = vsel %vm695, %v689, %v472
    %v697 = vsel %vm695, %v683, %v473
    %v698 = vsel %vm695, %v689, 0.0
    %v700 = vcombine.high %v698, %v698
    %v702 = vunpack.c.l.s4 1966171168
    %v703 = vunpack.c.0.s8 %v702
    %v704 = vlaneseq
    %v705 = vshrl.u32 %v704, 7
    %v706 = vsub.s32 %v703, %v705
    %v707 = vrot.slane %v698, %v706
    %v709 = vunpack.c.l.s4 1966171168
    %v710 = vunpack.c.0.s8 %v709
    %v711 = vlaneseq
    %v712 = vshrl.u32 %v711, 7
    %v713 = vsub.s32 %v710, %v712
    %v714 = vrot.slane %v700, %v713
    %v715 = vcombine.high %v707, %v707
    %v716 = vcombine.high %v714, %v714
    %v718 = vunpack.c.l.s4 1966171168
    %v719 = vunpack.c.0.s8 %v718
    %v720 = vlaneseq
    %v721 = vshrl.u32 %v720, 7
    %v722 = vsub.s32 %v719, %v721
    %v723 = vrot.slane %v707, %v722
    %v725 = vunpack.c.l.s4 1966171168
    %v726 = vunpack.c.0.s8 %v725
    %v727 = vlaneseq
    %v728 = vshrl.u32 %v727, 7
    %v729 = vsub.s32 %v726, %v728
    %v730 = vrot.slane %v714, %v729
    %v732 = vunpack.c.l.s4 1966171168
    %v733 = vunpack.c.0.s8 %v732
    %v734 = vlaneseq
    %v735 = vshrl.u32 %v734, 7
    %v736 = vsub.s32 %v733, %v735
    %v737 = vrot.slane %v715, %v736
    %v739 = vunpack.c.l.s4 1966171168
    %v740 = vunpack.c.0.s8 %v739
    %v741 = vlaneseq
    %v742 = vshrl.u32 %v741, 7
    %v743 = vsub.s32 %v740, %v742
    %v744 = vrot.slane %v716, %v743
    %v745 = vcombine.high %v723, %v723
    %v746 = vcombine.high %v730, %v730
    %v747 = vcombine.high %v737, %v737
    %v748 = vcombine.high %v744, %v744
    %v749 = vlaneseq
    %v750 = vshrl.u32 %v749, 7
    %v751 = vsub.s32 0, %v750
    %v752 = vrot.slane %v723, %v751
    %v753 = vlaneseq
    %v754 = vshrl.u32 %v753, 7
    %v755 = vsub.s32 0, %v754
    %v756 = vrot.slane %v737, %v755
    %v757 = vlaneseq
    %v758 = vshrl.u32 %v757, 7
    %v759 = vsub.s32 0, %v758
    %v760 = vrot.slane %v745, %v759
    %v761 = vlaneseq
    %v762 = vshrl.u32 %v761, 7
    %v763 = vsub.s32 0, %v762
    %v764 = vrot.slane %v747, %v763
    %v765 = vlaneseq
    %v766 = vshrl.u32 %v765, 7
    %v767 = vsub.s32 0, %v766
    %v768 = vrot.slane %v730, %v767
    %v769 = vlaneseq
    %v770 = vshrl.u32 %v769, 7
    %v771 = vsub.s32 0, %v770
    %v772 = vrot.slane %v744, %v771
    %v773 = vlaneseq
    %v774 = vshrl.u32 %v773, 7
    %v775 = vsub.s32 0, %v774
    %v776 = vrot.slane %v746, %v775
    %v777 = vlaneseq
    %v778 = vshrl.u32 %v777, 7
    %v779 = vsub.s32 0, %v778
    %v780 = vrot.slane %v748, %v779
    %781 = vrot.lane.b32.xlu0 %v752, 32
    %v782 = vpop.permute.xlu0 %781
    %783 = vrot.lane.b32.xlu0 %v756, 32
    %v784 = vpop.permute.xlu0 %783
    %785 = vrot.lane.b32.xlu0 %v760, 32
    %v786 = vpop.permute.xlu0 %785
    %787 = vrot.lane.b32.xlu0 %v764, 32
    %v788 = vpop.permute.xlu0 %787
    %789 = vrot.lane.b32.xlu0 %v768, 32
    %v790 = vpop.permute.xlu0 %789
    %791 = vrot.lane.b32.xlu0 %v772, 32
    %v792 = vpop.permute.xlu0 %791
    %793 = vrot.lane.b32.xlu0 %v776, 32
    %v794 = vpop.permute.xlu0 %793
    %795 = vrot.lane.b32.xlu0 %v780, 32
    %v796 = vpop.permute.xlu0 %795
    %805 = vst.msk [vmem:[#allocation2 + $0x2] sm:$0x1] %vm357, %v782
    %806 = vst.msk [vmem:[#allocation2 + $0xa] sm:$0x1] %vm357, %v784
    %807 = vst.msk [vmem:[#allocation2 + $0x12] sm:$0x1] %vm357, %v786
    %808 = vst.msk [vmem:[#allocation2 + $0x1a] sm:$0x1] %vm357, %v788
    %809 = vst.msk [vmem:[#allocation2 + $0x22] sm:$0x1] %vm357, %v790
    %810 = vst.msk [vmem:[#allocation2 + $0x2a] sm:$0x1] %vm357, %v792
    %811 = vst.msk [vmem:[#allocation2 + $0x32] sm:$0x1] %vm357, %v794
    %812 = vst.msk [vmem:[#allocation2 + $0x3a] sm:$0x1] %vm357, %v796
    %v813 = vld [vmem:[%s0 + $0x18] sm:$0xff]
    %815 = vrot.lane.b32.xlu0 %v696, 32
    %v816 = vpop.permute.xlu0 %815
    %v817 = vsel %vm144, %v816, 0
    %819 = vmatprep.subr.mxu0 0.0
    %820 = vmatpush1.msra.mxu0 0.0
    %821 = vmatprep.subr.mxu0 0.0
    %822 = vmatpush1.msra.mxu0 0.0
    %823 = vmatprep.subr.mxu0 0.0
    %824 = vmatpush1.msra.mxu0 0.0
    %825 = vmatprep.subr.mxu0 0.0
    %826 = vmatpush1.msra.mxu0 0.0
    %827 = vmatprep.subr.mxu0 0.0
    %828 = vmatpush1.msra.mxu0 0.0
    %829 = vmatprep.subr.mxu0 0.0
    %830 = vmatpush1.msra.mxu0 0.0
    %831 = vmatprep.subr.mxu0 0.0
    %832 = vmatpush1.msra.mxu0 0.0
    %833 = vmatprep.subr.mxu0 0.0
    %834 = vmatpush1.msra.mxu0 0.0
    %835 = vmatprep.subr.mxu0 0.0
    %836 = vmatpush1.msra.mxu0 0.0
    %837 = vmatprep.subr.mxu0 0.0
    %838 = vmatpush1.msra.mxu0 0.0
    %839 = vmatprep.subr.mxu0 0.0
    %840 = vmatpush1.msra.mxu0 0.0
    %841 = vmatprep.subr.mxu0 0.0
    %842 = vmatpush1.msra.mxu0 0.0
    %843 = vmatprep.subr.mxu0 0.0
    %844 = vmatpush1.msra.mxu0 %v138
    %845 = vmatprep.subr.mxu0 0.0
    %846 = vmatpush1.msra.mxu0 %v137
    %847 = vmatprep.subr.mxu0 0.0
    %848 = vmatpush1.msra.mxu0 %v136
    %849 = vmatprep.subr.mxu0 0.0
    %850 = vmatpush1.msra.mxu0 %v135
    %851 = vmatprep.subr.mxu0 0.0
    %852 = vmatpush2.msra.mxu0 0.0
    %853 = vmatprep.subr.mxu0 0.0
    %854 = vmatpush2.msra.mxu0 0.0
    %855 = vmatprep.subr.mxu0 0.0
    %856 = vmatpush2.msra.mxu0 0.0
    %857 = vmatprep.subr.mxu0 0.0
    %858 = vmatpush2.msra.mxu0 0.0
    %859 = vmatprep.subr.mxu0 0.0
    %860 = vmatpush2.msra.mxu0 0.0
    %861 = vmatprep.subr.mxu0 0.0
    %862 = vmatpush2.msra.mxu0 0.0
    %863 = vmatprep.subr.mxu0 0.0
    %864 = vmatpush2.msra.mxu0 0.0
    %865 = vmatprep.subr.mxu0 0.0
    %866 = vmatpush2.msra.mxu0 0.0
    %867 = vmatprep.subr.mxu0 0.0
    %868 = vmatpush2.msra.mxu0 0.0
    %869 = vmatprep.subr.mxu0 0.0
    %870 = vmatpush2.msra.mxu0 0.0
    %871 = vmatprep.subr.mxu0 0.0
    %872 = vmatpush2.msra.mxu0 0.0
    %873 = vmatprep.subr.mxu0 0.0
    %874 = vmatpush2.msra.mxu0 0.0
    %875 = vmatprep.subr.mxu0 0.0
    %876 = vmatpush2.msra.mxu0 0.0
    %877 = vmatprep.subr.mxu0 0.0
    %878 = vmatpush2.msra.mxu0 0.0
    %879 = vmatprep.subr.mxu0 0.0
    %880 = vmatpush2.msra.mxu0 0.0
    %881 = vmatprep.subr.mxu0 0.0
    %882 = vmatpush2.msra.mxu0 0.0
    %883 = vmatprep.mubr.f32.mxu0 0.0
    %884 = vmatmul.mubr.f32.gmra.mxu0 %v817
    %v885 = vpop.f32.mrf.mxu0
    %v886 = vadd.f32 0.0, %v885
    %v887 = vpop.f32.mrf.mxu0
    %888 = vdwg.mxu0
    %v889 = vadd.f32 %v813, %v886
    %v890 = vxor.u32 %v889, 2147483648
    %v891 = vmul.f32 %v890, 1.442695
    %v892 = vpow.pop %v891
    %v893 = vadd.f32 %v892, 1.0
    %v894 = vrcp.pop %v893
    %v895 = vmul.f32 1.0, %v894
    %v896 = vtanh.pop %v889
    %v897 = vmul.f32 %v895, %v697
    %899 = vrot.lane.b32.xlu0 %v896, 64
    %v900 = vpop.permute.xlu0 %899
    %v902 = vmul.f32 %v895, %v900
    %904 = vrot.lane.b32.xlu0 %v902, 32
    %v905 = vpop.permute.xlu0 %904
    %v907 = vadd.f32 %v897, %v905
    %v908 = vtanh.pop %v907
    %910 = vrot.lane.b32.xlu0 %v908, 64
    %v911 = vpop.permute.xlu0 %910
    %v913 = vmul.f32 %v895, %v911
    %vm914 = vcmp.gt.s32.totalorder %v134, 3
    %v915 = vsel %vm914, 1, 0
    %916 = vset.pattern.permute.xlu0 0
    %917 = vperm.xlu0 %916, %v915
    %v918 = vpop.permute.xlu0 %917
    %vm919 = vcmp.eq.s32.totalorder %v918, 1
    %v920 = vsel %vm919, %v913, %v696
    %v921 = vsel %vm919, %v907, %v697
    %v922 = vsel %vm919, %v913, 0.0
    %v924 = vcombine.high %v922, %v922
    %v926 = vunpack.c.l.s4 1966171168
    %v927 = vunpack.c.0.s8 %v926
    %v928 = vlaneseq
    %v929 = vshrl.u32 %v928, 7
    %v930 = vsub.s32 %v927, %v929
    %v931 = vrot.slane %v922, %v930
    %v933 = vunpack.c.l.s4 1966171168
    %v934 = vunpack.c.0.s8 %v933
    %v935 = vlaneseq
    %v936 = vshrl.u32 %v935, 7
    %v937 = vsub.s32 %v934, %v936
    %v938 = vrot.slane %v924, %v937
    %v939 = vcombine.high %v931, %v931
    %v940 = vcombine.high %v938, %v938
    %v942 = vunpack.c.l.s4 1966171168
    %v943 = vunpack.c.0.s8 %v942
    %v944 = vlaneseq
    %v945 = vshrl.u32 %v944, 7
    %v946 = vsub.s32 %v943, %v945
    %v947 = vrot.slane %v931, %v946
    %v949 = vunpack.c.l.s4 1966171168
    %v950 = vunpack.c.0.s8 %v949
    %v951 = vlaneseq
    %v952 = vshrl.u32 %v951, 7
    %v953 = vsub.s32 %v950, %v952
    %v954 = vrot.slane %v938, %v953
    %v956 = vunpack.c.l.s4 1966171168
    %v957 = vunpack.c.0.s8 %v956
    %v958 = vlaneseq
    %v959 = vshrl.u32 %v958, 7
    %v960 = vsub.s32 %v957, %v959
    %v961 = vrot.slane %v939, %v960
    %v963 = vunpack.c.l.s4 1966171168
    %v964 = vunpack.c.0.s8 %v963
    %v965 = vlaneseq
    %v966 = vshrl.u32 %v965, 7
    %v967 = vsub.s32 %v964, %v966
    %v968 = vrot.slane %v940, %v967
    %v969 = vcombine.high %v947, %v947
    %v970 = vcombine.high %v954, %v954
    %v971 = vcombine.high %v961, %v961
    %v972 = vcombine.high %v968, %v968
    %v973 = vlaneseq
    %v974 = vshrl.u32 %v973, 7
    %v975 = vsub.s32 0, %v974
    %v976 = vrot.slane %v947, %v975
    %v977 = vlaneseq
    %v978 = vshrl.u32 %v977, 7
    %v979 = vsub.s32 0, %v978
    %v980 = vrot.slane %v961, %v979
    %v981 = vlaneseq
    %v982 = vshrl.u32 %v981, 7
    %v983 = vsub.s32 0, %v982
    %v984 = vrot.slane %v969, %v983
    %v985 = vlaneseq
    %v986 = vshrl.u32 %v985, 7
    %v987 = vsub.s32 0, %v986
    %v988 = vrot.slane %v971, %v987
    %v989 = vlaneseq
    %v990 = vshrl.u32 %v989, 7
    %v991 = vsub.s32 0, %v990
    %v992 = vrot.slane %v954, %v991
    %v993 = vlaneseq
    %v994 = vshrl.u32 %v993, 7
    %v995 = vsub.s32 0, %v994
    %v996 = vrot.slane %v968, %v995
    %v997 = vlaneseq
    %v998 = vshrl.u32 %v997, 7
    %v999 = vsub.s32 0, %v998
    %v1000 = vrot.slane %v970, %v999
    %v1001 = vlaneseq
    %v1002 = vshrl.u32 %v1001, 7
    %v1003 = vsub.s32 0, %v1002
    %v1004 = vrot.slane %v972, %v1003
    %1005 = vrot.lane.b32.xlu0 %v976, 32
    %v1006 = vpop.permute.xlu0 %1005
    %1007 = vrot.lane.b32.xlu0 %v980, 32
    %v1008 = vpop.permute.xlu0 %1007
    %1009 = vrot.lane.b32.xlu0 %v984, 32
    %v1010 = vpop.permute.xlu0 %1009
    %1011 = vrot.lane.b32.xlu0 %v988, 32
    %v1012 = vpop.permute.xlu0 %1011
    %1013 = vrot.lane.b32.xlu0 %v992, 32
    %v1014 = vpop.permute.xlu0 %1013
    %1015 = vrot.lane.b32.xlu0 %v996, 32
    %v1016 = vpop.permute.xlu0 %1015
    %1017 = vrot.lane.b32.xlu0 %v1000, 32
    %v1018 = vpop.permute.xlu0 %1017
    %1019 = vrot.lane.b32.xlu0 %v1004, 32
    %v1020 = vpop.permute.xlu0 %1019
    %1029 = vst.msk [vmem:[#allocation2 + $0x3] sm:$0x1] %vm357, %v1006
    %1030 = vst.msk [vmem:[#allocation2 + $0xb] sm:$0x1] %vm357, %v1008
    %1031 = vst.msk [vmem:[#allocation2 + $0x13] sm:$0x1] %vm357, %v1010
    %1032 = vst.msk [vmem:[#allocation2 + $0x1b] sm:$0x1] %vm357, %v1012
    %1033 = vst.msk [vmem:[#allocation2 + $0x23] sm:$0x1] %vm357, %v1014
    %1034 = vst.msk [vmem:[#allocation2 + $0x2b] sm:$0x1] %vm357, %v1016
    %1035 = vst.msk [vmem:[#allocation2 + $0x33] sm:$0x1] %vm357, %v1018
    %1036 = vst.msk [vmem:[#allocation2 + $0x3b] sm:$0x1] %vm357, %v1020
    %v1037 = vld [vmem:[%s0 + $0x20] sm:$0xff]
    %1039 = vrot.lane.b32.xlu0 %v920, 32
    %v1040 = vpop.permute.xlu0 %1039
    %v1041 = vsel %vm144, %v1040, 0
    %1043 = vmatprep.subr.mxu0 0.0
    %1044 = vmatpush1.msra.mxu0 0.0
    %1045 = vmatprep.subr.mxu0 0.0
    %1046 = vmatpush1.msra.mxu0 0.0
    %1047 = vmatprep.subr.mxu0 0.0
    %1048 = vmatpush1.msra.mxu0 0.0
    %1049 = vmatprep.subr.mxu0 0.0
    %1050 = vmatpush1.msra.mxu0 0.0
    %1051 = vmatprep.subr.mxu0 0.0
    %1052 = vmatpush1.msra.mxu0 0.0
    %1053 = vmatprep.subr.mxu0 0.0
    %1054 = vmatpush1.msra.mxu0 0.0
    %1055 = vmatprep.subr.mxu0 0.0
    %1056 = vmatpush1.msra.mxu0 0.0
    %1057 = vmatprep.subr.mxu0 0.0
    %1058 = vmatpush1.msra.mxu0 0.0
    %1059 = vmatprep.subr.mxu0 0.0
    %1060 = vmatpush1.msra.mxu0 0.0
    %1061 = vmatprep.subr.mxu0 0.0
    %1062 = vmatpush1.msra.mxu0 0.0
    %1063 = vmatprep.subr.mxu0 0.0
    %1064 = vmatpush1.msra.mxu0 0.0
    %1065 = vmatprep.subr.mxu0 0.0
    %1066 = vmatpush1.msra.mxu0 0.0
    %1067 = vmatprep.subr.mxu0 0.0
    %1068 = vmatpush1.msra.mxu0 %v138
    %1069 = vmatprep.subr.mxu0 0.0
    %1070 = vmatpush1.msra.mxu0 %v137
    %1071 = vmatprep.subr.mxu0 0.0
    %1072 = vmatpush1.msra.mxu0 %v136
    %1073 = vmatprep.subr.mxu0 0.0
    %1074 = vmatpush1.msra.mxu0 %v135
    %1075 = vmatprep.subr.mxu0 0.0
    %1076 = vmatpush2.msra.mxu0 0.0
    %1077 = vmatprep.subr.mxu0 0.0
    %1078 = vmatpush2.msra.mxu0 0.0
    %1079 = vmatprep.subr.mxu0 0.0
    %1080 = vmatpush2.msra.mxu0 0.0
    %1081 = vmatprep.subr.mxu0 0.0
    %1082 = vmatpush2.msra.mxu0 0.0
    %1083 = vmatprep.subr.mxu0 0.0
    %1084 = vmatpush2.msra.mxu0 0.0
    %1085 = vmatprep.subr.mxu0 0.0
    %1086 = vmatpush2.msra.mxu0 0.0
    %1087 = vmatprep.subr.mxu0 0.0
    %1088 = vmatpush2.msra.mxu0 0.0
    %1089 = vmatprep.subr.mxu0 0.0
    %1090 = vmatpush2.msra.mxu0 0.0
    %1091 = vmatprep.subr.mxu0 0.0
    %1092 = vmatpush2.msra.mxu0 0.0
    %1093 = vmatprep.subr.mxu0 0.0
    %1094 = vmatpush2.msra.mxu0 0.0
    %1095 = vmatprep.subr.mxu0 0.0
    %1096 = vmatpush2.msra.mxu0 0.0
    %1097 = vmatprep.subr.mxu0 0.0
    %1098 = vmatpush2.msra.mxu0 0.0
    %1099 = vmatprep.subr.mxu0 0.0
    %1100 = vmatpush2.msra.mxu0 0.0
    %1101 = vmatprep.subr.mxu0 0.0
    %1102 = vmatpush2.msra.mxu0 0.0
    %1103 = vmatprep.subr.mxu0 0.0
    %1104 = vmatpush2.msra.mxu0 0.0
    %1105 = vmatprep.subr.mxu0 0.0
    %1106 = vmatpush2.msra.mxu0 0.0
    %1107 = vmatprep.mubr.f32.mxu0 0.0
    %1108 = vmatmul.mubr.f32.gmra.mxu0 %v1041
    %v1109 = vpop.f32.mrf.mxu0
    %v1110 = vadd.f32 0.0, %v1109
    %v1111 = vpop.f32.mrf.mxu0
    %1112 = vdwg.mxu0
    %v1113 = vadd.f32 %v1037, %v1110
    %v1114 = vxor.u32 %v1113, 2147483648
    %v1115 = vmul.f32 %v1114, 1.442695
    %v1116 = vpow.pop %v1115
    %v1117 = vadd.f32 %v1116, 1.0
    %v1118 = vrcp.pop %v1117
    %v1119 = vmul.f32 1.0, %v1118
    %v1120 = vtanh.pop %v1113
    %v1121 = vmul.f32 %v1119, %v921
    %1123 = vrot.lane.b32.xlu0 %v1120, 64
    %v1124 = vpop.permute.xlu0 %1123
    %v1126 = vmul.f32 %v1119, %v1124
    %1128 = vrot.lane.b32.xlu0 %v1126, 32
    %v1129 = vpop.permute.xlu0 %1128
    %v1131 = vadd.f32 %v1121, %v1129
    %v1132 = vtanh.pop %v1131
    %1134 = vrot.lane.b32.xlu0 %v1132, 64
    %v1135 = vpop.permute.xlu0 %1134
    %v1137 = vmul.f32 %v1119, %v1135
    %vm1138 = vcmp.gt.s32.totalorder %v134, 4
    %v1139 = vsel %vm1138, 1, 0
    %1140 = vset.pattern.permute.xlu0 0
    %1141 = vperm.xlu0 %1140, %v1139
    %v1142 = vpop.permute.xlu0 %1141
    %vm1143 = vcmp.eq.s32.totalorder %v1142, 1
    %v1144 = vsel %vm1143, %v1137, %v920
    %v1145 = vsel %vm1143, %v1131, %v921
    %v1146 = vsel %vm1143, %v1137, 0.0
    %v1148 = vcombine.high %v1146, %v1146
    %v1150 = vunpack.c.l.s4 1966171168
    %v1151 = vunpack.c.0.s8 %v1150
    %v1152 = vlaneseq
    %v1153 = vshrl.u32 %v1152, 7
    %v1154 = vsub.s32 %v1151, %v1153
    %v1155 = vrot.slane %v1146, %v1154
    %v1157 = vunpack.c.l.s4 1966171168
    %v1158 = vunpack.c.0.s8 %v1157
    %v1159 = vlaneseq
    %v1160 = vshrl.u32 %v1159, 7
    %v1161 = vsub.s32 %v1158, %v1160
    %v1162 = vrot.slane %v1148, %v1161
    %v1163 = vcombine.high %v1155, %v1155
    %v1164 = vcombine.high %v1162, %v1162
    %v1166 = vunpack.c.l.s4 1966171168
    %v1167 = vunpack.c.0.s8 %v1166
    %v1168 = vlaneseq
    %v1169 = vshrl.u32 %v1168, 7
    %v1170 = vsub.s32 %v1167, %v1169
    %v1171 = vrot.slane %v1155, %v1170
    %v1173 = vunpack.c.l.s4 1966171168
    %v1174 = vunpack.c.0.s8 %v1173
    %v1175 = vlaneseq
    %v1176 = vshrl.u32 %v1175, 7
    %v1177 = vsub.s32 %v1174, %v1176
    %v1178 = vrot.slane %v1162, %v1177
    %v1180 = vunpack.c.l.s4 1966171168
    %v1181 = vunpack.c.0.s8 %v1180
    %v1182 = vlaneseq
    %v1183 = vshrl.u32 %v1182, 7
    %v1184 = vsub.s32 %v1181, %v1183
    %v1185 = vrot.slane %v1163, %v1184
    %v1187 = vunpack.c.l.s4 1966171168
    %v1188 = vunpack.c.0.s8 %v1187
    %v1189 = vlaneseq
    %v1190 = vshrl.u32 %v1189, 7
    %v1191 = vsub.s32 %v1188, %v1190
    %v1192 = vrot.slane %v1164, %v1191
    %v1193 = vcombine.high %v1171, %v1171
    %v1194 = vcombine.high %v1178, %v1178
    %v1195 = vcombine.high %v1185, %v1185
    %v1196 = vcombine.high %v1192, %v1192
    %v1197 = vlaneseq
    %v1198 = vshrl.u32 %v1197, 7
    %v1199 = vsub.s32 0, %v1198
    %v1200 = vrot.slane %v1171, %v1199
    %v1201 = vlaneseq
    %v1202 = vshrl.u32 %v1201, 7
    %v1203 = vsub.s32 0, %v1202
    %v1204 = vrot.slane %v1185, %v1203
    %v1205 = vlaneseq
    %v1206 = vshrl.u32 %v1205, 7
    %v1207 = vsub.s32 0, %v1206
    %v1208 = vrot.slane %v1193, %v1207
    %v1209 = vlaneseq
    %v1210 = vshrl.u32 %v1209, 7
    %v1211 = vsub.s32 0, %v1210
    %v1212 = vrot.slane %v1195, %v1211
    %v1213 = vlaneseq
    %v1214 = vshrl.u32 %v1213, 7
    %v1215 = vsub.s32 0, %v1214
    %v1216 = vrot.slane %v1178, %v1215
    %v1217 = vlaneseq
    %v1218 = vshrl.u32 %v1217, 7
    %v1219 = vsub.s32 0, %v1218
    %v1220 = vrot.slane %v1192, %v1219
    %v1221 = vlaneseq
    %v1222 = vshrl.u32 %v1221, 7
    %v1223 = vsub.s32 0, %v1222
    %v1224 = vrot.slane %v1194, %v1223
    %v1225 = vlaneseq
    %v1226 = vshrl.u32 %v1225, 7
    %v1227 = vsub.s32 0, %v1226
    %v1228 = vrot.slane %v1196, %v1227
    %1229 = vrot.lane.b32.xlu0 %v1200, 32
    %v1230 = vpop.permute.xlu0 %1229
    %1231 = vrot.lane.b32.xlu0 %v1204, 32
    %v1232 = vpop.permute.xlu0 %1231
    %1233 = vrot.lane.b32.xlu0 %v1208, 32
    %v1234 = vpop.permute.xlu0 %1233
    %1235 = vrot.lane.b32.xlu0 %v1212, 32
    %v1236 = vpop.permute.xlu0 %1235
    %1237 = vrot.lane.b32.xlu0 %v1216, 32
    %v1238 = vpop.permute.xlu0 %1237
    %1239 = vrot.lane.b32.xlu0 %v1220, 32
    %v1240 = vpop.permute.xlu0 %1239
    %1241 = vrot.lane.b32.xlu0 %v1224, 32
    %v1242 = vpop.permute.xlu0 %1241
    %1243 = vrot.lane.b32.xlu0 %v1228, 32
    %v1244 = vpop.permute.xlu0 %1243
    %1253 = vst.msk [vmem:[#allocation2 + $0x4] sm:$0x1] %vm357, %v1230
    %1254 = vst.msk [vmem:[#allocation2 + $0xc] sm:$0x1] %vm357, %v1232
    %1255 = vst.msk [vmem:[#allocation2 + $0x14] sm:$0x1] %vm357, %v1234
    %1256 = vst.msk [vmem:[#allocation2 + $0x1c] sm:$0x1] %vm357, %v1236
    %1257 = vst.msk [vmem:[#allocation2 + $0x24] sm:$0x1] %vm357, %v1238
    %1258 = vst.msk [vmem:[#allocation2 + $0x2c] sm:$0x1] %vm357, %v1240
    %1259 = vst.msk [vmem:[#allocation2 + $0x34] sm:$0x1] %vm357, %v1242
    %1260 = vst.msk [vmem:[#allocation2 + $0x3c] sm:$0x1] %vm357, %v1244
    %v1261 = vld [vmem:[%s0 + $0x28] sm:$0xff]
    %1263 = vrot.lane.b32.xlu0 %v1144, 32
    %v1264 = vpop.permute.xlu0 %1263
    %v1265 = vsel %vm144, %v1264, 0
    %1267 = vmatprep.subr.mxu0 0.0
    %1268 = vmatpush1.msra.mxu0 0.0
    %1269 = vmatprep.subr.mxu0 0.0
    %1270 = vmatpush1.msra.mxu0 0.0
    %1271 = vmatprep.subr.mxu0 0.0
    %1272 = vmatpush1.msra.mxu0 0.0
    %1273 = vmatprep.subr.mxu0 0.0
    %1274 = vmatpush1.msra.mxu0 0.0
    %1275 = vmatprep.subr.mxu0 0.0
    %1276 = vmatpush1.msra.mxu0 0.0
    %1277 = vmatprep.subr.mxu0 0.0
    %1278 = vmatpush1.msra.mxu0 0.0
    %1279 = vmatprep.subr.mxu0 0.0
    %1280 = vmatpush1.msra.mxu0 0.0
    %1281 = vmatprep.subr.mxu0 0.0
    %1282 = vmatpush1.msra.mxu0 0.0
    %1283 = vmatprep.subr.mxu0 0.0
    %1284 = vmatpush1.msra.mxu0 0.0
    %1285 = vmatprep.subr.mxu0 0.0
    %1286 = vmatpush1.msra.mxu0 0.0
    %1287 = vmatprep.subr.mxu0 0.0
    %1288 = vmatpush1.msra.mxu0 0.0
    %1289 = vmatprep.subr.mxu0 0.0
    %1290 = vmatpush1.msra.mxu0 0.0
    %1291 = vmatprep.subr.mxu0 0.0
    %1292 = vmatpush1.msra.mxu0 %v138
    %1293 = vmatprep.subr.mxu0 0.0
    %1294 = vmatpush1.msra.mxu0 %v137
    %1295 = vmatprep.subr.mxu0 0.0
    %1296 = vmatpush1.msra.mxu0 %v136
    %1297 = vmatprep.subr.mxu0 0.0
    %1298 = vmatpush1.msra.mxu0 %v135
    %1299 = vmatprep.subr.mxu0 0.0
    %1300 = vmatpush2.msra.mxu0 0.0
    %1301 = vmatprep.subr.mxu0 0.0
    %1302 = vmatpush2.msra.mxu0 0.0
    %1303 = vmatprep.subr.mxu0 0.0
    %1304 = vmatpush2.msra.mxu0 0.0
    %1305 = vmatprep.subr.mxu0 0.0
    %1306 = vmatpush2.msra.mxu0 0.0
    %1307 = vmatprep.subr.mxu0 0.0
    %1308 = vmatpush2.msra.mxu0 0.0
    %1309 = vmatprep.subr.mxu0 0.0
    %1310 = vmatpush2.msra.mxu0 0.0
    %1311 = vmatprep.subr.mxu0 0.0
    %1312 = vmatpush2.msra.mxu0 0.0
    %1313 = vmatprep.subr.mxu0 0.0
    %1314 = vmatpush2.msra.mxu0 0.0
    %1315 = vmatprep.subr.mxu0 0.0
    %1316 = vmatpush2.msra.mxu0 0.0
    %1317 = vmatprep.subr.mxu0 0.0
    %1318 = vmatpush2.msra.mxu0 0.0
    %1319 = vmatprep.subr.mxu0 0.0
    %1320 = vmatpush2.msra.mxu0 0.0
    %1321 = vmatprep.subr.mxu0 0.0
    %1322 = vmatpush2.msra.mxu0 0.0
    %1323 = vmatprep.subr.mxu0 0.0
    %1324 = vmatpush2.msra.mxu0 0.0
    %1325 = vmatprep.subr.mxu0 0.0
    %1326 = vmatpush2.msra.mxu0 0.0
    %1327 = vmatprep.subr.mxu0 0.0
    %1328 = vmatpush2.msra.mxu0 0.0
    %1329 = vmatprep.subr.mxu0 0.0
    %1330 = vmatpush2.msra.mxu0 0.0
    %1331 = vmatprep.mubr.f32.mxu0 0.0
    %1332 = vmatmul.mubr.f32.gmra.mxu0 %v1265
    %v1333 = vpop.f32.mrf.mxu0
    %v1334 = vadd.f32 0.0, %v1333
    %v1335 = vpop.f32.mrf.mxu0
    %1336 = vdwg.mxu0
    %v1337 = vadd.f32 %v1261, %v1334
    %v1338 = vxor.u32 %v1337, 2147483648
    %v1339 = vmul.f32 %v1338, 1.442695
    %v1340 = vpow.pop %v1339
    %v1341 = vadd.f32 %v1340, 1.0
    %v1342 = vrcp.pop %v1341
    %v1343 = vmul.f32 1.0, %v1342
    %v1344 = vtanh.pop %v1337
    %v1345 = vmul.f32 %v1343, %v1145
    %1347 = vrot.lane.b32.xlu0 %v1344, 64
    %v1348 = vpop.permute.xlu0 %1347
    %v1350 = vmul.f32 %v1343, %v1348
    %1352 = vrot.lane.b32.xlu0 %v1350, 32
    %v1353 = vpop.permute.xlu0 %1352
    %v1355 = vadd.f32 %v1345, %v1353
    %v1356 = vtanh.pop %v1355
    %1358 = vrot.lane.b32.xlu0 %v1356, 64
    %v1359 = vpop.permute.xlu0 %1358
    %v1361 = vmul.f32 %v1343, %v1359
    %vm1362 = vcmp.gt.s32.totalorder %v134, 5
    %v1363 = vsel %vm1362, 1, 0
    %1364 = vset.pattern.permute.xlu0 0
    %1365 = vperm.xlu0 %1364, %v1363
    %v1366 = vpop.permute.xlu0 %1365
    %vm1367 = vcmp.eq.s32.totalorder %v1366, 1
    %v1368 = vsel %vm1367, %v1361, %v1144
    %v1369 = vsel %vm1367, %v1355, %v1145
    %v1370 = vsel %vm1367, %v1361, 0.0
    %v1372 = vcombine.high %v1370, %v1370
    %v1374 = vunpack.c.l.s4 1966171168
    %v1375 = vunpack.c.0.s8 %v1374
    %v1376 = vlaneseq
    %v1377 = vshrl.u32 %v1376, 7
    %v1378 = vsub.s32 %v1375, %v1377
    %v1379 = vrot.slane %v1370, %v1378
    %v1381 = vunpack.c.l.s4 1966171168
    %v1382 = vunpack.c.0.s8 %v1381
    %v1383 = vlaneseq
    %v1384 = vshrl.u32 %v1383, 7
    %v1385 = vsub.s32 %v1382, %v1384
    %v1386 = vrot.slane %v1372, %v1385
    %v1387 = vcombine.high %v1379, %v1379
    %v1388 = vcombine.high %v1386, %v1386
    %v1390 = vunpack.c.l.s4 1966171168
    %v1391 = vunpack.c.0.s8 %v1390
    %v1392 = vlaneseq
    %v1393 = vshrl.u32 %v1392, 7
    %v1394 = vsub.s32 %v1391, %v1393
    %v1395 = vrot.slane %v1379, %v1394
    %v1397 = vunpack.c.l.s4 1966171168
    %v1398 = vunpack.c.0.s8 %v1397
    %v1399 = vlaneseq
    %v1400 = vshrl.u32 %v1399, 7
    %v1401 = vsub.s32 %v1398, %v1400
    %v1402 = vrot.slane %v1386, %v1401
    %v1404 = vunpack.c.l.s4 1966171168
    %v1405 = vunpack.c.0.s8 %v1404
    %v1406 = vlaneseq
    %v1407 = vshrl.u32 %v1406, 7
    %v1408 = vsub.s32 %v1405, %v1407
    %v1409 = vrot.slane %v1387, %v1408
    %v1411 = vunpack.c.l.s4 1966171168
    %v1412 = vunpack.c.0.s8 %v1411
    %v1413 = vlaneseq
    %v1414 = vshrl.u32 %v1413, 7
    %v1415 = vsub.s32 %v1412, %v1414
    %v1416 = vrot.slane %v1388, %v1415
    %v1417 = vcombine.high %v1395, %v1395
    %v1418 = vcombine.high %v1402, %v1402
    %v1419 = vcombine.high %v1409, %v1409
    %v1420 = vcombine.high %v1416, %v1416
    %v1421 = vlaneseq
    %v1422 = vshrl.u32 %v1421, 7
    %v1423 = vsub.s32 0, %v1422
    %v1424 = vrot.slane %v1395, %v1423
    %v1425 = vlaneseq
    %v1426 = vshrl.u32 %v1425, 7
    %v1427 = vsub.s32 0, %v1426
    %v1428 = vrot.slane %v1409, %v1427
    %v1429 = vlaneseq
    %v1430 = vshrl.u32 %v1429, 7
    %v1431 = vsub.s32 0, %v1430
    %v1432 = vrot.slane %v1417, %v1431
    %v1433 = vlaneseq
    %v1434 = vshrl.u32 %v1433, 7
    %v1435 = vsub.s32 0, %v1434
    %v1436 = vrot.slane %v1419, %v1435
    %v1437 = vlaneseq
    %v1438 = vshrl.u32 %v1437, 7
    %v1439 = vsub.s32 0, %v1438
    %v1440 = vrot.slane %v1402, %v1439
    %v1441 = vlaneseq
    %v1442 = vshrl.u32 %v1441, 7
    %v1443 = vsub.s32 0, %v1442
    %v1444 = vrot.slane %v1416, %v1443
    %v1445 = vlaneseq
    %v1446 = vshrl.u32 %v1445, 7
    %v1447 = vsub.s32 0, %v1446
    %v1448 = vrot.slane %v1418, %v1447
    %v1449 = vlaneseq
    %v1450 = vshrl.u32 %v1449, 7
    %v1451 = vsub.s32 0, %v1450
    %v1452 = vrot.slane %v1420, %v1451
    %1453 = vrot.lane.b32.xlu0 %v1424, 32
    %v1454 = vpop.permute.xlu0 %1453
    %1455 = vrot.lane.b32.xlu0 %v1428, 32
    %v1456 = vpop.permute.xlu0 %1455
    %1457 = vrot.lane.b32.xlu0 %v1432, 32
    %v1458 = vpop.permute.xlu0 %1457
    %1459 = vrot.lane.b32.xlu0 %v1436, 32
    %v1460 = vpop.permute.xlu0 %1459
    %1461 = vrot.lane.b32.xlu0 %v1440, 32
    %v1462 = vpop.permute.xlu0 %1461
    %1463 = vrot.lane.b32.xlu0 %v1444, 32
    %v1464 = vpop.permute.xlu0 %1463
    %1465 = vrot.lane.b32.xlu0 %v1448, 32
    %v1466 = vpop.permute.xlu0 %1465
    %1467 = vrot.lane.b32.xlu0 %v1452, 32
    %v1468 = vpop.permute.xlu0 %1467
    %1477 = vst.msk [vmem:[#allocation2 + $0x5] sm:$0x1] %vm357, %v1454
    %1478 = vst.msk [vmem:[#allocation2 + $0xd] sm:$0x1] %vm357, %v1456
    %1479 = vst.msk [vmem:[#allocation2 + $0x15] sm:$0x1] %vm357, %v1458
    %1480 = vst.msk [vmem:[#allocation2 + $0x1d] sm:$0x1] %vm357, %v1460
    %1481 = vst.msk [vmem:[#allocation2 + $0x25] sm:$0x1] %vm357, %v1462
    %1482 = vst.msk [vmem:[#allocation2 + $0x2d] sm:$0x1] %vm357, %v1464
    %1483 = vst.msk [vmem:[#allocation2 + $0x35] sm:$0x1] %vm357, %v1466
    %1484 = vst.msk [vmem:[#allocation2 + $0x3d] sm:$0x1] %vm357, %v1468
    %v1485 = vld [vmem:[%s0 + $0x30] sm:$0xff]
    %1487 = vrot.lane.b32.xlu0 %v1368, 32
    %v1488 = vpop.permute.xlu0 %1487
    %v1489 = vsel %vm144, %v1488, 0
    %1491 = vmatprep.subr.mxu0 0.0
    %1492 = vmatpush1.msra.mxu0 0.0
    %1493 = vmatprep.subr.mxu0 0.0
    %1494 = vmatpush1.msra.mxu0 0.0
    %1495 = vmatprep.subr.mxu0 0.0
    %1496 = vmatpush1.msra.mxu0 0.0
    %1497 = vmatprep.subr.mxu0 0.0
    %1498 = vmatpush1.msra.mxu0 0.0
    %1499 = vmatprep.subr.mxu0 0.0
    %1500 = vmatpush1.msra.mxu0 0.0
    %1501 = vmatprep.subr.mxu0 0.0
    %1502 = vmatpush1.msra.mxu0 0.0
    %1503 = vmatprep.subr.mxu0 0.0
    %1504 = vmatpush1.msra.mxu0 0.0
    %1505 = vmatprep.subr.mxu0 0.0
    %1506 = vmatpush1.msra.mxu0 0.0
    %1507 = vmatprep.subr.mxu0 0.0
    %1508 = vmatpush1.msra.mxu0 0.0
    %1509 = vmatprep.subr.mxu0 0.0
    %1510 = vmatpush1.msra.mxu0 0.0
    %1511 = vmatprep.subr.mxu0 0.0
    %1512 = vmatpush1.msra.mxu0 0.0
    %1513 = vmatprep.subr.mxu0 0.0
    %1514 = vmatpush1.msra.mxu0 0.0
    %1515 = vmatprep.subr.mxu0 0.0
    %1516 = vmatpush1.msra.mxu0 %v138
    %1517 = vmatprep.subr.mxu0 0.0
    %1518 = vmatpush1.msra.mxu0 %v137
    %1519 = vmatprep.subr.mxu0 0.0
    %1520 = vmatpush1.msra.mxu0 %v136
    %1521 = vmatprep.subr.mxu0 0.0
    %1522 = vmatpush1.msra.mxu0 %v135
    %1523 = vmatprep.subr.mxu0 0.0
    %1524 = vmatpush2.msra.mxu0 0.0
    %1525 = vmatprep.subr.mxu0 0.0
    %1526 = vmatpush2.msra.mxu0 0.0
    %1527 = vmatprep.subr.mxu0 0.0
    %1528 = vmatpush2.msra.mxu0 0.0
    %1529 = vmatprep.subr.mxu0 0.0
    %1530 = vmatpush2.msra.mxu0 0.0
    %1531 = vmatprep.subr.mxu0 0.0
    %1532 = vmatpush2.msra.mxu0 0.0
    %1533 = vmatprep.subr.mxu0 0.0
    %1534 = vmatpush2.msra.mxu0 0.0
    %1535 = vmatprep.subr.mxu0 0.0
    %1536 = vmatpush2.msra.mxu0 0.0
    %1537 = vmatprep.subr.mxu0 0.0
    %1538 = vmatpush2.msra.mxu0 0.0
    %1539 = vmatprep.subr.mxu0 0.0
    %1540 = vmatpush2.msra.mxu0 0.0
    %1541 = vmatprep.subr.mxu0 0.0
    %1542 = vmatpush2.msra.mxu0 0.0
    %1543 = vmatprep.subr.mxu0 0.0
    %1544 = vmatpush2.msra.mxu0 0.0
    %1545 = vmatprep.subr.mxu0 0.0
    %1546 = vmatpush2.msra.mxu0 0.0
    %1547 = vmatprep.subr.mxu0 0.0
    %1548 = vmatpush2.msra.mxu0 0.0
    %1549 = vmatprep.subr.mxu0 0.0
    %1550 = vmatpush2.msra.mxu0 0.0
    %1551 = vmatprep.subr.mxu0 0.0
    %1552 = vmatpush2.msra.mxu0 0.0
    %1553 = vmatprep.subr.mxu0 0.0
    %1554 = vmatpush2.msra.mxu0 0.0
    %1555 = vmatprep.mubr.f32.mxu0 0.0
    %1556 = vmatmul.mubr.f32.gmra.mxu0 %v1489
    %v1557 = vpop.f32.mrf.mxu0
    %v1558 = vadd.f32 0.0, %v1557
    %v1559 = vpop.f32.mrf.mxu0
    %1560 = vdwg.mxu0
    %v1561 = vadd.f32 %v1485, %v1558
    %v1562 = vxor.u32 %v1561, 2147483648
    %v1563 = vmul.f32 %v1562, 1.442695
    %v1564 = vpow.pop %v1563
    %v1565 = vadd.f32 %v1564, 1.0
    %v1566 = vrcp.pop %v1565
    %v1567 = vmul.f32 1.0, %v1566
    %v1568 = vtanh.pop %v1561
    %v1569 = vmul.f32 %v1567, %v1369
    %1571 = vrot.lane.b32.xlu0 %v1568, 64
    %v1572 = vpop.permute.xlu0 %1571
    %v1574 = vmul.f32 %v1567, %v1572
    %1576 = vrot.lane.b32.xlu0 %v1574, 32
    %v1577 = vpop.permute.xlu0 %1576
    %v1579 = vadd.f32 %v1569, %v1577
    %v1580 = vtanh.pop %v1579
    %1582 = vrot.lane.b32.xlu0 %v1580, 64
    %v1583 = vpop.permute.xlu0 %1582
    %v1585 = vmul.f32 %v1567, %v1583
    %vm1586 = vcmp.gt.s32.totalorder %v134, 6
    %v1587 = vsel %vm1586, 1, 0
    %1588 = vset.pattern.permute.xlu0 0
    %1589 = vperm.xlu0 %1588, %v1587
    %v1590 = vpop.permute.xlu0 %1589
    %vm1591 = vcmp.eq.s32.totalorder %v1590, 1
    %v1592 = vsel %vm1591, %v1585, %v1368
    %v1593 = vsel %vm1591, %v1579, %v1369
    %v1594 = vsel %vm1591, %v1585, 0.0
    %v1596 = vcombine.high %v1594, %v1594
    %v1598 = vunpack.c.l.s4 1966171168
    %v1599 = vunpack.c.0.s8 %v1598
    %v1600 = vlaneseq
    %v1601 = vshrl.u32 %v1600, 7
    %v1602 = vsub.s32 %v1599, %v1601
    %v1603 = vrot.slane %v1594, %v1602
    %v1605 = vunpack.c.l.s4 1966171168
    %v1606 = vunpack.c.0.s8 %v1605
    %v1607 = vlaneseq
    %v1608 = vshrl.u32 %v1607, 7
    %v1609 = vsub.s32 %v1606, %v1608
    %v1610 = vrot.slane %v1596, %v1609
    %v1611 = vcombine.high %v1603, %v1603
    %v1612 = vcombine.high %v1610, %v1610
    %v1614 = vunpack.c.l.s4 1966171168
    %v1615 = vunpack.c.0.s8 %v1614
    %v1616 = vlaneseq
    %v1617 = vshrl.u32 %v1616, 7
    %v1618 = vsub.s32 %v1615, %v1617
    %v1619 = vrot.slane %v1603, %v1618
    %v1621 = vunpack.c.l.s4 1966171168
    %v1622 = vunpack.c.0.s8 %v1621
    %v1623 = vlaneseq
    %v1624 = vshrl.u32 %v1623, 7
    %v1625 = vsub.s32 %v1622, %v1624
    %v1626 = vrot.slane %v1610, %v1625
    %v1628 = vunpack.c.l.s4 1966171168
    %v1629 = vunpack.c.0.s8 %v1628
    %v1630 = vlaneseq
    %v1631 = vshrl.u32 %v1630, 7
    %v1632 = vsub.s32 %v1629, %v1631
    %v1633 = vrot.slane %v1611, %v1632
    %v1635 = vunpack.c.l.s4 1966171168
    %v1636 = vunpack.c.0.s8 %v1635
    %v1637 = vlaneseq
    %v1638 = vshrl.u32 %v1637, 7
    %v1639 = vsub.s32 %v1636, %v1638
    %v1640 = vrot.slane %v1612, %v1639
    %v1641 = vcombine.high %v1619, %v1619
    %v1642 = vcombine.high %v1626, %v1626
    %v1643 = vcombine.high %v1633, %v1633
    %v1644 = vcombine.high %v1640, %v1640
    %v1645 = vlaneseq
    %v1646 = vshrl.u32 %v1645, 7
    %v1647 = vsub.s32 0, %v1646
    %v1648 = vrot.slane %v1619, %v1647
    %v1649 = vlaneseq
    %v1650 = vshrl.u32 %v1649, 7
    %v1651 = vsub.s32 0, %v1650
    %v1652 = vrot.slane %v1633, %v1651
    %v1653 = vlaneseq
    %v1654 = vshrl.u32 %v1653, 7
    %v1655 = vsub.s32 0, %v1654
    %v1656 = vrot.slane %v1641, %v1655
    %v1657 = vlaneseq
    %v1658 = vshrl.u32 %v1657, 7
    %v1659 = vsub.s32 0, %v1658
    %v1660 = vrot.slane %v1643, %v1659
    %v1661 = vlaneseq
    %v1662 = vshrl.u32 %v1661, 7
    %v1663 = vsub.s32 0, %v1662
    %v1664 = vrot.slane %v1626, %v1663
    %v1665 = vlaneseq
    %v1666 = vshrl.u32 %v1665, 7
    %v1667 = vsub.s32 0, %v1666
    %v1668 = vrot.slane %v1640, %v1667
    %v1669 = vlaneseq
    %v1670 = vshrl.u32 %v1669, 7
    %v1671 = vsub.s32 0, %v1670
    %v1672 = vrot.slane %v1642, %v1671
    %v1673 = vlaneseq
    %v1674 = vshrl.u32 %v1673, 7
    %v1675 = vsub.s32 0, %v1674
    %v1676 = vrot.slane %v1644, %v1675
    %1677 = vrot.lane.b32.xlu0 %v1648, 32
    %v1678 = vpop.permute.xlu0 %1677
    %1679 = vrot.lane.b32.xlu0 %v1652, 32
    %v1680 = vpop.permute.xlu0 %1679
    %1681 = vrot.lane.b32.xlu0 %v1656, 32
    %v1682 = vpop.permute.xlu0 %1681
    %1683 = vrot.lane.b32.xlu0 %v1660, 32
    %v1684 = vpop.permute.xlu0 %1683
    %1685 = vrot.lane.b32.xlu0 %v1664, 32
    %v1686 = vpop.permute.xlu0 %1685
    %1687 = vrot.lane.b32.xlu0 %v1668, 32
    %v1688 = vpop.permute.xlu0 %1687
    %1689 = vrot.lane.b32.xlu0 %v1672, 32
    %v1690 = vpop.permute.xlu0 %1689
    %1691 = vrot.lane.b32.xlu0 %v1676, 32
    %v1692 = vpop.permute.xlu0 %1691
    %1701 = vst.msk [vmem:[#allocation2 + $0x6] sm:$0x1] %vm357, %v1678
    %1702 = vst.msk [vmem:[#allocation2 + $0xe] sm:$0x1] %vm357, %v1680
    %1703 = vst.msk [vmem:[#allocation2 + $0x16] sm:$0x1] %vm357, %v1682
    %1704 = vst.msk [vmem:[#allocation2 + $0x1e] sm:$0x1] %vm357, %v1684
    %1705 = vst.msk [vmem:[#allocation2 + $0x26] sm:$0x1] %vm357, %v1686
    %1706 = vst.msk [vmem:[#allocation2 + $0x2e] sm:$0x1] %vm357, %v1688
    %1707 = vst.msk [vmem:[#allocation2 + $0x36] sm:$0x1] %vm357, %v1690
    %1708 = vst.msk [vmem:[#allocation2 + $0x3e] sm:$0x1] %vm357, %v1692
    %v1709 = vld [vmem:[%s0 + $0x38] sm:$0xff]
    %1711 = vrot.lane.b32.xlu0 %v1592, 32
    %v1712 = vpop.permute.xlu0 %1711
    %v1713 = vsel %vm144, %v1712, 0
    %1715 = vmatprep.subr.mxu0 0.0
    %1716 = vmatpush1.msra.mxu0 0.0
    %1717 = vmatprep.subr.mxu0 0.0
    %1718 = vmatpush1.msra.mxu0 0.0
    %1719 = vmatprep.subr.mxu0 0.0
    %1720 = vmatpush1.msra.mxu0 0.0
    %1721 = vmatprep.subr.mxu0 0.0
    %1722 = vmatpush1.msra.mxu0 0.0
    %1723 = vmatprep.subr.mxu0 0.0
    %1724 = vmatpush1.msra.mxu0 0.0
    %1725 = vmatprep.subr.mxu0 0.0
    %1726 = vmatpush1.msra.mxu0 0.0
    %1727 = vmatprep.subr.mxu0 0.0
    %1728 = vmatpush1.msra.mxu0 0.0
    %1729 = vmatprep.subr.mxu0 0.0
    %1730 = vmatpush1.msra.mxu0 0.0
    %1731 = vmatprep.subr.mxu0 0.0
    %1732 = vmatpush1.msra.mxu0 0.0
    %1733 = vmatprep.subr.mxu0 0.0
    %1734 = vmatpush1.msra.mxu0 0.0
    %1735 = vmatprep.subr.mxu0 0.0
    %1736 = vmatpush1.msra.mxu0 0.0
    %1737 = vmatprep.subr.mxu0 0.0
    %1738 = vmatpush1.msra.mxu0 0.0
    %1739 = vmatprep.subr.mxu0 0.0
    %1740 = vmatpush1.msra.mxu0 %v138
    %1741 = vmatprep.subr.mxu0 0.0
    %1742 = vmatpush1.msra.mxu0 %v137
    %1743 = vmatprep.subr.mxu0 0.0
    %1744 = vmatpush1.msra.mxu0 %v136
    %1745 = vmatprep.subr.mxu0 0.0
    %1746 = vmatpush1.msra.mxu0 %v135
    %1747 = vmatprep.subr.mxu0 0.0
    %1748 = vmatpush2.msra.mxu0 0.0
    %1749 = vmatprep.subr.mxu0 0.0
    %1750 = vmatpush2.msra.mxu0 0.0
    %1751 = vmatprep.subr.mxu0 0.0
    %1752 = vmatpush2.msra.mxu0 0.0
    %1753 = vmatprep.subr.mxu0 0.0
    %1754 = vmatpush2.msra.mxu0 0.0
    %1755 = vmatprep.subr.mxu0 0.0
    %1756 = vmatpush2.msra.mxu0 0.0
    %1757 = vmatprep.subr.mxu0 0.0
    %1758 = vmatpush2.msra.mxu0 0.0
    %1759 = vmatprep.subr.mxu0 0.0
    %1760 = vmatpush2.msra.mxu0 0.0
    %1761 = vmatprep.subr.mxu0 0.0
    %1762 = vmatpush2.msra.mxu0 0.0
    %1763 = vmatprep.subr.mxu0 0.0
    %1764 = vmatpush2.msra.mxu0 0.0
    %1765 = vmatprep.subr.mxu0 0.0
    %1766 = vmatpush2.msra.mxu0 0.0
    %1767 = vmatprep.subr.mxu0 0.0
    %1768 = vmatpush2.msra.mxu0 0.0
    %1769 = vmatprep.subr.mxu0 0.0
    %1770 = vmatpush2.msra.mxu0 0.0
    %1771 = vmatprep.subr.mxu0 0.0
    %1772 = vmatpush2.msra.mxu0 0.0
    %1773 = vmatprep.subr.mxu0 0.0
    %1774 = vmatpush2.msra.mxu0 0.0
    %1775 = vmatprep.subr.mxu0 0.0
    %1776 = vmatpush2.msra.mxu0 0.0
    %1777 = vmatprep.subr.mxu0 0.0
    %1778 = vmatpush2.msra.mxu0 0.0
    %1779 = vmatprep.mubr.f32.mxu0 0.0
    %1780 = vmatmul.mubr.f32.gmra.mxu0 %v1713
    %v1781 = vpop.f32.mrf.mxu0
    %v1782 = vadd.f32 0.0, %v1781
    %v1783 = vpop.f32.mrf.mxu0
    %1784 = vdwg.mxu0
    %v1785 = vadd.f32 %v1709, %v1782
    %v1786 = vxor.u32 %v1785, 2147483648
    %v1787 = vmul.f32 %v1786, 1.442695
    %v1788 = vpow.pop %v1787
    %v1789 = vadd.f32 %v1788, 1.0
    %v1790 = vrcp.pop %v1789
    %v1791 = vmul.f32 1.0, %v1790
    %v1792 = vtanh.pop %v1785
    %v1793 = vmul.f32 %v1791, %v1593
    %1795 = vrot.lane.b32.xlu0 %v1792, 64
    %v1796 = vpop.permute.xlu0 %1795
    %v1798 = vmul.f32 %v1791, %v1796
    %1800 = vrot.lane.b32.xlu0 %v1798, 32
    %v1801 = vpop.permute.xlu0 %1800
    %v1803 = vadd.f32 %v1793, %v1801
    %v1804 = vtanh.pop %v1803
    %1806 = vrot.lane.b32.xlu0 %v1804, 64
    %v1807 = vpop.permute.xlu0 %1806
    %v1809 = vmul.f32 %v1791, %v1807
    %vm1810 = vcmp.gt.s32.totalorder %v134, 7
    %v1811 = vsel %vm1810, 1, 0
    %1812 = vset.pattern.permute.xlu0 0
    %1813 = vperm.xlu0 %1812, %v1811
    %v1814 = vpop.permute.xlu0 %1813
    %vm1815 = vcmp.eq.s32.totalorder %v1814, 1
    %v1816 = vsel %vm1815, %v1809, %v1592
    %v1817 = vsel %vm1815, %v1803, %v1593
    %v1818 = vsel %vm1815, %v1809, 0.0
    %v1820 = vcombine.high %v1818, %v1818
    %v1822 = vunpack.c.l.s4 1966171168
    %v1823 = vunpack.c.0.s8 %v1822
    %v1824 = vlaneseq
    %v1825 = vshrl.u32 %v1824, 7
    %v1826 = vsub.s32 %v1823, %v1825
    %v1827 = vrot.slane %v1818, %v1826
    %v1829 = vunpack.c.l.s4 1966171168
    %v1830 = vunpack.c.0.s8 %v1829
    %v1831 = vlaneseq
    %v1832 = vshrl.u32 %v1831, 7
    %v1833 = vsub.s32 %v1830, %v1832
    %v1834 = vrot.slane %v1820, %v1833
    %v1835 = vcombine.high %v1827, %v1827
    %v1836 = vcombine.high %v1834, %v1834
    %v1838 = vunpack.c.l.s4 1966171168
    %v1839 = vunpack.c.0.s8 %v1838
    %v1840 = vlaneseq
    %v1841 = vshrl.u32 %v1840, 7
    %v1842 = vsub.s32 %v1839, %v1841
    %v1843 = vrot.slane %v1827, %v1842
    %v1845 = vunpack.c.l.s4 1966171168
    %v1846 = vunpack.c.0.s8 %v1845
    %v1847 = vlaneseq
    %v1848 = vshrl.u32 %v1847, 7
    %v1849 = vsub.s32 %v1846, %v1848
    %v1850 = vrot.slane %v1834, %v1849
    %v1852 = vunpack.c.l.s4 1966171168
    %v1853 = vunpack.c.0.s8 %v1852
    %v1854 = vlaneseq
    %v1855 = vshrl.u32 %v1854, 7
    %v1856 = vsub.s32 %v1853, %v1855
    %v1857 = vrot.slane %v1835, %v1856
    %v1859 = vunpack.c.l.s4 1966171168
    %v1860 = vunpack.c.0.s8 %v1859
    %v1861 = vlaneseq
    %v1862 = vshrl.u32 %v1861, 7
    %v1863 = vsub.s32 %v1860, %v1862
    %v1864 = vrot.slane %v1836, %v1863
    %v1865 = vcombine.high %v1843, %v1843
    %v1866 = vcombine.high %v1850, %v1850
    %v1867 = vcombine.high %v1857, %v1857
    %v1868 = vcombine.high %v1864, %v1864
    %v1869 = vlaneseq
    %v1870 = vshrl.u32 %v1869, 7
    %v1871 = vsub.s32 0, %v1870
    %v1872 = vrot.slane %v1843, %v1871
    %v1873 = vlaneseq
    %v1874 = vshrl.u32 %v1873, 7
    %v1875 = vsub.s32 0, %v1874
    %v1876 = vrot.slane %v1857, %v1875
    %v1877 = vlaneseq
    %v1878 = vshrl.u32 %v1877, 7
    %v1879 = vsub.s32 0, %v1878
    %v1880 = vrot.slane %v1865, %v1879
    %v1881 = vlaneseq
    %v1882 = vshrl.u32 %v1881, 7
    %v1883 = vsub.s32 0, %v1882
    %v1884 = vrot.slane %v1867, %v1883
    %v1885 = vlaneseq
    %v1886 = vshrl.u32 %v1885, 7
    %v1887 = vsub.s32 0, %v1886
    %v1888 = vrot.slane %v1850, %v1887
    %v1889 = vlaneseq
    %v1890 = vshrl.u32 %v1889, 7
    %v1891 = vsub.s32 0, %v1890
    %v1892 = vrot.slane %v1864, %v1891
    %v1893 = vlaneseq
    %v1894 = vshrl.u32 %v1893, 7
    %v1895 = vsub.s32 0, %v1894
    %v1896 = vrot.slane %v1866, %v1895
    %v1897 = vlaneseq
    %v1898 = vshrl.u32 %v1897, 7
    %v1899 = vsub.s32 0, %v1898
    %v1900 = vrot.slane %v1868, %v1899
    %1901 = vrot.lane.b32.xlu0 %v1872, 32
    %v1902 = vpop.permute.xlu0 %1901
    %1903 = vrot.lane.b32.xlu0 %v1876, 32
    %v1904 = vpop.permute.xlu0 %1903
    %1905 = vrot.lane.b32.xlu0 %v1880, 32
    %v1906 = vpop.permute.xlu0 %1905
    %1907 = vrot.lane.b32.xlu0 %v1884, 32
    %v1908 = vpop.permute.xlu0 %1907
    %1909 = vrot.lane.b32.xlu0 %v1888, 32
    %v1910 = vpop.permute.xlu0 %1909
    %1911 = vrot.lane.b32.xlu0 %v1892, 32
    %v1912 = vpop.permute.xlu0 %1911
    %1913 = vrot.lane.b32.xlu0 %v1896, 32
    %v1914 = vpop.permute.xlu0 %1913
    %1915 = vrot.lane.b32.xlu0 %v1900, 32
    %v1916 = vpop.permute.xlu0 %1915
    %1925 = vst.msk [vmem:[#allocation2 + $0x7] sm:$0x1] %vm357, %v1902
    %1926 = vst.msk [vmem:[#allocation2 + $0xf] sm:$0x1] %vm357, %v1904
    %1927 = vst.msk [vmem:[#allocation2 + $0x17] sm:$0x1] %vm357, %v1906
    %1928 = vst.msk [vmem:[#allocation2 + $0x1f] sm:$0x1] %vm357, %v1908
    %1929 = vst.msk [vmem:[#allocation2 + $0x27] sm:$0x1] %vm357, %v1910
    %1930 = vst.msk [vmem:[#allocation2 + $0x2f] sm:$0x1] %vm357, %v1912
    %1931 = vst.msk [vmem:[#allocation2 + $0x37] sm:$0x1] %vm357, %v1914
    %1932 = vst.msk [vmem:[#allocation2 + $0x3f] sm:$0x1] %vm357, %v1916
    %v1933 = vld [vmem:[#allocation4] sm:$0xff]
    %1935 = vrot.lane.b32.xlu0 %v1816, 32
    %v1936 = vpop.permute.xlu0 %1935
    %v1937 = vsel %vm144, %v1936, 0
    %1939 = vmatprep.subr.mxu0 0.0
    %1940 = vmatpush1.msra.mxu0 0.0
    %1941 = vmatprep.subr.mxu0 0.0
    %1942 = vmatpush1.msra.mxu0 0.0
    %1943 = vmatprep.subr.mxu0 0.0
    %1944 = vmatpush1.msra.mxu0 0.0
    %1945 = vmatprep.subr.mxu0 0.0
    %1946 = vmatpush1.msra.mxu0 0.0
    %1947 = vmatprep.subr.mxu0 0.0
    %1948 = vmatpush1.msra.mxu0 0.0
    %1949 = vmatprep.subr.mxu0 0.0
    %1950 = vmatpush1.msra.mxu0 0.0
    %1951 = vmatprep.subr.mxu0 0.0
    %1952 = vmatpush1.msra.mxu0 0.0
    %1953 = vmatprep.subr.mxu0 0.0
    %1954 = vmatpush1.msra.mxu0 0.0
    %1955 = vmatprep.subr.mxu0 0.0
    %1956 = vmatpush1.msra.mxu0 0.0
    %1957 = vmatprep.subr.mxu0 0.0
    %1958 = vmatpush1.msra.mxu0 0.0
    %1959 = vmatprep.subr.mxu0 0.0
    %1960 = vmatpush1.msra.mxu0 0.0
    %1961 = vmatprep.subr.mxu0 0.0
    %1962 = vmatpush1.msra.mxu0 0.0
    %1963 = vmatprep.subr.mxu0 0.0
    %1964 = vmatpush1.msra.mxu0 %v142
    %1965 = vmatprep.subr.mxu0 0.0
    %1966 = vmatpush1.msra.mxu0 %v141
    %1967 = vmatprep.subr.mxu0 0.0
    %1968 = vmatpush1.msra.mxu0 %v140
    %1969 = vmatprep.subr.mxu0 0.0
    %1970 = vmatpush1.msra.mxu0 %v139
    %1971 = vmatprep.subr.mxu0 0.0
    %1972 = vmatpush2.msra.mxu0 0.0
    %1973 = vmatprep.subr.mxu0 0.0
    %1974 = vmatpush2.msra.mxu0 0.0
    %1975 = vmatprep.subr.mxu0 0.0
    %1976 = vmatpush2.msra.mxu0 0.0
    %1977 = vmatprep.subr.mxu0 0.0
    %1978 = vmatpush2.msra.mxu0 0.0
    %1979 = vmatprep.subr.mxu0 0.0
    %1980 = vmatpush2.msra.mxu0 0.0
    %1981 = vmatprep.subr.mxu0 0.0
    %1982 = vmatpush2.msra.mxu0 0.0
    %1983 = vmatprep.subr.mxu0 0.0
    %1984 = vmatpush2.msra.mxu0 0.0
    %1985 = vmatprep.subr.mxu0 0.0
    %1986 = vmatpush2.msra.mxu0 0.0
    %1987 = vmatprep.subr.mxu0 0.0
    %1988 = vmatpush2.msra.mxu0 0.0
    %1989 = vmatprep.subr.mxu0 0.0
    %1990 = vmatpush2.msra.mxu0 0.0
    %1991 = vmatprep.subr.mxu0 0.0
    %1992 = vmatpush2.msra.mxu0 0.0
    %1993 = vmatprep.subr.mxu0 0.0
    %1994 = vmatpush2.msra.mxu0 0.0
    %1995 = vmatprep.subr.mxu0 0.0
    %1996 = vmatpush2.msra.mxu0 0.0
    %1997 = vmatprep.subr.mxu0 0.0
    %1998 = vmatpush2.msra.mxu0 0.0
    %1999 = vmatprep.subr.mxu0 0.0
    %2000 = vmatpush2.msra.mxu0 0.0
    %2001 = vmatprep.subr.mxu0 0.0
    %2002 = vmatpush2.msra.mxu0 0.0
    %2003 = vmatprep.mubr.f32.mxu0 0.0
    %2004 = vmatmul.mubr.f32.gmra.mxu0 %v1937
    %v2005 = vpop.f32.mrf.mxu0
    %v2006 = vadd.f32 0.0, %v2005
    %v2007 = vpop.f32.mrf.mxu0
    %2008 = vdwg.mxu0
    %v2009 = vadd.f32 %v1933, %v2006
    %v2010 = vxor.u32 %v2009, 2147483648
    %v2011 = vmul.f32 %v2010, 1.442695
    %v2012 = vpow.pop %v2011
    %v2013 = vadd.f32 %v2012, 1.0
    %v2014 = vrcp.pop %v2013
    %v2015 = vmul.f32 1.0, %v2014
    %v2016 = vtanh.pop %v2009
    %v2017 = vmul.f32 %v2015, %v1817
    %2019 = vrot.lane.b32.xlu0 %v2016, 64
    %v2020 = vpop.permute.xlu0 %2019
    %v2022 = vmul.f32 %v2015, %v2020
    %2024 = vrot.lane.b32.xlu0 %v2022, 32
    %v2025 = vpop.permute.xlu0 %2024
    %v2027 = vadd.f32 %v2017, %v2025
    %v2028 = vtanh.pop %v2027
    %2030 = vrot.lane.b32.xlu0 %v2028, 64
    %v2031 = vpop.permute.xlu0 %2030
    %v2033 = vmul.f32 %v2015, %v2031
    %v2035 = vcombine.high %v2033, %v2033
    %v2037 = vunpack.c.l.s4 1966171168
    %v2038 = vunpack.c.0.s8 %v2037
    %v2039 = vlaneseq
    %v2040 = vshrl.u32 %v2039, 7
    %v2041 = vsub.s32 %v2038, %v2040
    %v2042 = vrot.slane %v2033, %v2041
    %v2044 = vunpack.c.l.s4 1966171168
    %v2045 = vunpack.c.0.s8 %v2044
    %v2046 = vlaneseq
    %v2047 = vshrl.u32 %v2046, 7
    %v2048 = vsub.s32 %v2045, %v2047
    %v2049 = vrot.slane %v2035, %v2048
    %v2050 = vcombine.high %v2042, %v2042
    %v2051 = vcombine.high %v2049, %v2049
    %v2053 = vunpack.c.l.s4 1966171168
    %v2054 = vunpack.c.0.s8 %v2053
    %v2055 = vlaneseq
    %v2056 = vshrl.u32 %v2055, 7
    %v2057 = vsub.s32 %v2054, %v2056
    %v2058 = vrot.slane %v2042, %v2057
    %v2060 = vunpack.c.l.s4 1966171168
    %v2061 = vunpack.c.0.s8 %v2060
    %v2062 = vlaneseq
    %v2063 = vshrl.u32 %v2062, 7
    %v2064 = vsub.s32 %v2061, %v2063
    %v2065 = vrot.slane %v2049, %v2064
    %v2067 = vunpack.c.l.s4 1966171168
    %v2068 = vunpack.c.0.s8 %v2067
    %v2069 = vlaneseq
    %v2070 = vshrl.u32 %v2069, 7
    %v2071 = vsub.s32 %v2068, %v2070
    %v2072 = vrot.slane %v2050, %v2071
    %v2074 = vunpack.c.l.s4 1966171168
    %v2075 = vunpack.c.0.s8 %v2074
    %v2076 = vlaneseq
    %v2077 = vshrl.u32 %v2076, 7
    %v2078 = vsub.s32 %v2075, %v2077
    %v2079 = vrot.slane %v2051, %v2078
    %v2080 = vcombine.high %v2058, %v2058
    %v2081 = vcombine.high %v2065, %v2065
    %v2082 = vcombine.high %v2072, %v2072
    %v2083 = vcombine.high %v2079, %v2079
    %v2084 = vlaneseq
    %v2085 = vshrl.u32 %v2084, 7
    %v2086 = vsub.s32 0, %v2085
    %v2087 = vrot.slane %v2058, %v2086
    %v2088 = vlaneseq
    %v2089 = vshrl.u32 %v2088, 7
    %v2090 = vsub.s32 0, %v2089
    %v2091 = vrot.slane %v2072, %v2090
    %v2092 = vlaneseq
    %v2093 = vshrl.u32 %v2092, 7
    %v2094 = vsub.s32 0, %v2093
    %v2095 = vrot.slane %v2080, %v2094
    %v2096 = vlaneseq
    %v2097 = vshrl.u32 %v2096, 7
    %v2098 = vsub.s32 0, %v2097
    %v2099 = vrot.slane %v2082, %v2098
    %v2100 = vlaneseq
    %v2101 = vshrl.u32 %v2100, 7
    %v2102 = vsub.s32 0, %v2101
    %v2103 = vrot.slane %v2065, %v2102
    %v2104 = vlaneseq
    %v2105 = vshrl.u32 %v2104, 7
    %v2106 = vsub.s32 0, %v2105
    %v2107 = vrot.slane %v2079, %v2106
    %v2108 = vlaneseq
    %v2109 = vshrl.u32 %v2108, 7
    %v2110 = vsub.s32 0, %v2109
    %v2111 = vrot.slane %v2081, %v2110
    %v2112 = vlaneseq
    %v2113 = vshrl.u32 %v2112, 7
    %v2114 = vsub.s32 0, %v2113
    %v2115 = vrot.slane %v2083, %v2114
    %2116 = vrot.lane.b32.xlu0 %v2087, 32
    %v2117 = vpop.permute.xlu0 %2116
    %2118 = vrot.lane.b32.xlu0 %v2091, 32
    %v2119 = vpop.permute.xlu0 %2118
    %2120 = vrot.lane.b32.xlu0 %v2095, 32
    %v2121 = vpop.permute.xlu0 %2120
    %2122 = vrot.lane.b32.xlu0 %v2099, 32
    %v2123 = vpop.permute.xlu0 %2122
    %2124 = vrot.lane.b32.xlu0 %v2103, 32
    %v2125 = vpop.permute.xlu0 %2124
    %2126 = vrot.lane.b32.xlu0 %v2107, 32
    %v2127 = vpop.permute.xlu0 %2126
    %2128 = vrot.lane.b32.xlu0 %v2111, 32
    %v2129 = vpop.permute.xlu0 %2128
    %2130 = vrot.lane.b32.xlu0 %v2115, 32
    %v2131 = vpop.permute.xlu0 %2130
    %2140 = vst.msk [vmem:[#allocation3] sm:$0x1] %vm357, %v2117
    %2141 = vst.msk [vmem:[#allocation3 + $0x8] sm:$0x1] %vm357, %v2119
    %2142 = vst.msk [vmem:[#allocation3 + $0x10] sm:$0x1] %vm357, %v2121
    %2143 = vst.msk [vmem:[#allocation3 + $0x18] sm:$0x1] %vm357, %v2123
    %2144 = vst.msk [vmem:[#allocation3 + $0x20] sm:$0x1] %vm357, %v2125
    %2145 = vst.msk [vmem:[#allocation3 + $0x28] sm:$0x1] %vm357, %v2127
    %2146 = vst.msk [vmem:[#allocation3 + $0x30] sm:$0x1] %vm357, %v2129
    %2147 = vst.msk [vmem:[#allocation3 + $0x38] sm:$0x1] %vm357, %v2131
    %v2148 = vld [vmem:[#allocation4 + $0x8] sm:$0xff]
    %2149 = vrot.lane.b32.xlu0 %v2033, 32
    %v2150 = vpop.permute.xlu0 %2149
    %v2151 = vsel %vm144, %v2150, 0
    %2153 = vmatprep.subr.mxu0 0.0
    %2154 = vmatpush1.msra.mxu0 0.0
    %2155 = vmatprep.subr.mxu0 0.0
    %2156 = vmatpush1.msra.mxu0 0.0
    %2157 = vmatprep.subr.mxu0 0.0
    %2158 = vmatpush1.msra.mxu0 0.0
    %2159 = vmatprep.subr.mxu0 0.0
    %2160 = vmatpush1.msra.mxu0 0.0
    %2161 = vmatprep.subr.mxu0 0.0
    %2162 = vmatpush1.msra.mxu0 0.0
    %2163 = vmatprep.subr.mxu0 0.0
    %2164 = vmatpush1.msra.mxu0 0.0
    %2165 = vmatprep.subr.mxu0 0.0
    %2166 = vmatpush1.msra.mxu0 0.0
    %2167 = vmatprep.subr.mxu0 0.0
    %2168 = vmatpush1.msra.mxu0 0.0
    %2169 = vmatprep.subr.mxu0 0.0
    %2170 = vmatpush1.msra.mxu0 0.0
    %2171 = vmatprep.subr.mxu0 0.0
    %2172 = vmatpush1.msra.mxu0 0.0
    %2173 = vmatprep.subr.mxu0 0.0
    %2174 = vmatpush1.msra.mxu0 0.0
    %2175 = vmatprep.subr.mxu0 0.0
    %2176 = vmatpush1.msra.mxu0 0.0
    %2177 = vmatprep.subr.mxu0 0.0
    %2178 = vmatpush1.msra.mxu0 %v142
    %2179 = vmatprep.subr.mxu0 0.0
    %2180 = vmatpush1.msra.mxu0 %v141
    %2181 = vmatprep.subr.mxu0 0.0
    %2182 = vmatpush1.msra.mxu0 %v140
    %2183 = vmatprep.subr.mxu0 0.0
    %2184 = vmatpush1.msra.mxu0 %v139
    %2185 = vmatprep.subr.mxu0 0.0
    %2186 = vmatpush2.msra.mxu0 0.0
    %2187 = vmatprep.subr.mxu0 0.0
    %2188 = vmatpush2.msra.mxu0 0.0
    %2189 = vmatprep.subr.mxu0 0.0
    %2190 = vmatpush2.msra.mxu0 0.0
    %2191 = vmatprep.subr.mxu0 0.0
    %2192 = vmatpush2.msra.mxu0 0.0
    %2193 = vmatprep.subr.mxu0 0.0
    %2194 = vmatpush2.msra.mxu0 0.0
    %2195 = vmatprep.subr.mxu0 0.0
    %2196 = vmatpush2.msra.mxu0 0.0
    %2197 = vmatprep.subr.mxu0 0.0
    %2198 = vmatpush2.msra.mxu0 0.0
    %2199 = vmatprep.subr.mxu0 0.0
    %2200 = vmatpush2.msra.mxu0 0.0
    %2201 = vmatprep.subr.mxu0 0.0
    %2202 = vmatpush2.msra.mxu0 0.0
    %2203 = vmatprep.subr.mxu0 0.0
    %2204 = vmatpush2.msra.mxu0 0.0
    %2205 = vmatprep.subr.mxu0 0.0
    %2206 = vmatpush2.msra.mxu0 0.0
    %2207 = vmatprep.subr.mxu0 0.0
    %2208 = vmatpush2.msra.mxu0 0.0
    %2209 = vmatprep.subr.mxu0 0.0
    %2210 = vmatpush2.msra.mxu0 0.0
    %2211 = vmatprep.subr.mxu0 0.0
    %2212 = vmatpush2.msra.mxu0 0.0
    %2213 = vmatprep.subr.mxu0 0.0
    %2214 = vmatpush2.msra.mxu0 0.0
    %2215 = vmatprep.subr.mxu0 0.0
    %2216 = vmatpush2.msra.mxu0 0.0
    %2217 = vmatprep.mubr.f32.mxu0 0.0
    %2218 = vmatmul.mubr.f32.gmra.mxu0 %v2151
    %v2219 = vpop.f32.mrf.mxu0
    %v2220 = vadd.f32 0.0, %v2219
    %v2221 = vpop.f32.mrf.mxu0
    %2222 = vdwg.mxu0
    %v2223 = vadd.f32 %v2148, %v2220
    %v2224 = vxor.u32 %v2223, 2147483648
    %v2225 = vmul.f32 %v2224, 1.442695
    %v2226 = vpow.pop %v2225
    %v2227 = vadd.f32 %v2226, 1.0
    %v2228 = vrcp.pop %v2227
    %v2229 = vmul.f32 1.0, %v2228
    %v2230 = vtanh.pop %v2223
    %v2231 = vmul.f32 %v2229, %v2027
    %2233 = vrot.lane.b32.xlu0 %v2230, 64
    %v2234 = vpop.permute.xlu0 %2233
    %v2236 = vmul.f32 %v2229, %v2234
    %2238 = vrot.lane.b32.xlu0 %v2236, 32
    %v2239 = vpop.permute.xlu0 %2238
    %v2241 = vadd.f32 %v2231, %v2239
    %v2242 = vtanh.pop %v2241
    %2244 = vrot.lane.b32.xlu0 %v2242, 64
    %v2245 = vpop.permute.xlu0 %2244
    %v2247 = vmul.f32 %v2229, %v2245
    %v2249 = vcombine.high %v2247, %v2247
    %v2251 = vunpack.c.l.s4 1966171168
    %v2252 = vunpack.c.0.s8 %v2251
    %v2253 = vlaneseq
    %v2254 = vshrl.u32 %v2253, 7
    %v2255 = vsub.s32 %v2252, %v2254
    %v2256 = vrot.slane %v2247, %v2255
    %v2258 = vunpack.c.l.s4 1966171168
    %v2259 = vunpack.c.0.s8 %v2258
    %v2260 = vlaneseq
    %v2261 = vshrl.u32 %v2260, 7
    %v2262 = vsub.s32 %v2259, %v2261
    %v2263 = vrot.slane %v2249, %v2262
    %v2264 = vcombine.high %v2256, %v2256
    %v2265 = vcombine.high %v2263, %v2263
    %v2267 = vunpack.c.l.s4 1966171168
    %v2268 = vunpack.c.0.s8 %v2267
    %v2269 = vlaneseq
    %v2270 = vshrl.u32 %v2269, 7
    %v2271 = vsub.s32 %v2268, %v2270
    %v2272 = vrot.slane %v2256, %v2271
    %v2274 = vunpack.c.l.s4 1966171168
    %v2275 = vunpack.c.0.s8 %v2274
    %v2276 = vlaneseq
    %v2277 = vshrl.u32 %v2276, 7
    %v2278 = vsub.s32 %v2275, %v2277
    %v2279 = vrot.slane %v2263, %v2278
    %v2281 = vunpack.c.l.s4 1966171168
    %v2282 = vunpack.c.0.s8 %v2281
    %v2283 = vlaneseq
    %v2284 = vshrl.u32 %v2283, 7
    %v2285 = vsub.s32 %v2282, %v2284
    %v2286 = vrot.slane %v2264, %v2285
    %v2288 = vunpack.c.l.s4 1966171168
    %v2289 = vunpack.c.0.s8 %v2288
    %v2290 = vlaneseq
    %v2291 = vshrl.u32 %v2290, 7
    %v2292 = vsub.s32 %v2289, %v2291
    %v2293 = vrot.slane %v2265, %v2292
    %v2294 = vcombine.high %v2272, %v2272
    %v2295 = vcombine.high %v2279, %v2279
    %v2296 = vcombine.high %v2286, %v2286
    %v2297 = vcombine.high %v2293, %v2293
    %v2298 = vlaneseq
    %v2299 = vshrl.u32 %v2298, 7
    %v2300 = vsub.s32 0, %v2299
    %v2301 = vrot.slane %v2272, %v2300
    %v2302 = vlaneseq
    %v2303 = vshrl.u32 %v2302, 7
    %v2304 = vsub.s32 0, %v2303
    %v2305 = vrot.slane %v2286, %v2304
    %v2306 = vlaneseq
    %v2307 = vshrl.u32 %v2306, 7
    %v2308 = vsub.s32 0, %v2307
    %v2309 = vrot.slane %v2294, %v2308
    %v2310 = vlaneseq
    %v2311 = vshrl.u32 %v2310, 7
    %v2312 = vsub.s32 0, %v2311
    %v2313 = vrot.slane %v2296, %v2312
    %v2314 = vlaneseq
    %v2315 = vshrl.u32 %v2314, 7
    %v2316 = vsub.s32 0, %v2315
    %v2317 = vrot.slane %v2279, %v2316
    %v2318 = vlaneseq
    %v2319 = vshrl.u32 %v2318, 7
    %v2320 = vsub.s32 0, %v2319
    %v2321 = vrot.slane %v2293, %v2320
    %v2322 = vlaneseq
    %v2323 = vshrl.u32 %v2322, 7
    %v2324 = vsub.s32 0, %v2323
    %v2325 = vrot.slane %v2295, %v2324
    %v2326 = vlaneseq
    %v2327 = vshrl.u32 %v2326, 7
    %v2328 = vsub.s32 0, %v2327
    %v2329 = vrot.slane %v2297, %v2328
    %2330 = vrot.lane.b32.xlu0 %v2301, 32
    %v2331 = vpop.permute.xlu0 %2330
    %2332 = vrot.lane.b32.xlu0 %v2305, 32
    %v2333 = vpop.permute.xlu0 %2332
    %2334 = vrot.lane.b32.xlu0 %v2309, 32
    %v2335 = vpop.permute.xlu0 %2334
    %2336 = vrot.lane.b32.xlu0 %v2313, 32
    %v2337 = vpop.permute.xlu0 %2336
    %2338 = vrot.lane.b32.xlu0 %v2317, 32
    %v2339 = vpop.permute.xlu0 %2338
    %2340 = vrot.lane.b32.xlu0 %v2321, 32
    %v2341 = vpop.permute.xlu0 %2340
    %2342 = vrot.lane.b32.xlu0 %v2325, 32
    %v2343 = vpop.permute.xlu0 %2342
    %2344 = vrot.lane.b32.xlu0 %v2329, 32
    %v2345 = vpop.permute.xlu0 %2344
    %2354 = vst.msk [vmem:[#allocation3 + $0x1] sm:$0x1] %vm357, %v2331
    %2355 = vst.msk [vmem:[#allocation3 + $0x9] sm:$0x1] %vm357, %v2333
    %2356 = vst.msk [vmem:[#allocation3 + $0x11] sm:$0x1] %vm357, %v2335
    %2357 = vst.msk [vmem:[#allocation3 + $0x19] sm:$0x1] %vm357, %v2337
    %2358 = vst.msk [vmem:[#allocation3 + $0x21] sm:$0x1] %vm357, %v2339
    %2359 = vst.msk [vmem:[#allocation3 + $0x29] sm:$0x1] %vm357, %v2341
    %2360 = vst.msk [vmem:[#allocation3 + $0x31] sm:$0x1] %vm357, %v2343
    %2361 = vst.msk [vmem:[#allocation3 + $0x39] sm:$0x1] %vm357, %v2345
    %v2362 = vld [vmem:[#allocation4 + $0x10] sm:$0xff]
    %2363 = vrot.lane.b32.xlu0 %v2247, 32
    %v2364 = vpop.permute.xlu0 %2363
    %v2365 = vsel %vm144, %v2364, 0
    %2367 = vmatprep.subr.mxu0 0.0
    %2368 = vmatpush1.msra.mxu0 0.0
    %2369 = vmatprep.subr.mxu0 0.0
    %2370 = vmatpush1.msra.mxu0 0.0
    %2371 = vmatprep.subr.mxu0 0.0
    %2372 = vmatpush1.msra.mxu0 0.0
    %2373 = vmatprep.subr.mxu0 0.0
    %2374 = vmatpush1.msra.mxu0 0.0
    %2375 = vmatprep.subr.mxu0 0.0
    %2376 = vmatpush1.msra.mxu0 0.0
    %2377 = vmatprep.subr.mxu0 0.0
    %2378 = vmatpush1.msra.mxu0 0.0
    %2379 = vmatprep.subr.mxu0 0.0
    %2380 = vmatpush1.msra.mxu0 0.0
    %2381 = vmatprep.subr.mxu0 0.0
    %2382 = vmatpush1.msra.mxu0 0.0
    %2383 = vmatprep.subr.mxu0 0.0
    %2384 = vmatpush1.msra.mxu0 0.0
    %2385 = vmatprep.subr.mxu0 0.0
    %2386 = vmatpush1.msra.mxu0 0.0
    %2387 = vmatprep.subr.mxu0 0.0
    %2388 = vmatpush1.msra.mxu0 0.0
    %2389 = vmatprep.subr.mxu0 0.0
    %2390 = vmatpush1.msra.mxu0 0.0
    %2391 = vmatprep.subr.mxu0 0.0
    %2392 = vmatpush1.msra.mxu0 %v142
    %2393 = vmatprep.subr.mxu0 0.0
    %2394 = vmatpush1.msra.mxu0 %v141
    %2395 = vmatprep.subr.mxu0 0.0
    %2396 = vmatpush1.msra.mxu0 %v140
    %2397 = vmatprep.subr.mxu0 0.0
    %2398 = vmatpush1.msra.mxu0 %v139
    %2399 = vmatprep.subr.mxu0 0.0
    %2400 = vmatpush2.msra.mxu0 0.0
    %2401 = vmatprep.subr.mxu0 0.0
    %2402 = vmatpush2.msra.mxu0 0.0
    %2403 = vmatprep.subr.mxu0 0.0
    %2404 = vmatpush2.msra.mxu0 0.0
    %2405 = vmatprep.subr.mxu0 0.0
    %2406 = vmatpush2.msra.mxu0 0.0
    %2407 = vmatprep.subr.mxu0 0.0
    %2408 = vmatpush2.msra.mxu0 0.0
    %2409 = vmatprep.subr.mxu0 0.0
    %2410 = vmatpush2.msra.mxu0 0.0
    %2411 = vmatprep.subr.mxu0 0.0
    %2412 = vmatpush2.msra.mxu0 0.0
    %2413 = vmatprep.subr.mxu0 0.0
    %2414 = vmatpush2.msra.mxu0 0.0
    %2415 = vmatprep.subr.mxu0 0.0
    %2416 = vmatpush2.msra.mxu0 0.0
    %2417 = vmatprep.subr.mxu0 0.0
    %2418 = vmatpush2.msra.mxu0 0.0
    %2419 = vmatprep.subr.mxu0 0.0
    %2420 = vmatpush2.msra.mxu0 0.0
    %2421 = vmatprep.subr.mxu0 0.0
    %2422 = vmatpush2.msra.mxu0 0.0
    %2423 = vmatprep.subr.mxu0 0.0
    %2424 = vmatpush2.msra.mxu0 0.0
    %2425 = vmatprep.subr.mxu0 0.0
    %2426 = vmatpush2.msra.mxu0 0.0
    %2427 = vmatprep.subr.mxu0 0.0
    %2428 = vmatpush2.msra.mxu0 0.0
    %2429 = vmatprep.subr.mxu0 0.0
    %2430 = vmatpush2.msra.mxu0 0.0
    %2431 = vmatprep.mubr.f32.mxu0 0.0
    %2432 = vmatmul.mubr.f32.gmra.mxu0 %v2365
    %v2433 = vpop.f32.mrf.mxu0
    %v2434 = vadd.f32 0.0, %v2433
    %v2435 = vpop.f32.mrf.mxu0
    %2436 = vdwg.mxu0
    %v2437 = vadd.f32 %v2362, %v2434
    %v2438 = vxor.u32 %v2437, 2147483648
    %v2439 = vmul.f32 %v2438, 1.442695
    %v2440 = vpow.pop %v2439
    %v2441 = vadd.f32 %v2440, 1.0
    %v2442 = vrcp.pop %v2441
    %v2443 = vmul.f32 1.0, %v2442
    %v2444 = vtanh.pop %v2437
    %v2445 = vmul.f32 %v2443, %v2241
    %2447 = vrot.lane.b32.xlu0 %v2444, 64
    %v2448 = vpop.permute.xlu0 %2447
    %v2450 = vmul.f32 %v2443, %v2448
    %2452 = vrot.lane.b32.xlu0 %v2450, 32
    %v2453 = vpop.permute.xlu0 %2452
    %v2455 = vadd.f32 %v2445, %v2453
    %v2456 = vtanh.pop %v2455
    %2458 = vrot.lane.b32.xlu0 %v2456, 64
    %v2459 = vpop.permute.xlu0 %2458
    %v2461 = vmul.f32 %v2443, %v2459
    %v2463 = vcombine.high %v2461, %v2461
    %v2465 = vunpack.c.l.s4 1966171168
    %v2466 = vunpack.c.0.s8 %v2465
    %v2467 = vlaneseq
    %v2468 = vshrl.u32 %v2467, 7
    %v2469 = vsub.s32 %v2466, %v2468
    %v2470 = vrot.slane %v2461, %v2469
    %v2472 = vunpack.c.l.s4 1966171168
    %v2473 = vunpack.c.0.s8 %v2472
    %v2474 = vlaneseq
    %v2475 = vshrl.u32 %v2474, 7
    %v2476 = vsub.s32 %v2473, %v2475
    %v2477 = vrot.slane %v2463, %v2476
    %v2478 = vcombine.high %v2470, %v2470
    %v2479 = vcombine.high %v2477, %v2477
    %v2481 = vunpack.c.l.s4 1966171168
    %v2482 = vunpack.c.0.s8 %v2481
    %v2483 = vlaneseq
    %v2484 = vshrl.u32 %v2483, 7
    %v2485 = vsub.s32 %v2482, %v2484
    %v2486 = vrot.slane %v2470, %v2485
    %v2488 = vunpack.c.l.s4 1966171168
    %v2489 = vunpack.c.0.s8 %v2488
    %v2490 = vlaneseq
    %v2491 = vshrl.u32 %v2490, 7
    %v2492 = vsub.s32 %v2489, %v2491
    %v2493 = vrot.slane %v2477, %v2492
    %v2495 = vunpack.c.l.s4 1966171168
    %v2496 = vunpack.c.0.s8 %v2495
    %v2497 = vlaneseq
    %v2498 = vshrl.u32 %v2497, 7
    %v2499 = vsub.s32 %v2496, %v2498
    %v2500 = vrot.slane %v2478, %v2499
    %v2502 = vunpack.c.l.s4 1966171168
    %v2503 = vunpack.c.0.s8 %v2502
    %v2504 = vlaneseq
    %v2505 = vshrl.u32 %v2504, 7
    %v2506 = vsub.s32 %v2503, %v2505
    %v2507 = vrot.slane %v2479, %v2506
    %v2508 = vcombine.high %v2486, %v2486
    %v2509 = vcombine.high %v2493, %v2493
    %v2510 = vcombine.high %v2500, %v2500
    %v2511 = vcombine.high %v2507, %v2507
    %v2512 = vlaneseq
    %v2513 = vshrl.u32 %v2512, 7
    %v2514 = vsub.s32 0, %v2513
    %v2515 = vrot.slane %v2486, %v2514
    %v2516 = vlaneseq
    %v2517 = vshrl.u32 %v2516, 7
    %v2518 = vsub.s32 0, %v2517
    %v2519 = vrot.slane %v2500, %v2518
    %v2520 = vlaneseq
    %v2521 = vshrl.u32 %v2520, 7
    %v2522 = vsub.s32 0, %v2521
    %v2523 = vrot.slane %v2508, %v2522
    %v2524 = vlaneseq
    %v2525 = vshrl.u32 %v2524, 7
    %v2526 = vsub.s32 0, %v2525
    %v2527 = vrot.slane %v2510, %v2526
    %v2528 = vlaneseq
    %v2529 = vshrl.u32 %v2528, 7
    %v2530 = vsub.s32 0, %v2529
    %v2531 = vrot.slane %v2493, %v2530
    %v2532 = vlaneseq
    %v2533 = vshrl.u32 %v2532, 7
    %v2534 = vsub.s32 0, %v2533
    %v2535 = vrot.slane %v2507, %v2534
    %v2536 = vlaneseq
    %v2537 = vshrl.u32 %v2536, 7
    %v2538 = vsub.s32 0, %v2537
    %v2539 = vrot.slane %v2509, %v2538
    %v2540 = vlaneseq
    %v2541 = vshrl.u32 %v2540, 7
    %v2542 = vsub.s32 0, %v2541
    %v2543 = vrot.slane %v2511, %v2542
    %2544 = vrot.lane.b32.xlu0 %v2515, 32
    %v2545 = vpop.permute.xlu0 %2544
    %2546 = vrot.lane.b32.xlu0 %v2519, 32
    %v2547 = vpop.permute.xlu0 %2546
    %2548 = vrot.lane.b32.xlu0 %v2523, 32
    %v2549 = vpop.permute.xlu0 %2548
    %2550 = vrot.lane.b32.xlu0 %v2527, 32
    %v2551 = vpop.permute.xlu0 %2550
    %2552 = vrot.lane.b32.xlu0 %v2531, 32
    %v2553 = vpop.permute.xlu0 %2552
    %2554 = vrot.lane.b32.xlu0 %v2535, 32
    %v2555 = vpop.permute.xlu0 %2554
    %2556 = vrot.lane.b32.xlu0 %v2539, 32
    %v2557 = vpop.permute.xlu0 %2556
    %2558 = vrot.lane.b32.xlu0 %v2543, 32
    %v2559 = vpop.permute.xlu0 %2558
    %2568 = vst.msk [vmem:[#allocation3 + $0x2] sm:$0x1] %vm357, %v2545
    %2569 = vst.msk [vmem:[#allocation3 + $0xa] sm:$0x1] %vm357, %v2547
    %2570 = vst.msk [vmem:[#allocation3 + $0x12] sm:$0x1] %vm357, %v2549
    %2571 = vst.msk [vmem:[#allocation3 + $0x1a] sm:$0x1] %vm357, %v2551
    %2572 = vst.msk [vmem:[#allocation3 + $0x22] sm:$0x1] %vm357, %v2553
    %2573 = vst.msk [vmem:[#allocation3 + $0x2a] sm:$0x1] %vm357, %v2555
    %2574 = vst.msk [vmem:[#allocation3 + $0x32] sm:$0x1] %vm357, %v2557
    %2575 = vst.msk [vmem:[#allocation3 + $0x3a] sm:$0x1] %vm357, %v2559
    %v2576 = vld [vmem:[#allocation4 + $0x18] sm:$0xff]
    %2577 = vrot.lane.b32.xlu0 %v2461, 32
    %v2578 = vpop.permute.xlu0 %2577
    %v2579 = vsel %vm144, %v2578, 0
    %2581 = vmatprep.subr.mxu0 0.0
    %2582 = vmatpush1.msra.mxu0 0.0
    %2583 = vmatprep.subr.mxu0 0.0
    %2584 = vmatpush1.msra.mxu0 0.0
    %2585 = vmatprep.subr.mxu0 0.0
    %2586 = vmatpush1.msra.mxu0 0.0
    %2587 = vmatprep.subr.mxu0 0.0
    %2588 = vmatpush1.msra.mxu0 0.0
    %2589 = vmatprep.subr.mxu0 0.0
    %2590 = vmatpush1.msra.mxu0 0.0
    %2591 = vmatprep.subr.mxu0 0.0
    %2592 = vmatpush1.msra.mxu0 0.0
    %2593 = vmatprep.subr.mxu0 0.0
    %2594 = vmatpush1.msra.mxu0 0.0
    %2595 = vmatprep.subr.mxu0 0.0
    %2596 = vmatpush1.msra.mxu0 0.0
    %2597 = vmatprep.subr.mxu0 0.0
    %2598 = vmatpush1.msra.mxu0 0.0
    %2599 = vmatprep.subr.mxu0 0.0
    %2600 = vmatpush1.msra.mxu0 0.0
    %2601 = vmatprep.subr.mxu0 0.0
    %2602 = vmatpush1.msra.mxu0 0.0
    %2603 = vmatprep.subr.mxu0 0.0
    %2604 = vmatpush1.msra.mxu0 0.0
    %2605 = vmatprep.subr.mxu0 0.0
    %2606 = vmatpush1.msra.mxu0 %v142
    %2607 = vmatprep.subr.mxu0 0.0
    %2608 = vmatpush1.msra.mxu0 %v141
    %2609 = vmatprep.subr.mxu0 0.0
    %2610 = vmatpush1.msra.mxu0 %v140
    %2611 = vmatprep.subr.mxu0 0.0
    %2612 = vmatpush1.msra.mxu0 %v139
    %2613 = vmatprep.subr.mxu0 0.0
    %2614 = vmatpush2.msra.mxu0 0.0
    %2615 = vmatprep.subr.mxu0 0.0
    %2616 = vmatpush2.msra.mxu0 0.0
    %2617 = vmatprep.subr.mxu0 0.0
    %2618 = vmatpush2.msra.mxu0 0.0
    %2619 = vmatprep.subr.mxu0 0.0
    %2620 = vmatpush2.msra.mxu0 0.0
    %2621 = vmatprep.subr.mxu0 0.0
    %2622 = vmatpush2.msra.mxu0 0.0
    %2623 = vmatprep.subr.mxu0 0.0
    %2624 = vmatpush2.msra.mxu0 0.0
    %2625 = vmatprep.subr.mxu0 0.0
    %2626 = vmatpush2.msra.mxu0 0.0
    %2627 = vmatprep.subr.mxu0 0.0
    %2628 = vmatpush2.msra.mxu0 0.0
    %2629 = vmatprep.subr.mxu0 0.0
    %2630 = vmatpush2.msra.mxu0 0.0
    %2631 = vmatprep.subr.mxu0 0.0
    %2632 = vmatpush2.msra.mxu0 0.0
    %2633 = vmatprep.subr.mxu0 0.0
    %2634 = vmatpush2.msra.mxu0 0.0
    %2635 = vmatprep.subr.mxu0 0.0
    %2636 = vmatpush2.msra.mxu0 0.0
    %2637 = vmatprep.subr.mxu0 0.0
    %2638 = vmatpush2.msra.mxu0 0.0
    %2639 = vmatprep.subr.mxu0 0.0
    %2640 = vmatpush2.msra.mxu0 0.0
    %2641 = vmatprep.subr.mxu0 0.0
    %2642 = vmatpush2.msra.mxu0 0.0
    %2643 = vmatprep.subr.mxu0 0.0
    %2644 = vmatpush2.msra.mxu0 0.0
    %2645 = vmatprep.mubr.f32.mxu0 0.0
    %2646 = vmatmul.mubr.f32.gmra.mxu0 %v2579
    %v2647 = vpop.f32.mrf.mxu0
    %v2648 = vadd.f32 0.0, %v2647
    %v2649 = vpop.f32.mrf.mxu0
    %2650 = vdwg.mxu0
    %v2651 = vadd.f32 %v2576, %v2648
    %v2652 = vxor.u32 %v2651, 2147483648
    %v2653 = vmul.f32 %v2652, 1.442695
    %v2654 = vpow.pop %v2653
    %v2655 = vadd.f32 %v2654, 1.0
    %v2656 = vrcp.pop %v2655
    %v2657 = vmul.f32 1.0, %v2656
    %v2658 = vtanh.pop %v2651
    %v2659 = vmul.f32 %v2657, %v2455
    %2661 = vrot.lane.b32.xlu0 %v2658, 64
    %v2662 = vpop.permute.xlu0 %2661
    %v2664 = vmul.f32 %v2657, %v2662
    %2666 = vrot.lane.b32.xlu0 %v2664, 32
    %v2667 = vpop.permute.xlu0 %2666
    %v2669 = vadd.f32 %v2659, %v2667
    %v2670 = vtanh.pop %v2669
    %2672 = vrot.lane.b32.xlu0 %v2670, 64
    %v2673 = vpop.permute.xlu0 %2672
    %v2675 = vmul.f32 %v2657, %v2673
    %v2677 = vcombine.high %v2675, %v2675
    %v2679 = vunpack.c.l.s4 1966171168
    %v2680 = vunpack.c.0.s8 %v2679
    %v2681 = vlaneseq
    %v2682 = vshrl.u32 %v2681, 7
    %v2683 = vsub.s32 %v2680, %v2682
    %v2684 = vrot.slane %v2675, %v2683
    %v2686 = vunpack.c.l.s4 1966171168
    %v2687 = vunpack.c.0.s8 %v2686
    %v2688 = vlaneseq
    %v2689 = vshrl.u32 %v2688, 7
    %v2690 = vsub.s32 %v2687, %v2689
    %v2691 = vrot.slane %v2677, %v2690
    %v2692 = vcombine.high %v2684, %v2684
    %v2693 = vcombine.high %v2691, %v2691
    %v2695 = vunpack.c.l.s4 1966171168
    %v2696 = vunpack.c.0.s8 %v2695
    %v2697 = vlaneseq
    %v2698 = vshrl.u32 %v2697, 7
    %v2699 = vsub.s32 %v2696, %v2698
    %v2700 = vrot.slane %v2684, %v2699
    %v2702 = vunpack.c.l.s4 1966171168
    %v2703 = vunpack.c.0.s8 %v2702
    %v2704 = vlaneseq
    %v2705 = vshrl.u32 %v2704, 7
    %v2706 = vsub.s32 %v2703, %v2705
    %v2707 = vrot.slane %v2691, %v2706
    %v2709 = vunpack.c.l.s4 1966171168
    %v2710 = vunpack.c.0.s8 %v2709
    %v2711 = vlaneseq
    %v2712 = vshrl.u32 %v2711, 7
    %v2713 = vsub.s32 %v2710, %v2712
    %v2714 = vrot.slane %v2692, %v2713
    %v2716 = vunpack.c.l.s4 1966171168
    %v2717 = vunpack.c.0.s8 %v2716
    %v2718 = vlaneseq
    %v2719 = vshrl.u32 %v2718, 7
    %v2720 = vsub.s32 %v2717, %v2719
    %v2721 = vrot.slane %v2693, %v2720
    %v2722 = vcombine.high %v2700, %v2700
    %v2723 = vcombine.high %v2707, %v2707
    %v2724 = vcombine.high %v2714, %v2714
    %v2725 = vcombine.high %v2721, %v2721
    %v2726 = vlaneseq
    %v2727 = vshrl.u32 %v2726, 7
    %v2728 = vsub.s32 0, %v2727
    %v2729 = vrot.slane %v2700, %v2728
    %v2730 = vlaneseq
    %v2731 = vshrl.u32 %v2730, 7
    %v2732 = vsub.s32 0, %v2731
    %v2733 = vrot.slane %v2714, %v2732
    %v2734 = vlaneseq
    %v2735 = vshrl.u32 %v2734, 7
    %v2736 = vsub.s32 0, %v2735
    %v2737 = vrot.slane %v2722, %v2736
    %v2738 = vlaneseq
    %v2739 = vshrl.u32 %v2738, 7
    %v2740 = vsub.s32 0, %v2739
    %v2741 = vrot.slane %v2724, %v2740
    %v2742 = vlaneseq
    %v2743 = vshrl.u32 %v2742, 7
    %v2744 = vsub.s32 0, %v2743
    %v2745 = vrot.slane %v2707, %v2744
    %v2746 = vlaneseq
    %v2747 = vshrl.u32 %v2746, 7
    %v2748 = vsub.s32 0, %v2747
    %v2749 = vrot.slane %v2721, %v2748
    %v2750 = vlaneseq
    %v2751 = vshrl.u32 %v2750, 7
    %v2752 = vsub.s32 0, %v2751
    %v2753 = vrot.slane %v2723, %v2752
    %v2754 = vlaneseq
    %v2755 = vshrl.u32 %v2754, 7
    %v2756 = vsub.s32 0, %v2755
    %v2757 = vrot.slane %v2725, %v2756
    %2758 = vrot.lane.b32.xlu0 %v2729, 32
    %v2759 = vpop.permute.xlu0 %2758
    %2760 = vrot.lane.b32.xlu0 %v2733, 32
    %v2761 = vpop.permute.xlu0 %2760
    %2762 = vrot.lane.b32.xlu0 %v2737, 32
    %v2763 = vpop.permute.xlu0 %2762
    %2764 = vrot.lane.b32.xlu0 %v2741, 32
    %v2765 = vpop.permute.xlu0 %2764
    %2766 = vrot.lane.b32.xlu0 %v2745, 32
    %v2767 = vpop.permute.xlu0 %2766
    %2768 = vrot.lane.b32.xlu0 %v2749, 32
    %v2769 = vpop.permute.xlu0 %2768
    %2770 = vrot.lane.b32.xlu0 %v2753, 32
    %v2771 = vpop.permute.xlu0 %2770
    %2772 = vrot.lane.b32.xlu0 %v2757, 32
    %v2773 = vpop.permute.xlu0 %2772
    %2782 = vst.msk [vmem:[#allocation3 + $0x3] sm:$0x1] %vm357, %v2759
    %2783 = vst.msk [vmem:[#allocation3 + $0xb] sm:$0x1] %vm357, %v2761
    %2784 = vst.msk [vmem:[#allocation3 + $0x13] sm:$0x1] %vm357, %v2763
    %2785 = vst.msk [vmem:[#allocation3 + $0x1b] sm:$0x1] %vm357, %v2765
    %2786 = vst.msk [vmem:[#allocation3 + $0x23] sm:$0x1] %vm357, %v2767
    %2787 = vst.msk [vmem:[#allocation3 + $0x2b] sm:$0x1] %vm357, %v2769
    %2788 = vst.msk [vmem:[#allocation3 + $0x33] sm:$0x1] %vm357, %v2771
    %2789 = vst.msk [vmem:[#allocation3 + $0x3b] sm:$0x1] %vm357, %v2773
    %v2790 = vld [vmem:[#allocation4 + $0x20] sm:$0xff]
    %2791 = vrot.lane.b32.xlu0 %v2675, 32
    %v2792 = vpop.permute.xlu0 %2791
    %v2793 = vsel %vm144, %v2792, 0
    %2795 = vmatprep.subr.mxu0 0.0
    %2796 = vmatpush1.msra.mxu0 0.0
    %2797 = vmatprep.subr.mxu0 0.0
    %2798 = vmatpush1.msra.mxu0 0.0
    %2799 = vmatprep.subr.mxu0 0.0
    %2800 = vmatpush1.msra.mxu0 0.0
    %2801 = vmatprep.subr.mxu0 0.0
    %2802 = vmatpush1.msra.mxu0 0.0
    %2803 = vmatprep.subr.mxu0 0.0
    %2804 = vmatpush1.msra.mxu0 0.0
    %2805 = vmatprep.subr.mxu0 0.0
    %2806 = vmatpush1.msra.mxu0 0.0
    %2807 = vmatprep.subr.mxu0 0.0
    %2808 = vmatpush1.msra.mxu0 0.0
    %2809 = vmatprep.subr.mxu0 0.0
    %2810 = vmatpush1.msra.mxu0 0.0
    %2811 = vmatprep.subr.mxu0 0.0
    %2812 = vmatpush1.msra.mxu0 0.0
    %2813 = vmatprep.subr.mxu0 0.0
    %2814 = vmatpush1.msra.mxu0 0.0
    %2815 = vmatprep.subr.mxu0 0.0
    %2816 = vmatpush1.msra.mxu0 0.0
    %2817 = vmatprep.subr.mxu0 0.0
    %2818 = vmatpush1.msra.mxu0 0.0
    %2819 = vmatprep.subr.mxu0 0.0
    %2820 = vmatpush1.msra.mxu0 %v142
    %2821 = vmatprep.subr.mxu0 0.0
    %2822 = vmatpush1.msra.mxu0 %v141
    %2823 = vmatprep.subr.mxu0 0.0
    %2824 = vmatpush1.msra.mxu0 %v140
    %2825 = vmatprep.subr.mxu0 0.0
    %2826 = vmatpush1.msra.mxu0 %v139
    %2827 = vmatprep.subr.mxu0 0.0
    %2828 = vmatpush2.msra.mxu0 0.0
    %2829 = vmatprep.subr.mxu0 0.0
    %2830 = vmatpush2.msra.mxu0 0.0
    %2831 = vmatprep.subr.mxu0 0.0
    %2832 = vmatpush2.msra.mxu0 0.0
    %2833 = vmatprep.subr.mxu0 0.0
    %2834 = vmatpush2.msra.mxu0 0.0
    %2835 = vmatprep.subr.mxu0 0.0
    %2836 = vmatpush2.msra.mxu0 0.0
    %2837 = vmatprep.subr.mxu0 0.0
    %2838 = vmatpush2.msra.mxu0 0.0
    %2839 = vmatprep.subr.mxu0 0.0
    %2840 = vmatpush2.msra.mxu0 0.0
    %2841 = vmatprep.subr.mxu0 0.0
    %2842 = vmatpush2.msra.mxu0 0.0
    %2843 = vmatprep.subr.mxu0 0.0
    %2844 = vmatpush2.msra.mxu0 0.0
    %2845 = vmatprep.subr.mxu0 0.0
    %2846 = vmatpush2.msra.mxu0 0.0
    %2847 = vmatprep.subr.mxu0 0.0
    %2848 = vmatpush2.msra.mxu0 0.0
    %2849 = vmatprep.subr.mxu0 0.0
    %2850 = vmatpush2.msra.mxu0 0.0
    %2851 = vmatprep.subr.mxu0 0.0
    %2852 = vmatpush2.msra.mxu0 0.0
    %2853 = vmatprep.subr.mxu0 0.0
    %2854 = vmatpush2.msra.mxu0 0.0
    %2855 = vmatprep.subr.mxu0 0.0
    %2856 = vmatpush2.msra.mxu0 0.0
    %2857 = vmatprep.subr.mxu0 0.0
    %2858 = vmatpush2.msra.mxu0 0.0
    %2859 = vmatprep.mubr.f32.mxu0 0.0
    %2860 = vmatmul.mubr.f32.gmra.mxu0 %v2793
    %v2861 = vpop.f32.mrf.mxu0
    %v2862 = vadd.f32 0.0, %v2861
    %v2863 = vpop.f32.mrf.mxu0
    %2864 = vdwg.mxu0
    %v2865 = vadd.f32 %v2790, %v2862
    %v2866 = vxor.u32 %v2865, 2147483648
    %v2867 = vmul.f32 %v2866, 1.442695
    %v2868 = vpow.pop %v2867
    %v2869 = vadd.f32 %v2868, 1.0
    %v2870 = vrcp.pop %v2869
    %v2871 = vmul.f32 1.0, %v2870
    %v2872 = vtanh.pop %v2865
    %v2873 = vmul.f32 %v2871, %v2669
    %2875 = vrot.lane.b32.xlu0 %v2872, 64
    %v2876 = vpop.permute.xlu0 %2875
    %v2878 = vmul.f32 %v2871, %v2876
    %2880 = vrot.lane.b32.xlu0 %v2878, 32
    %v2881 = vpop.permute.xlu0 %2880
    %v2883 = vadd.f32 %v2873, %v2881
    %v2884 = vtanh.pop %v2883
    %2886 = vrot.lane.b32.xlu0 %v2884, 64
    %v2887 = vpop.permute.xlu0 %2886
    %v2889 = vmul.f32 %v2871, %v2887
    %v2891 = vcombine.high %v2889, %v2889
    %v2893 = vunpack.c.l.s4 1966171168
    %v2894 = vunpack.c.0.s8 %v2893
    %v2895 = vlaneseq
    %v2896 = vshrl.u32 %v2895, 7
    %v2897 = vsub.s32 %v2894, %v2896
    %v2898 = vrot.slane %v2889, %v2897
    %v2900 = vunpack.c.l.s4 1966171168
    %v2901 = vunpack.c.0.s8 %v2900
    %v2902 = vlaneseq
    %v2903 = vshrl.u32 %v2902, 7
    %v2904 = vsub.s32 %v2901, %v2903
    %v2905 = vrot.slane %v2891, %v2904
    %v2906 = vcombine.high %v2898, %v2898
    %v2907 = vcombine.high %v2905, %v2905
    %v2909 = vunpack.c.l.s4 1966171168
    %v2910 = vunpack.c.0.s8 %v2909
    %v2911 = vlaneseq
    %v2912 = vshrl.u32 %v2911, 7
    %v2913 = vsub.s32 %v2910, %v2912
    %v2914 = vrot.slane %v2898, %v2913
    %v2916 = vunpack.c.l.s4 1966171168
    %v2917 = vunpack.c.0.s8 %v2916
    %v2918 = vlaneseq
    %v2919 = vshrl.u32 %v2918, 7
    %v2920 = vsub.s32 %v2917, %v2919
    %v2921 = vrot.slane %v2905, %v2920
    %v2923 = vunpack.c.l.s4 1966171168
    %v2924 = vunpack.c.0.s8 %v2923
    %v2925 = vlaneseq
    %v2926 = vshrl.u32 %v2925, 7
    %v2927 = vsub.s32 %v2924, %v2926
    %v2928 = vrot.slane %v2906, %v2927
    %v2930 = vunpack.c.l.s4 1966171168
    %v2931 = vunpack.c.0.s8 %v2930
    %v2932 = vlaneseq
    %v2933 = vshrl.u32 %v2932, 7
    %v2934 = vsub.s32 %v2931, %v2933
    %v2935 = vrot.slane %v2907, %v2934
    %v2936 = vcombine.high %v2914, %v2914
    %v2937 = vcombine.high %v2921, %v2921
    %v2938 = vcombine.high %v2928, %v2928
    %v2939 = vcombine.high %v2935, %v2935
    %v2940 = vlaneseq
    %v2941 = vshrl.u32 %v2940, 7
    %v2942 = vsub.s32 0, %v2941
    %v2943 = vrot.slane %v2914, %v2942
    %v2944 = vlaneseq
    %v2945 = vshrl.u32 %v2944, 7
    %v2946 = vsub.s32 0, %v2945
    %v2947 = vrot.slane %v2928, %v2946
    %v2948 = vlaneseq
    %v2949 = vshrl.u32 %v2948, 7
    %v2950 = vsub.s32 0, %v2949
    %v2951 = vrot.slane %v2936, %v2950
    %v2952 = vlaneseq
    %v2953 = vshrl.u32 %v2952, 7
    %v2954 = vsub.s32 0, %v2953
    %v2955 = vrot.slane %v2938, %v2954
    %v2956 = vlaneseq
    %v2957 = vshrl.u32 %v2956, 7
    %v2958 = vsub.s32 0, %v2957
    %v2959 = vrot.slane %v2921, %v2958
    %v2960 = vlaneseq
    %v2961 = vshrl.u32 %v2960, 7
    %v2962 = vsub.s32 0, %v2961
    %v2963 = vrot.slane %v2935, %v2962
    %v2964 = vlaneseq
    %v2965 = vshrl.u32 %v2964, 7
    %v2966 = vsub.s32 0, %v2965
    %v2967 = vrot.slane %v2937, %v2966
    %v2968 = vlaneseq
    %v2969 = vshrl.u32 %v2968, 7
    %v2970 = vsub.s32 0, %v2969
    %v2971 = vrot.slane %v2939, %v2970
    %2972 = vrot.lane.b32.xlu0 %v2943, 32
    %v2973 = vpop.permute.xlu0 %2972
    %2974 = vrot.lane.b32.xlu0 %v2947, 32
    %v2975 = vpop.permute.xlu0 %2974
    %2976 = vrot.lane.b32.xlu0 %v2951, 32
    %v2977 = vpop.permute.xlu0 %2976
    %2978 = vrot.lane.b32.xlu0 %v2955, 32
    %v2979 = vpop.permute.xlu0 %2978
    %2980 = vrot.lane.b32.xlu0 %v2959, 32
    %v2981 = vpop.permute.xlu0 %2980
    %2982 = vrot.lane.b32.xlu0 %v2963, 32
    %v2983 = vpop.permute.xlu0 %2982
    %2984 = vrot.lane.b32.xlu0 %v2967, 32
    %v2985 = vpop.permute.xlu0 %2984
    %2986 = vrot.lane.b32.xlu0 %v2971, 32
    %v2987 = vpop.permute.xlu0 %2986
    %2996 = vst.msk [vmem:[#allocation3 + $0x4] sm:$0x1] %vm357, %v2973
    %2997 = vst.msk [vmem:[#allocation3 + $0xc] sm:$0x1] %vm357, %v2975
    %2998 = vst.msk [vmem:[#allocation3 + $0x14] sm:$0x1] %vm357, %v2977
    %2999 = vst.msk [vmem:[#allocation3 + $0x1c] sm:$0x1] %vm357, %v2979
    %3000 = vst.msk [vmem:[#allocation3 + $0x24] sm:$0x1] %vm357, %v2981
    %3001 = vst.msk [vmem:[#allocation3 + $0x2c] sm:$0x1] %vm357, %v2983
    %3002 = vst.msk [vmem:[#allocation3 + $0x34] sm:$0x1] %vm357, %v2985
    %3003 = vst.msk [vmem:[#allocation3 + $0x3c] sm:$0x1] %vm357, %v2987
    %v3004 = vld [vmem:[#allocation4 + $0x28] sm:$0xff]
    %3005 = vrot.lane.b32.xlu0 %v2889, 32
    %v3006 = vpop.permute.xlu0 %3005
    %v3007 = vsel %vm144, %v3006, 0
    %3009 = vmatprep.subr.mxu0 0.0
    %3010 = vmatpush1.msra.mxu0 0.0
    %3011 = vmatprep.subr.mxu0 0.0
    %3012 = vmatpush1.msra.mxu0 0.0
    %3013 = vmatprep.subr.mxu0 0.0
    %3014 = vmatpush1.msra.mxu0 0.0
    %3015 = vmatprep.subr.mxu0 0.0
    %3016 = vmatpush1.msra.mxu0 0.0
    %3017 = vmatprep.subr.mxu0 0.0
    %3018 = vmatpush1.msra.mxu0 0.0
    %3019 = vmatprep.subr.mxu0 0.0
    %3020 = vmatpush1.msra.mxu0 0.0
    %3021 = vmatprep.subr.mxu0 0.0
    %3022 = vmatpush1.msra.mxu0 0.0
    %3023 = vmatprep.subr.mxu0 0.0
    %3024 = vmatpush1.msra.mxu0 0.0
    %3025 = vmatprep.subr.mxu0 0.0
    %3026 = vmatpush1.msra.mxu0 0.0
    %3027 = vmatprep.subr.mxu0 0.0
    %3028 = vmatpush1.msra.mxu0 0.0
    %3029 = vmatprep.subr.mxu0 0.0
    %3030 = vmatpush1.msra.mxu0 0.0
    %3031 = vmatprep.subr.mxu0 0.0
    %3032 = vmatpush1.msra.mxu0 0.0
    %3033 = vmatprep.subr.mxu0 0.0
    %3034 = vmatpush1.msra.mxu0 %v142
    %3035 = vmatprep.subr.mxu0 0.0
    %3036 = vmatpush1.msra.mxu0 %v141
    %3037 = vmatprep.subr.mxu0 0.0
    %3038 = vmatpush1.msra.mxu0 %v140
    %3039 = vmatprep.subr.mxu0 0.0
    %3040 = vmatpush1.msra.mxu0 %v139
    %3041 = vmatprep.subr.mxu0 0.0
    %3042 = vmatpush2.msra.mxu0 0.0
    %3043 = vmatprep.subr.mxu0 0.0
    %3044 = vmatpush2.msra.mxu0 0.0
    %3045 = vmatprep.subr.mxu0 0.0
    %3046 = vmatpush2.msra.mxu0 0.0
    %3047 = vmatprep.subr.mxu0 0.0
    %3048 = vmatpush2.msra.mxu0 0.0
    %3049 = vmatprep.subr.mxu0 0.0
    %3050 = vmatpush2.msra.mxu0 0.0
    %3051 = vmatprep.subr.mxu0 0.0
    %3052 = vmatpush2.msra.mxu0 0.0
    %3053 = vmatprep.subr.mxu0 0.0
    %3054 = vmatpush2.msra.mxu0 0.0
    %3055 = vmatprep.subr.mxu0 0.0
    %3056 = vmatpush2.msra.mxu0 0.0
    %3057 = vmatprep.subr.mxu0 0.0
    %3058 = vmatpush2.msra.mxu0 0.0
    %3059 = vmatprep.subr.mxu0 0.0
    %3060 = vmatpush2.msra.mxu0 0.0
    %3061 = vmatprep.subr.mxu0 0.0
    %3062 = vmatpush2.msra.mxu0 0.0
    %3063 = vmatprep.subr.mxu0 0.0
    %3064 = vmatpush2.msra.mxu0 0.0
    %3065 = vmatprep.subr.mxu0 0.0
    %3066 = vmatpush2.msra.mxu0 0.0
    %3067 = vmatprep.subr.mxu0 0.0
    %3068 = vmatpush2.msra.mxu0 0.0
    %3069 = vmatprep.subr.mxu0 0.0
    %3070 = vmatpush2.msra.mxu0 0.0
    %3071 = vmatprep.subr.mxu0 0.0
    %3072 = vmatpush2.msra.mxu0 0.0
    %3073 = vmatprep.mubr.f32.mxu0 0.0
    %3074 = vmatmul.mubr.f32.gmra.mxu0 %v3007
    %v3075 = vpop.f32.mrf.mxu0
    %v3076 = vadd.f32 0.0, %v3075
    %v3077 = vpop.f32.mrf.mxu0
    %3078 = vdwg.mxu0
    %v3079 = vadd.f32 %v3004, %v3076
    %v3080 = vxor.u32 %v3079, 2147483648
    %v3081 = vmul.f32 %v3080, 1.442695
    %v3082 = vpow.pop %v3081
    %v3083 = vadd.f32 %v3082, 1.0
    %v3084 = vrcp.pop %v3083
    %v3085 = vmul.f32 1.0, %v3084
    %v3086 = vtanh.pop %v3079
    %v3087 = vmul.f32 %v3085, %v2883
    %3089 = vrot.lane.b32.xlu0 %v3086, 64
    %v3090 = vpop.permute.xlu0 %3089
    %v3092 = vmul.f32 %v3085, %v3090
    %3094 = vrot.lane.b32.xlu0 %v3092, 32
    %v3095 = vpop.permute.xlu0 %3094
    %v3097 = vadd.f32 %v3087, %v3095
    %v3098 = vtanh.pop %v3097
    %3100 = vrot.lane.b32.xlu0 %v3098, 64
    %v3101 = vpop.permute.xlu0 %3100
    %v3103 = vmul.f32 %v3085, %v3101
    %v3105 = vcombine.high %v3103, %v3103
    %v3107 = vunpack.c.l.s4 1966171168
    %v3108 = vunpack.c.0.s8 %v3107
    %v3109 = vlaneseq
    %v3110 = vshrl.u32 %v3109, 7
    %v3111 = vsub.s32 %v3108, %v3110
    %v3112 = vrot.slane %v3103, %v3111
    %v3114 = vunpack.c.l.s4 1966171168
    %v3115 = vunpack.c.0.s8 %v3114
    %v3116 = vlaneseq
    %v3117 = vshrl.u32 %v3116, 7
    %v3118 = vsub.s32 %v3115, %v3117
    %v3119 = vrot.slane %v3105, %v3118
    %v3120 = vcombine.high %v3112, %v3112
    %v3121 = vcombine.high %v3119, %v3119
    %v3123 = vunpack.c.l.s4 1966171168
    %v3124 = vunpack.c.0.s8 %v3123
    %v3125 = vlaneseq
    %v3126 = vshrl.u32 %v3125, 7
    %v3127 = vsub.s32 %v3124, %v3126
    %v3128 = vrot.slane %v3112, %v3127
    %v3130 = vunpack.c.l.s4 1966171168
    %v3131 = vunpack.c.0.s8 %v3130
    %v3132 = vlaneseq
    %v3133 = vshrl.u32 %v3132, 7
    %v3134 = vsub.s32 %v3131, %v3133
    %v3135 = vrot.slane %v3119, %v3134
    %v3137 = vunpack.c.l.s4 1966171168
    %v3138 = vunpack.c.0.s8 %v3137
    %v3139 = vlaneseq
    %v3140 = vshrl.u32 %v3139, 7
    %v3141 = vsub.s32 %v3138, %v3140
    %v3142 = vrot.slane %v3120, %v3141
    %v3144 = vunpack.c.l.s4 1966171168
    %v3145 = vunpack.c.0.s8 %v3144
    %v3146 = vlaneseq
    %v3147 = vshrl.u32 %v3146, 7
    %v3148 = vsub.s32 %v3145, %v3147
    %v3149 = vrot.slane %v3121, %v3148
    %v3150 = vcombine.high %v3128, %v3128
    %v3151 = vcombine.high %v3135, %v3135
    %v3152 = vcombine.high %v3142, %v3142
    %v3153 = vcombine.high %v3149, %v3149
    %v3154 = vlaneseq
    %v3155 = vshrl.u32 %v3154, 7
    %v3156 = vsub.s32 0, %v3155
    %v3157 = vrot.slane %v3128, %v3156
    %v3158 = vlaneseq
    %v3159 = vshrl.u32 %v3158, 7
    %v3160 = vsub.s32 0, %v3159
    %v3161 = vrot.slane %v3142, %v3160
    %v3162 = vlaneseq
    %v3163 = vshrl.u32 %v3162, 7
    %v3164 = vsub.s32 0, %v3163
    %v3165 = vrot.slane %v3150, %v3164
    %v3166 = vlaneseq
    %v3167 = vshrl.u32 %v3166, 7
    %v3168 = vsub.s32 0, %v3167
    %v3169 = vrot.slane %v3152, %v3168
    %v3170 = vlaneseq
    %v3171 = vshrl.u32 %v3170, 7
    %v3172 = vsub.s32 0, %v3171
    %v3173 = vrot.slane %v3135, %v3172
    %v3174 = vlaneseq
    %v3175 = vshrl.u32 %v3174, 7
    %v3176 = vsub.s32 0, %v3175
    %v3177 = vrot.slane %v3149, %v3176
    %v3178 = vlaneseq
    %v3179 = vshrl.u32 %v3178, 7
    %v3180 = vsub.s32 0, %v3179
    %v3181 = vrot.slane %v3151, %v3180
    %v3182 = vlaneseq
    %v3183 = vshrl.u32 %v3182, 7
    %v3184 = vsub.s32 0, %v3183
    %v3185 = vrot.slane %v3153, %v3184
    %3186 = vrot.lane.b32.xlu0 %v3157, 32
    %v3187 = vpop.permute.xlu0 %3186
    %3188 = vrot.lane.b32.xlu0 %v3161, 32
    %v3189 = vpop.permute.xlu0 %3188
    %3190 = vrot.lane.b32.xlu0 %v3165, 32
    %v3191 = vpop.permute.xlu0 %3190
    %3192 = vrot.lane.b32.xlu0 %v3169, 32
    %v3193 = vpop.permute.xlu0 %3192
    %3194 = vrot.lane.b32.xlu0 %v3173, 32
    %v3195 = vpop.permute.xlu0 %3194
    %3196 = vrot.lane.b32.xlu0 %v3177, 32
    %v3197 = vpop.permute.xlu0 %3196
    %3198 = vrot.lane.b32.xlu0 %v3181, 32
    %v3199 = vpop.permute.xlu0 %3198
    %3200 = vrot.lane.b32.xlu0 %v3185, 32
    %v3201 = vpop.permute.xlu0 %3200
    %3210 = vst.msk [vmem:[#allocation3 + $0x5] sm:$0x1] %vm357, %v3187
    %3211 = vst.msk [vmem:[#allocation3 + $0xd] sm:$0x1] %vm357, %v3189
    %3212 = vst.msk [vmem:[#allocation3 + $0x15] sm:$0x1] %vm357, %v3191
    %3213 = vst.msk [vmem:[#allocation3 + $0x1d] sm:$0x1] %vm357, %v3193
    %3214 = vst.msk [vmem:[#allocation3 + $0x25] sm:$0x1] %vm357, %v3195
    %3215 = vst.msk [vmem:[#allocation3 + $0x2d] sm:$0x1] %vm357, %v3197
    %3216 = vst.msk [vmem:[#allocation3 + $0x35] sm:$0x1] %vm357, %v3199
    %3217 = vst.msk [vmem:[#allocation3 + $0x3d] sm:$0x1] %vm357, %v3201
    %v3218 = vld [vmem:[#allocation4 + $0x30] sm:$0xff]
    %3219 = vrot.lane.b32.xlu0 %v3103, 32
    %v3220 = vpop.permute.xlu0 %3219
    %v3221 = vsel %vm144, %v3220, 0
    %3223 = vmatprep.subr.mxu0 0.0
    %3224 = vmatpush1.msra.mxu0 0.0
    %3225 = vmatprep.subr.mxu0 0.0
    %3226 = vmatpush1.msra.mxu0 0.0
    %3227 = vmatprep.subr.mxu0 0.0
    %3228 = vmatpush1.msra.mxu0 0.0
    %3229 = vmatprep.subr.mxu0 0.0
    %3230 = vmatpush1.msra.mxu0 0.0
    %3231 = vmatprep.subr.mxu0 0.0
    %3232 = vmatpush1.msra.mxu0 0.0
    %3233 = vmatprep.subr.mxu0 0.0
    %3234 = vmatpush1.msra.mxu0 0.0
    %3235 = vmatprep.subr.mxu0 0.0
    %3236 = vmatpush1.msra.mxu0 0.0
    %3237 = vmatprep.subr.mxu0 0.0
    %3238 = vmatpush1.msra.mxu0 0.0
    %3239 = vmatprep.subr.mxu0 0.0
    %3240 = vmatpush1.msra.mxu0 0.0
    %3241 = vmatprep.subr.mxu0 0.0
    %3242 = vmatpush1.msra.mxu0 0.0
    %3243 = vmatprep.subr.mxu0 0.0
    %3244 = vmatpush1.msra.mxu0 0.0
    %3245 = vmatprep.subr.mxu0 0.0
    %3246 = vmatpush1.msra.mxu0 0.0
    %3247 = vmatprep.subr.mxu0 0.0
    %3248 = vmatpush1.msra.mxu0 %v142
    %3249 = vmatprep.subr.mxu0 0.0
    %3250 = vmatpush1.msra.mxu0 %v141
    %3251 = vmatprep.subr.mxu0 0.0
    %3252 = vmatpush1.msra.mxu0 %v140
    %3253 = vmatprep.subr.mxu0 0.0
    %3254 = vmatpush1.msra.mxu0 %v139
    %3255 = vmatprep.subr.mxu0 0.0
    %3256 = vmatpush2.msra.mxu0 0.0
    %3257 = vmatprep.subr.mxu0 0.0
    %3258 = vmatpush2.msra.mxu0 0.0
    %3259 = vmatprep.subr.mxu0 0.0
    %3260 = vmatpush2.msra.mxu0 0.0
    %3261 = vmatprep.subr.mxu0 0.0
    %3262 = vmatpush2.msra.mxu0 0.0
    %3263 = vmatprep.subr.mxu0 0.0
    %3264 = vmatpush2.msra.mxu0 0.0
    %3265 = vmatprep.subr.mxu0 0.0
    %3266 = vmatpush2.msra.mxu0 0.0
    %3267 = vmatprep.subr.mxu0 0.0
    %3268 = vmatpush2.msra.mxu0 0.0
    %3269 = vmatprep.subr.mxu0 0.0
    %3270 = vmatpush2.msra.mxu0 0.0
    %3271 = vmatprep.subr.mxu0 0.0
    %3272 = vmatpush2.msra.mxu0 0.0
    %3273 = vmatprep.subr.mxu0 0.0
    %3274 = vmatpush2.msra.mxu0 0.0
    %3275 = vmatprep.subr.mxu0 0.0
    %3276 = vmatpush2.msra.mxu0 0.0
    %3277 = vmatprep.subr.mxu0 0.0
    %3278 = vmatpush2.msra.mxu0 0.0
    %3279 = vmatprep.subr.mxu0 0.0
    %3280 = vmatpush2.msra.mxu0 0.0
    %3281 = vmatprep.subr.mxu0 0.0
    %3282 = vmatpush2.msra.mxu0 0.0
    %3283 = vmatprep.subr.mxu0 0.0
    %3284 = vmatpush2.msra.mxu0 0.0
    %3285 = vmatprep.subr.mxu0 0.0
    %3286 = vmatpush2.msra.mxu0 0.0
    %3287 = vmatprep.mubr.f32.mxu0 0.0
    %3288 = vmatmul.mubr.f32.gmra.mxu0 %v3221
    %v3289 = vpop.f32.mrf.mxu0
    %v3290 = vadd.f32 0.0, %v3289
    %v3291 = vpop.f32.mrf.mxu0
    %3292 = vdwg.mxu0
    %v3293 = vadd.f32 %v3218, %v3290
    %v3294 = vxor.u32 %v3293, 2147483648
    %v3295 = vmul.f32 %v3294, 1.442695
    %v3296 = vpow.pop %v3295
    %v3297 = vadd.f32 %v3296, 1.0
    %v3298 = vrcp.pop %v3297
    %v3299 = vmul.f32 1.0, %v3298
    %v3300 = vtanh.pop %v3293
    %v3301 = vmul.f32 %v3299, %v3097
    %3303 = vrot.lane.b32.xlu0 %v3300, 64
    %v3304 = vpop.permute.xlu0 %3303
    %v3306 = vmul.f32 %v3299, %v3304
    %3308 = vrot.lane.b32.xlu0 %v3306, 32
    %v3309 = vpop.permute.xlu0 %3308
    %v3311 = vadd.f32 %v3301, %v3309
    %v3312 = vtanh.pop %v3311
    %3314 = vrot.lane.b32.xlu0 %v3312, 64
    %v3315 = vpop.permute.xlu0 %3314
    %v3317 = vmul.f32 %v3299, %v3315
    %v3319 = vcombine.high %v3317, %v3317
    %v3321 = vunpack.c.l.s4 1966171168
    %v3322 = vunpack.c.0.s8 %v3321
    %v3323 = vlaneseq
    %v3324 = vshrl.u32 %v3323, 7
    %v3325 = vsub.s32 %v3322, %v3324
    %v3326 = vrot.slane %v3317, %v3325
    %v3328 = vunpack.c.l.s4 1966171168
    %v3329 = vunpack.c.0.s8 %v3328
    %v3330 = vlaneseq
    %v3331 = vshrl.u32 %v3330, 7
    %v3332 = vsub.s32 %v3329, %v3331
    %v3333 = vrot.slane %v3319, %v3332
    %v3334 = vcombine.high %v3326, %v3326
    %v3335 = vcombine.high %v3333, %v3333
    %v3337 = vunpack.c.l.s4 1966171168
    %v3338 = vunpack.c.0.s8 %v3337
    %v3339 = vlaneseq
    %v3340 = vshrl.u32 %v3339, 7
    %v3341 = vsub.s32 %v3338, %v3340
    %v3342 = vrot.slane %v3326, %v3341
    %v3344 = vunpack.c.l.s4 1966171168
    %v3345 = vunpack.c.0.s8 %v3344
    %v3346 = vlaneseq
    %v3347 = vshrl.u32 %v3346, 7
    %v3348 = vsub.s32 %v3345, %v3347
    %v3349 = vrot.slane %v3333, %v3348
    %v3351 = vunpack.c.l.s4 1966171168
    %v3352 = vunpack.c.0.s8 %v3351
    %v3353 = vlaneseq
    %v3354 = vshrl.u32 %v3353, 7
    %v3355 = vsub.s32 %v3352, %v3354
    %v3356 = vrot.slane %v3334, %v3355
    %v3358 = vunpack.c.l.s4 1966171168
    %v3359 = vunpack.c.0.s8 %v3358
    %v3360 = vlaneseq
    %v3361 = vshrl.u32 %v3360, 7
    %v3362 = vsub.s32 %v3359, %v3361
    %v3363 = vrot.slane %v3335, %v3362
    %v3364 = vcombine.high %v3342, %v3342
    %v3365 = vcombine.high %v3349, %v3349
    %v3366 = vcombine.high %v3356, %v3356
    %v3367 = vcombine.high %v3363, %v3363
    %v3368 = vlaneseq
    %v3369 = vshrl.u32 %v3368, 7
    %v3370 = vsub.s32 0, %v3369
    %v3371 = vrot.slane %v3342, %v3370
    %v3372 = vlaneseq
    %v3373 = vshrl.u32 %v3372, 7
    %v3374 = vsub.s32 0, %v3373
    %v3375 = vrot.slane %v3356, %v3374
    %v3376 = vlaneseq
    %v3377 = vshrl.u32 %v3376, 7
    %v3378 = vsub.s32 0, %v3377
    %v3379 = vrot.slane %v3364, %v3378
    %v3380 = vlaneseq
    %v3381 = vshrl.u32 %v3380, 7
    %v3382 = vsub.s32 0, %v3381
    %v3383 = vrot.slane %v3366, %v3382
    %v3384 = vlaneseq
    %v3385 = vshrl.u32 %v3384, 7
    %v3386 = vsub.s32 0, %v3385
    %v3387 = vrot.slane %v3349, %v3386
    %v3388 = vlaneseq
    %v3389 = vshrl.u32 %v3388, 7
    %v3390 = vsub.s32 0, %v3389
    %v3391 = vrot.slane %v3363, %v3390
    %v3392 = vlaneseq
    %v3393 = vshrl.u32 %v3392, 7
    %v3394 = vsub.s32 0, %v3393
    %v3395 = vrot.slane %v3365, %v3394
    %v3396 = vlaneseq
    %v3397 = vshrl.u32 %v3396, 7
    %v3398 = vsub.s32 0, %v3397
    %v3399 = vrot.slane %v3367, %v3398
    %3400 = vrot.lane.b32.xlu0 %v3371, 32
    %v3401 = vpop.permute.xlu0 %3400
    %3402 = vrot.lane.b32.xlu0 %v3375, 32
    %v3403 = vpop.permute.xlu0 %3402
    %3404 = vrot.lane.b32.xlu0 %v3379, 32
    %v3405 = vpop.permute.xlu0 %3404
    %3406 = vrot.lane.b32.xlu0 %v3383, 32
    %v3407 = vpop.permute.xlu0 %3406
    %3408 = vrot.lane.b32.xlu0 %v3387, 32
    %v3409 = vpop.permute.xlu0 %3408
    %3410 = vrot.lane.b32.xlu0 %v3391, 32
    %v3411 = vpop.permute.xlu0 %3410
    %3412 = vrot.lane.b32.xlu0 %v3395, 32
    %v3413 = vpop.permute.xlu0 %3412
    %3414 = vrot.lane.b32.xlu0 %v3399, 32
    %v3415 = vpop.permute.xlu0 %3414
    %3424 = vst.msk [vmem:[#allocation3 + $0x6] sm:$0x1] %vm357, %v3401
    %3425 = vst.msk [vmem:[#allocation3 + $0xe] sm:$0x1] %vm357, %v3403
    %3426 = vst.msk [vmem:[#allocation3 + $0x16] sm:$0x1] %vm357, %v3405
    %3427 = vst.msk [vmem:[#allocation3 + $0x1e] sm:$0x1] %vm357, %v3407
    %3428 = vst.msk [vmem:[#allocation3 + $0x26] sm:$0x1] %vm357, %v3409
    %3429 = vst.msk [vmem:[#allocation3 + $0x2e] sm:$0x1] %vm357, %v3411
    %3430 = vst.msk [vmem:[#allocation3 + $0x36] sm:$0x1] %vm357, %v3413
    %3431 = vst.msk [vmem:[#allocation3 + $0x3e] sm:$0x1] %vm357, %v3415
    %v3432 = vld [vmem:[#allocation4 + $0x38] sm:$0xff]
    %3433 = vrot.lane.b32.xlu0 %v3317, 32
    %v3434 = vpop.permute.xlu0 %3433
    %v3435 = vsel %vm144, %v3434, 0
    %3437 = vmatprep.subr.mxu0 0.0
    %3438 = vmatpush1.msra.mxu0 0.0
    %3439 = vmatprep.subr.mxu0 0.0
    %3440 = vmatpush1.msra.mxu0 0.0
    %3441 = vmatprep.subr.mxu0 0.0
    %3442 = vmatpush1.msra.mxu0 0.0
    %3443 = vmatprep.subr.mxu0 0.0
    %3444 = vmatpush1.msra.mxu0 0.0
    %3445 = vmatprep.subr.mxu0 0.0
    %3446 = vmatpush1.msra.mxu0 0.0
    %3447 = vmatprep.subr.mxu0 0.0
    %3448 = vmatpush1.msra.mxu0 0.0
    %3449 = vmatprep.subr.mxu0 0.0
    %3450 = vmatpush1.msra.mxu0 0.0
    %3451 = vmatprep.subr.mxu0 0.0
    %3452 = vmatpush1.msra.mxu0 0.0
    %3453 = vmatprep.subr.mxu0 0.0
    %3454 = vmatpush1.msra.mxu0 0.0
    %3455 = vmatprep.subr.mxu0 0.0
    %3456 = vmatpush1.msra.mxu0 0.0
    %3457 = vmatprep.subr.mxu0 0.0
    %3458 = vmatpush1.msra.mxu0 0.0
    %3459 = vmatprep.subr.mxu0 0.0
    %3460 = vmatpush1.msra.mxu0 0.0
    %3461 = vmatprep.subr.mxu0 0.0
    %3462 = vmatpush1.msra.mxu0 %v142
    %3463 = vmatprep.subr.mxu0 0.0
    %3464 = vmatpush1.msra.mxu0 %v141
    %3465 = vmatprep.subr.mxu0 0.0
    %3466 = vmatpush1.msra.mxu0 %v140
    %3467 = vmatprep.subr.mxu0 0.0
    %3468 = vmatpush1.msra.mxu0 %v139
    %3469 = vmatprep.subr.mxu0 0.0
    %3470 = vmatpush2.msra.mxu0 0.0
    %3471 = vmatprep.subr.mxu0 0.0
    %3472 = vmatpush2.msra.mxu0 0.0
    %3473 = vmatprep.subr.mxu0 0.0
    %3474 = vmatpush2.msra.mxu0 0.0
    %3475 = vmatprep.subr.mxu0 0.0
    %3476 = vmatpush2.msra.mxu0 0.0
    %3477 = vmatprep.subr.mxu0 0.0
    %3478 = vmatpush2.msra.mxu0 0.0
    %3479 = vmatprep.subr.mxu0 0.0
    %3480 = vmatpush2.msra.mxu0 0.0
    %3481 = vmatprep.subr.mxu0 0.0
    %3482 = vmatpush2.msra.mxu0 0.0
    %3483 = vmatprep.subr.mxu0 0.0
    %3484 = vmatpush2.msra.mxu0 0.0
    %3485 = vmatprep.subr.mxu0 0.0
    %3486 = vmatpush2.msra.mxu0 0.0
    %3487 = vmatprep.subr.mxu0 0.0
    %3488 = vmatpush2.msra.mxu0 0.0
    %3489 = vmatprep.subr.mxu0 0.0
    %3490 = vmatpush2.msra.mxu0 0.0
    %3491 = vmatprep.subr.mxu0 0.0
    %3492 = vmatpush2.msra.mxu0 0.0
    %3493 = vmatprep.subr.mxu0 0.0
    %3494 = vmatpush2.msra.mxu0 0.0
    %3495 = vmatprep.subr.mxu0 0.0
    %3496 = vmatpush2.msra.mxu0 0.0
    %3497 = vmatprep.subr.mxu0 0.0
    %3498 = vmatpush2.msra.mxu0 0.0
    %3499 = vmatprep.subr.mxu0 0.0
    %3500 = vmatpush2.msra.mxu0 0.0
    %3501 = vmatprep.mubr.f32.mxu0 0.0
    %3502 = vmatmul.mubr.f32.gmra.mxu0 %v3435
    %v3503 = vpop.f32.mrf.mxu0
    %v3504 = vadd.f32 0.0, %v3503
    %v3505 = vpop.f32.mrf.mxu0
    %3506 = vdwg.mxu0
    %v3507 = vadd.f32 %v3432, %v3504
    %v3508 = vxor.u32 %v3507, 2147483648
    %v3509 = vmul.f32 %v3508, 1.442695
    %v3510 = vpow.pop %v3509
    %v3511 = vadd.f32 %v3510, 1.0
    %v3512 = vrcp.pop %v3511
    %v3513 = vmul.f32 1.0, %v3512
    %v3514 = vtanh.pop %v3507
    %v3515 = vmul.f32 %v3513, %v3311
    %3517 = vrot.lane.b32.xlu0 %v3514, 64
    %v3518 = vpop.permute.xlu0 %3517
    %v3520 = vmul.f32 %v3513, %v3518
    %3522 = vrot.lane.b32.xlu0 %v3520, 32
    %v3523 = vpop.permute.xlu0 %3522
    %v3525 = vadd.f32 %v3515, %v3523
    %v3526 = vtanh.pop %v3525
    %3528 = vrot.lane.b32.xlu0 %v3526, 64
    %v3529 = vpop.permute.xlu0 %3528
    %v3531 = vmul.f32 %v3513, %v3529
    %v3533 = vcombine.high %v3531, %v3531
    %v3535 = vunpack.c.l.s4 1966171168
    %v3536 = vunpack.c.0.s8 %v3535
    %v3537 = vlaneseq
    %v3538 = vshrl.u32 %v3537, 7
    %v3539 = vsub.s32 %v3536, %v3538
    %v3540 = vrot.slane %v3531, %v3539
    %v3542 = vunpack.c.l.s4 1966171168
    %v3543 = vunpack.c.0.s8 %v3542
    %v3544 = vlaneseq
    %v3545 = vshrl.u32 %v3544, 7
    %v3546 = vsub.s32 %v3543, %v3545
    %v3547 = vrot.slane %v3533, %v3546
    %v3548 = vcombine.high %v3540, %v3540
    %v3549 = vcombine.high %v3547, %v3547
    %v3551 = vunpack.c.l.s4 1966171168
    %v3552 = vunpack.c.0.s8 %v3551
    %v3553 = vlaneseq
    %v3554 = vshrl.u32 %v3553, 7
    %v3555 = vsub.s32 %v3552, %v3554
    %v3556 = vrot.slane %v3540, %v3555
    %v3558 = vunpack.c.l.s4 1966171168
    %v3559 = vunpack.c.0.s8 %v3558
    %v3560 = vlaneseq
    %v3561 = vshrl.u32 %v3560, 7
    %v3562 = vsub.s32 %v3559, %v3561
    %v3563 = vrot.slane %v3547, %v3562
    %v3565 = vunpack.c.l.s4 1966171168
    %v3566 = vunpack.c.0.s8 %v3565
    %v3567 = vlaneseq
    %v3568 = vshrl.u32 %v3567, 7
    %v3569 = vsub.s32 %v3566, %v3568
    %v3570 = vrot.slane %v3548, %v3569
    %v3572 = vunpack.c.l.s4 1966171168
    %v3573 = vunpack.c.0.s8 %v3572
    %v3574 = vlaneseq
    %v3575 = vshrl.u32 %v3574, 7
    %v3576 = vsub.s32 %v3573, %v3575
    %v3577 = vrot.slane %v3549, %v3576
    %v3578 = vcombine.high %v3556, %v3556
    %v3579 = vcombine.high %v3563, %v3563
    %v3580 = vcombine.high %v3570, %v3570
    %v3581 = vcombine.high %v3577, %v3577
    %v3582 = vlaneseq
    %v3583 = vshrl.u32 %v3582, 7
    %v3584 = vsub.s32 0, %v3583
    %v3585 = vrot.slane %v3556, %v3584
    %v3586 = vlaneseq
    %v3587 = vshrl.u32 %v3586, 7
    %v3588 = vsub.s32 0, %v3587
    %v3589 = vrot.slane %v3570, %v3588
    %v3590 = vlaneseq
    %v3591 = vshrl.u32 %v3590, 7
    %v3592 = vsub.s32 0, %v3591
    %v3593 = vrot.slane %v3578, %v3592
    %v3594 = vlaneseq
    %v3595 = vshrl.u32 %v3594, 7
    %v3596 = vsub.s32 0, %v3595
    %v3597 = vrot.slane %v3580, %v3596
    %v3598 = vlaneseq
    %v3599 = vshrl.u32 %v3598, 7
    %v3600 = vsub.s32 0, %v3599
    %v3601 = vrot.slane %v3563, %v3600
    %v3602 = vlaneseq
    %v3603 = vshrl.u32 %v3602, 7
    %v3604 = vsub.s32 0, %v3603
    %v3605 = vrot.slane %v3577, %v3604
    %v3606 = vlaneseq
    %v3607 = vshrl.u32 %v3606, 7
    %v3608 = vsub.s32 0, %v3607
    %v3609 = vrot.slane %v3579, %v3608
    %v3610 = vlaneseq
    %v3611 = vshrl.u32 %v3610, 7
    %v3612 = vsub.s32 0, %v3611
    %v3613 = vrot.slane %v3581, %v3612
    %3614 = vrot.lane.b32.xlu0 %v3585, 32
    %v3615 = vpop.permute.xlu0 %3614
    %3616 = vrot.lane.b32.xlu0 %v3589, 32
    %v3617 = vpop.permute.xlu0 %3616
    %3618 = vrot.lane.b32.xlu0 %v3593, 32
    %v3619 = vpop.permute.xlu0 %3618
    %3620 = vrot.lane.b32.xlu0 %v3597, 32
    %v3621 = vpop.permute.xlu0 %3620
    %3622 = vrot.lane.b32.xlu0 %v3601, 32
    %v3623 = vpop.permute.xlu0 %3622
    %3624 = vrot.lane.b32.xlu0 %v3605, 32
    %v3625 = vpop.permute.xlu0 %3624
    %3626 = vrot.lane.b32.xlu0 %v3609, 32
    %v3627 = vpop.permute.xlu0 %3626
    %3628 = vrot.lane.b32.xlu0 %v3613, 32
    %v3629 = vpop.permute.xlu0 %3628
    %3638 = vst.msk [vmem:[#allocation3 + $0x7] sm:$0x1] %vm357, %v3615
    %3639 = vst.msk [vmem:[#allocation3 + $0xf] sm:$0x1] %vm357, %v3617
    %3640 = vst.msk [vmem:[#allocation3 + $0x17] sm:$0x1] %vm357, %v3619
    %3641 = vst.msk [vmem:[#allocation3 + $0x1f] sm:$0x1] %vm357, %v3621
    %3642 = vst.msk [vmem:[#allocation3 + $0x27] sm:$0x1] %vm357, %v3623
    %3643 = vst.msk [vmem:[#allocation3 + $0x2f] sm:$0x1] %vm357, %v3625
    %3644 = vst.msk [vmem:[#allocation3 + $0x37] sm:$0x1] %vm357, %v3627
    %3645 = vst.msk [vmem:[#allocation3 + $0x3f] sm:$0x1] %vm357, %v3629
    %v3646 = vld [vmem:[#allocation2] sm:$0xff]
    %v3647 = vld [vmem:[#allocation2 + $0x8] sm:$0xff]
    %v3648 = vld [vmem:[#allocation2 + $0x10] sm:$0xff]
    %v3649 = vld [vmem:[#allocation2 + $0x18] sm:$0xff]
    %v3650 = vld [vmem:[#allocation2 + $0x20] sm:$0xff]
    %v3651 = vld [vmem:[#allocation2 + $0x28] sm:$0xff]
    %v3652 = vld [vmem:[#allocation2 + $0x30] sm:$0xff]
    %v3653 = vld [vmem:[#allocation2 + $0x38] sm:$0xff]
    %v3654 = vld [vmem:[#allocation3] sm:$0xff]
    %v3655 = vld [vmem:[#allocation3 + $0x8] sm:$0xff]
    %v3656 = vld [vmem:[#allocation3 + $0x10] sm:$0xff]
    %v3657 = vld [vmem:[#allocation3 + $0x18] sm:$0xff]
    %v3658 = vld [vmem:[#allocation3 + $0x20] sm:$0xff]
    %v3659 = vld [vmem:[#allocation3 + $0x28] sm:$0xff]
    %v3660 = vld [vmem:[#allocation3 + $0x30] sm:$0xff]
    %v3661 = vld [vmem:[#allocation3 + $0x38] sm:$0xff]
    %v3662 = vld [vmem:[#allocation10] sm:$0xff]
    %v3663 = vld [vmem:[#allocation10 + $0x8] sm:$0xff]
    %v3664 = vld [vmem:[#allocation10 + $0x10] sm:$0xff]
    %v3665 = vld [vmem:[#allocation10 + $0x18] sm:$0xff]
    %v3667 = vsel %vm144, %v3646, 0
    %v3670 = vsel %vm144, %v3647, 0
    %v3673 = vsel %vm144, %v3648, 0
    %v3676 = vsel %vm144, %v3649, 0
    %v3679 = vsel %vm144, %v3650, 0
    %v3682 = vsel %vm144, %v3651, 0
    %v3685 = vsel %vm144, %v3652, 0
    %v3688 = vsel %vm144, %v3653, 0
    %3690 = vmatprep.subr.mxu0 0.0
    %3691 = vmatpush1.msra.mxu0 0.0
    %3692 = vmatprep.subr.mxu0 0.0
    %3693 = vmatpush1.msra.mxu0 0.0
    %3694 = vmatprep.subr.mxu0 0.0
    %3695 = vmatpush1.msra.mxu0 0.0
    %3696 = vmatprep.subr.mxu0 0.0
    %3697 = vmatpush1.msra.mxu0 0.0
    %3698 = vmatprep.subr.mxu0 0.0
    %3699 = vmatpush1.msra.mxu0 0.0
    %3700 = vmatprep.subr.mxu0 0.0
    %3701 = vmatpush1.msra.mxu0 0.0
    %3702 = vmatprep.subr.mxu0 0.0
    %3703 = vmatpush1.msra.mxu0 0.0
    %3704 = vmatprep.subr.mxu0 0.0
    %3705 = vmatpush1.msra.mxu0 0.0
    %3706 = vmatprep.subr.mxu0 0.0
    %3707 = vmatpush1.msra.mxu0 0.0
    %3708 = vmatprep.subr.mxu0 0.0
    %3709 = vmatpush1.msra.mxu0 0.0
    %3710 = vmatprep.subr.mxu0 0.0
    %3711 = vmatpush1.msra.mxu0 0.0
    %3712 = vmatprep.subr.mxu0 0.0
    %3713 = vmatpush1.msra.mxu0 0.0
    %3714 = vmatprep.subr.mxu0 0.0
    %3715 = vmatpush1.msra.mxu0 %v3665
    %3716 = vmatprep.subr.mxu0 0.0
    %3717 = vmatpush1.msra.mxu0 %v3664
    %3718 = vmatprep.subr.mxu0 0.0
    %3719 = vmatpush1.msra.mxu0 %v3663
    %3720 = vmatprep.subr.mxu0 0.0
    %3721 = vmatpush1.msra.mxu0 %v3662
    %3722 = vmatprep.subr.mxu0 0.0
    %3723 = vmatpush2.msra.mxu0 0.0
    %3724 = vmatprep.subr.mxu0 0.0
    %3725 = vmatpush2.msra.mxu0 0.0
    %3726 = vmatprep.subr.mxu0 0.0
    %3727 = vmatpush2.msra.mxu0 0.0
    %3728 = vmatprep.subr.mxu0 0.0
    %3729 = vmatpush2.msra.mxu0 0.0
    %3730 = vmatprep.subr.mxu0 0.0
    %3731 = vmatpush2.msra.mxu0 0.0
    %3732 = vmatprep.subr.mxu0 0.0
    %3733 = vmatpush2.msra.mxu0 0.0
    %3734 = vmatprep.subr.mxu0 0.0
    %3735 = vmatpush2.msra.mxu0 0.0
    %3736 = vmatprep.subr.mxu0 0.0
    %3737 = vmatpush2.msra.mxu0 0.0
    %3738 = vmatprep.subr.mxu0 0.0
    %3739 = vmatpush2.msra.mxu0 0.0
    %3740 = vmatprep.subr.mxu0 0.0
    %3741 = vmatpush2.msra.mxu0 0.0
    %3742 = vmatprep.subr.mxu0 0.0
    %3743 = vmatpush2.msra.mxu0 0.0
    %3744 = vmatprep.subr.mxu0 0.0
    %3745 = vmatpush2.msra.mxu0 0.0
    %3746 = vmatprep.subr.mxu0 0.0
    %3747 = vmatpush2.msra.mxu0 0.0
    %3748 = vmatprep.subr.mxu0 0.0
    %3749 = vmatpush2.msra.mxu0 0.0
    %3750 = vmatprep.subr.mxu0 0.0
    %3751 = vmatpush2.msra.mxu0 0.0
    %3752 = vmatprep.subr.mxu0 0.0
    %3753 = vmatpush2.msra.mxu0 0.0
    %3754 = vmatprep.mubr.f32.mxu0 0.0
    %3755 = vmatmul.mubr.f32.gmra.mxu0 %v3667
    %v3756 = vpop.f32.mrf.mxu0
    %v3757 = vadd.f32 0.0, %v3756
    %v3758 = vpop.f32.mrf.mxu0
    %3759 = vmatprep.mubr.f32.mxu0 0.0
    %3760 = vmatmul.mubr.f32.gmra.mxu0 %v3670
    %v3761 = vpop.f32.mrf.mxu0
    %v3762 = vadd.f32 0.0, %v3761
    %v3763 = vpop.f32.mrf.mxu0
    %3764 = vmatprep.mubr.f32.mxu0 0.0
    %3765 = vmatmul.mubr.f32.gmra.mxu0 %v3673
    %v3766 = vpop.f32.mrf.mxu0
    %v3767 = vadd.f32 0.0, %v3766
    %v3768 = vpop.f32.mrf.mxu0
    %3769 = vmatprep.mubr.f32.mxu0 0.0
    %3770 = vmatmul.mubr.f32.gmra.mxu0 %v3676
    %v3771 = vpop.f32.mrf.mxu0
    %v3772 = vadd.f32 0.0, %v3771
    %v3773 = vpop.f32.mrf.mxu0
    %3774 = vmatprep.mubr.f32.mxu0 0.0
    %3775 = vmatmul.mubr.f32.gmra.mxu0 %v3679
    %v3776 = vpop.f32.mrf.mxu0
    %v3777 = vadd.f32 0.0, %v3776
    %v3778 = vpop.f32.mrf.mxu0
    %3779 = vmatprep.mubr.f32.mxu0 0.0
    %3780 = vmatmul.mubr.f32.gmra.mxu0 %v3682
    %v3781 = vpop.f32.mrf.mxu0
    %v3782 = vadd.f32 0.0, %v3781
    %v3783 = vpop.f32.mrf.mxu0
    %3784 = vmatprep.mubr.f32.mxu0 0.0
    %3785 = vmatmul.mubr.f32.gmra.mxu0 %v3685
    %v3786 = vpop.f32.mrf.mxu0
    %v3787 = vadd.f32 0.0, %v3786
    %v3788 = vpop.f32.mrf.mxu0
    %3789 = vmatprep.mubr.f32.mxu0 0.0
    %3790 = vmatmul.mubr.f32.gmra.mxu0 %v3688
    %v3791 = vpop.f32.mrf.mxu0
    %v3792 = vadd.f32 0.0, %v3791
    %v3793 = vpop.f32.mrf.mxu0
    %3794 = vdwg.mxu0
    %v3795 = vlaneseq
    %v3796 = vand.u32 %v3795, 127
    %3797 = vset.pattern.permute.xlu0 0
    %3798 = vperm.xlu0 %3797, %v134
    %v3799 = vpop.permute.xlu0 %3798
    %vm3800 = vcmp.lt.s32.totalorder %v3796, %v3799
    %v3801 = vsel %vm3800, 0.0, -1e+09
    %v3803 = vcombine.high %v3801, %v3801
    %v3805 = vunpack.c.l.s4 1966171168
    %v3806 = vunpack.c.0.s8 %v3805
    %v3807 = vlaneseq
    %v3808 = vshrl.u32 %v3807, 7
    %v3809 = vsub.s32 %v3806, %v3808
    %v3810 = vrot.slane %v3801, %v3809
    %v3812 = vunpack.c.l.s4 1966171168
    %v3813 = vunpack.c.0.s8 %v3812
    %v3814 = vlaneseq
    %v3815 = vshrl.u32 %v3814, 7
    %v3816 = vsub.s32 %v3813, %v3815
    %v3817 = vrot.slane %v3803, %v3816
    %v3818 = vcombine.high %v3810, %v3810
    %v3819 = vcombine.high %v3817, %v3817
    %v3821 = vunpack.c.l.s4 1966171168
    %v3822 = vunpack.c.0.s8 %v3821
    %v3823 = vlaneseq
    %v3824 = vshrl.u32 %v3823, 7
    %v3825 = vsub.s32 %v3822, %v3824
    %v3826 = vrot.slane %v3810, %v3825
    %v3828 = vunpack.c.l.s4 1966171168
    %v3829 = vunpack.c.0.s8 %v3828
    %v3830 = vlaneseq
    %v3831 = vshrl.u32 %v3830, 7
    %v3832 = vsub.s32 %v3829, %v3831
    %v3833 = vrot.slane %v3817, %v3832
    %v3835 = vunpack.c.l.s4 1966171168
    %v3836 = vunpack.c.0.s8 %v3835
    %v3837 = vlaneseq
    %v3838 = vshrl.u32 %v3837, 7
    %v3839 = vsub.s32 %v3836, %v3838
    %v3840 = vrot.slane %v3818, %v3839
    %v3842 = vunpack.c.l.s4 1966171168
    %v3843 = vunpack.c.0.s8 %v3842
    %v3844 = vlaneseq
    %v3845 = vshrl.u32 %v3844, 7
    %v3846 = vsub.s32 %v3843, %v3845
    %v3847 = vrot.slane %v3819, %v3846
    %v3848 = vcombine.high %v3826, %v3826
    %v3849 = vcombine.high %v3833, %v3833
    %v3850 = vcombine.high %v3840, %v3840
    %v3851 = vcombine.high %v3847, %v3847
    %v3852 = vlaneseq
    %v3853 = vshrl.u32 %v3852, 7
    %v3854 = vsub.s32 0, %v3853
    %v3855 = vrot.slane %v3826, %v3854
    %v3856 = vlaneseq
    %v3857 = vshrl.u32 %v3856, 7
    %v3858 = vsub.s32 0, %v3857
    %v3859 = vrot.slane %v3840, %v3858
    %v3860 = vlaneseq
    %v3861 = vshrl.u32 %v3860, 7
    %v3862 = vsub.s32 0, %v3861
    %v3863 = vrot.slane %v3848, %v3862
    %v3864 = vlaneseq
    %v3865 = vshrl.u32 %v3864, 7
    %v3866 = vsub.s32 0, %v3865
    %v3867 = vrot.slane %v3850, %v3866
    %v3868 = vlaneseq
    %v3869 = vshrl.u32 %v3868, 7
    %v3870 = vsub.s32 0, %v3869
    %v3871 = vrot.slane %v3833, %v3870
    %v3872 = vlaneseq
    %v3873 = vshrl.u32 %v3872, 7
    %v3874 = vsub.s32 0, %v3873
    %v3875 = vrot.slane %v3847, %v3874
    %v3876 = vlaneseq
    %v3877 = vshrl.u32 %v3876, 7
    %v3878 = vsub.s32 0, %v3877
    %v3879 = vrot.slane %v3849, %v3878
    %v3880 = vlaneseq
    %v3881 = vshrl.u32 %v3880, 7
    %v3882 = vsub.s32 0, %v3881
    %v3883 = vrot.slane %v3851, %v3882
    %v3893 = vsel %vm144, %v3654, 0
    %v3896 = vsel %vm144, %v3757, 0
    %3898 = vmatprep.subr.mxu0 0.0
    %3899 = vmatpush1.xpose.msra.mxu0 0.0
    %3900 = vmatprep.subr.mxu0 0.0
    %3901 = vmatpush1.xpose.msra.mxu0 0.0
    %3902 = vmatprep.subr.mxu0 0.0
    %3903 = vmatpush1.xpose.msra.mxu0 0.0
    %3904 = vmatprep.subr.mxu0 0.0
    %3905 = vmatpush1.xpose.msra.mxu0 0.0
    %3906 = vmatprep.subr.mxu0 0.0
    %3907 = vmatpush1.xpose.msra.mxu0 0.0
    %3908 = vmatprep.subr.mxu0 0.0
    %3909 = vmatpush1.xpose.msra.mxu0 0.0
    %3910 = vmatprep.subr.mxu0 0.0
    %3911 = vmatpush1.xpose.msra.mxu0 0.0
    %3912 = vmatprep.subr.mxu0 0.0
    %3913 = vmatpush1.xpose.msra.mxu0 0.0
    %3914 = vmatprep.subr.mxu0 0.0
    %3915 = vmatpush1.xpose.msra.mxu0 0.0
    %3916 = vmatprep.subr.mxu0 0.0
    %3917 = vmatpush1.xpose.msra.mxu0 0.0
    %3918 = vmatprep.subr.mxu0 0.0
    %3919 = vmatpush1.xpose.msra.mxu0 0.0
    %3920 = vmatprep.subr.mxu0 0.0
    %3921 = vmatpush1.xpose.msra.mxu0 0.0
    %3922 = vmatprep.subr.mxu0 0.0
    %3923 = vmatpush1.xpose.msra.mxu0 0.0
    %3924 = vmatprep.subr.mxu0 0.0
    %3925 = vmatpush1.xpose.msra.mxu0 0.0
    %3926 = vmatprep.subr.mxu0 0.0
    %3927 = vmatpush1.xpose.msra.mxu0 0.0
    %3928 = vmatprep.subr.mxu0 0.0
    %3929 = vmatpush1.xpose.msra.mxu0 %v3896
    %3930 = vmatprep.subr.mxu0 0.0
    %3931 = vmatpush2.xpose.msra.mxu0 0.0
    %3932 = vmatprep.subr.mxu0 0.0
    %3933 = vmatpush2.xpose.msra.mxu0 0.0
    %3934 = vmatprep.subr.mxu0 0.0
    %3935 = vmatpush2.xpose.msra.mxu0 0.0
    %3936 = vmatprep.subr.mxu0 0.0
    %3937 = vmatpush2.xpose.msra.mxu0 0.0
    %3938 = vmatprep.subr.mxu0 0.0
    %3939 = vmatpush2.xpose.msra.mxu0 0.0
    %3940 = vmatprep.subr.mxu0 0.0
    %3941 = vmatpush2.xpose.msra.mxu0 0.0
    %3942 = vmatprep.subr.mxu0 0.0
    %3943 = vmatpush2.xpose.msra.mxu0 0.0
    %3944 = vmatprep.subr.mxu0 0.0
    %3945 = vmatpush2.xpose.msra.mxu0 0.0
    %3946 = vmatprep.subr.mxu0 0.0
    %3947 = vmatpush2.xpose.msra.mxu0 0.0
    %3948 = vmatprep.subr.mxu0 0.0
    %3949 = vmatpush2.xpose.msra.mxu0 0.0
    %3950 = vmatprep.subr.mxu0 0.0
    %3951 = vmatpush2.xpose.msra.mxu0 0.0
    %3952 = vmatprep.subr.mxu0 0.0
    %3953 = vmatpush2.xpose.msra.mxu0 0.0
    %3954 = vmatprep.subr.mxu0 0.0
    %3955 = vmatpush2.xpose.msra.mxu0 0.0
    %3956 = vmatprep.subr.mxu0 0.0
    %3957 = vmatpush2.xpose.msra.mxu0 0.0
    %3958 = vmatprep.subr.mxu0 0.0
    %3959 = vmatpush2.xpose.msra.mxu0 0.0
    %3960 = vmatprep.subr.mxu0 0.0
    %3961 = vmatpush2.xpose.msra.mxu0 0.0
    %3962 = vmatprep.mubr.f32.mxu0 0.0
    %3963 = vmatmul.mubr.f32.gmra.mxu0 %v3893
    %v3964 = vpop.f32.mrf.mxu0
    %v3965 = vadd.f32 %v3855, %v3964
    %v3966 = vpop.f32.mrf.mxu0
    %3967 = vdwg.mxu0
    %v3969 = vsel %vm144, %v3655, 0
    %v3972 = vsel %vm144, %v3762, 0
    %3974 = vmatprep.subr.mxu0 0.0
    %3975 = vmatpush1.xpose.msra.mxu0 0.0
    %3976 = vmatprep.subr.mxu0 0.0
    %3977 = vmatpush1.xpose.msra.mxu0 0.0
    %3978 = vmatprep.subr.mxu0 0.0
    %3979 = vmatpush1.xpose.msra.mxu0 0.0
    %3980 = vmatprep.subr.mxu0 0.0
    %3981 = vmatpush1.xpose.msra.mxu0 0.0
    %3982 = vmatprep.subr.mxu0 0.0
    %3983 = vmatpush1.xpose.msra.mxu0 0.0
    %3984 = vmatprep.subr.mxu0 0.0
    %3985 = vmatpush1.xpose.msra.mxu0 0.0
    %3986 = vmatprep.subr.mxu0 0.0
    %3987 = vmatpush1.xpose.msra.mxu0 0.0
    %3988 = vmatprep.subr.mxu0 0.0
    %3989 = vmatpush1.xpose.msra.mxu0 0.0
    %3990 = vmatprep.subr.mxu0 0.0
    %3991 = vmatpush1.xpose.msra.mxu0 0.0
    %3992 = vmatprep.subr.mxu0 0.0
    %3993 = vmatpush1.xpose.msra.mxu0 0.0
    %3994 = vmatprep.subr.mxu0 0.0
    %3995 = vmatpush1.xpose.msra.mxu0 0.0
    %3996 = vmatprep.subr.mxu0 0.0
    %3997 = vmatpush1.xpose.msra.mxu0 0.0
    %3998 = vmatprep.subr.mxu0 0.0
    %3999 = vmatpush1.xpose.msra.mxu0 0.0
    %4000 = vmatprep.subr.mxu0 0.0
    %4001 = vmatpush1.xpose.msra.mxu0 0.0
    %4002 = vmatprep.subr.mxu0 0.0
    %4003 = vmatpush1.xpose.msra.mxu0 0.0
    %4004 = vmatprep.subr.mxu0 0.0
    %4005 = vmatpush1.xpose.msra.mxu0 %v3972
    %4006 = vmatprep.subr.mxu0 0.0
    %4007 = vmatpush2.xpose.msra.mxu0 0.0
    %4008 = vmatprep.subr.mxu0 0.0
    %4009 = vmatpush2.xpose.msra.mxu0 0.0
    %4010 = vmatprep.subr.mxu0 0.0
    %4011 = vmatpush2.xpose.msra.mxu0 0.0
    %4012 = vmatprep.subr.mxu0 0.0
    %4013 = vmatpush2.xpose.msra.mxu0 0.0
    %4014 = vmatprep.subr.mxu0 0.0
    %4015 = vmatpush2.xpose.msra.mxu0 0.0
    %4016 = vmatprep.subr.mxu0 0.0
    %4017 = vmatpush2.xpose.msra.mxu0 0.0
    %4018 = vmatprep.subr.mxu0 0.0
    %4019 = vmatpush2.xpose.msra.mxu0 0.0
    %4020 = vmatprep.subr.mxu0 0.0
    %4021 = vmatpush2.xpose.msra.mxu0 0.0
    %4022 = vmatprep.subr.mxu0 0.0
    %4023 = vmatpush2.xpose.msra.mxu0 0.0
    %4024 = vmatprep.subr.mxu0 0.0
    %4025 = vmatpush2.xpose.msra.mxu0 0.0
    %4026 = vmatprep.subr.mxu0 0.0
    %4027 = vmatpush2.xpose.msra.mxu0 0.0
    %4028 = vmatprep.subr.mxu0 0.0
    %4029 = vmatpush2.xpose.msra.mxu0 0.0
    %4030 = vmatprep.subr.mxu0 0.0
    %4031 = vmatpush2.xpose.msra.mxu0 0.0
    %4032 = vmatprep.subr.mxu0 0.0
    %4033 = vmatpush2.xpose.msra.mxu0 0.0
    %4034 = vmatprep.subr.mxu0 0.0
    %4035 = vmatpush2.xpose.msra.mxu0 0.0
    %4036 = vmatprep.subr.mxu0 0.0
    %4037 = vmatpush2.xpose.msra.mxu0 0.0
    %4038 = vmatprep.mubr.f32.mxu0 0.0
    %4039 = vmatmul.mubr.f32.gmra.mxu0 %v3969
    %v4040 = vpop.f32.mrf.mxu0
    %v4041 = vadd.f32 %v3859, %v4040
    %v4042 = vpop.f32.mrf.mxu0
    %4043 = vdwg.mxu0
    %v4045 = vsel %vm144, %v3656, 0
    %v4048 = vsel %vm144, %v3767, 0
    %4050 = vmatprep.subr.mxu0 0.0
    %4051 = vmatpush1.xpose.msra.mxu0 0.0
    %4052 = vmatprep.subr.mxu0 0.0
    %4053 = vmatpush1.xpose.msra.mxu0 0.0
    %4054 = vmatprep.subr.mxu0 0.0
    %4055 = vmatpush1.xpose.msra.mxu0 0.0
    %4056 = vmatprep.subr.mxu0 0.0
    %4057 = vmatpush1.xpose.msra.mxu0 0.0
    %4058 = vmatprep.subr.mxu0 0.0
    %4059 = vmatpush1.xpose.msra.mxu0 0.0
    %4060 = vmatprep.subr.mxu0 0.0
    %4061 = vmatpush1.xpose.msra.mxu0 0.0
    %4062 = vmatprep.subr.mxu0 0.0
    %4063 = vmatpush1.xpose.msra.mxu0 0.0
    %4064 = vmatprep.subr.mxu0 0.0
    %4065 = vmatpush1.xpose.msra.mxu0 0.0
    %4066 = vmatprep.subr.mxu0 0.0
    %4067 = vmatpush1.xpose.msra.mxu0 0.0
    %4068 = vmatprep.subr.mxu0 0.0
    %4069 = vmatpush1.xpose.msra.mxu0 0.0
    %4070 = vmatprep.subr.mxu0 0.0
    %4071 = vmatpush1.xpose.msra.mxu0 0.0
    %4072 = vmatprep.subr.mxu0 0.0
    %4073 = vmatpush1.xpose.msra.mxu0 0.0
    %4074 = vmatprep.subr.mxu0 0.0
    %4075 = vmatpush1.xpose.msra.mxu0 0.0
    %4076 = vmatprep.subr.mxu0 0.0
    %4077 = vmatpush1.xpose.msra.mxu0 0.0
    %4078 = vmatprep.subr.mxu0 0.0
    %4079 = vmatpush1.xpose.msra.mxu0 0.0
    %4080 = vmatprep.subr.mxu0 0.0
    %4081 = vmatpush1.xpose.msra.mxu0 %v4048
    %4082 = vmatprep.subr.mxu0 0.0
    %4083 = vmatpush2.xpose.msra.mxu0 0.0
    %4084 = vmatprep.subr.mxu0 0.0
    %4085 = vmatpush2.xpose.msra.mxu0 0.0
    %4086 = vmatprep.subr.mxu0 0.0
    %4087 = vmatpush2.xpose.msra.mxu0 0.0
    %4088 = vmatprep.subr.mxu0 0.0
    %4089 = vmatpush2.xpose.msra.mxu0 0.0
    %4090 = vmatprep.subr.mxu0 0.0
    %4091 = vmatpush2.xpose.msra.mxu0 0.0
    %4092 = vmatprep.subr.mxu0 0.0
    %4093 = vmatpush2.xpose.msra.mxu0 0.0
    %4094 = vmatprep.subr.mxu0 0.0
    %4095 = vmatpush2.xpose.msra.mxu0 0.0
    %4096 = vmatprep.subr.mxu0 0.0
    %4097 = vmatpush2.xpose.msra.mxu0 0.0
    %4098 = vmatprep.subr.mxu0 0.0
    %4099 = vmatpush2.xpose.msra.mxu0 0.0
    %4100 = vmatprep.subr.mxu0 0.0
    %4101 = vmatpush2.xpose.msra.mxu0 0.0
    %4102 = vmatprep.subr.mxu0 0.0
    %4103 = vmatpush2.xpose.msra.mxu0 0.0
    %4104 = vmatprep.subr.mxu0 0.0
    %4105 = vmatpush2.xpose.msra.mxu0 0.0
    %4106 = vmatprep.subr.mxu0 0.0
    %4107 = vmatpush2.xpose.msra.mxu0 0.0
    %4108 = vmatprep.subr.mxu0 0.0
    %4109 = vmatpush2.xpose.msra.mxu0 0.0
    %4110 = vmatprep.subr.mxu0 0.0
    %4111 = vmatpush2.xpose.msra.mxu0 0.0
    %4112 = vmatprep.subr.mxu0 0.0
    %4113 = vmatpush2.xpose.msra.mxu0 0.0
    %4114 = vmatprep.mubr.f32.mxu0 0.0
    %4115 = vmatmul.mubr.f32.gmra.mxu0 %v4045
    %v4116 = vpop.f32.mrf.mxu0
    %v4117 = vadd.f32 %v3863, %v4116
    %v4118 = vpop.f32.mrf.mxu0
    %4119 = vdwg.mxu0
    %v4121 = vsel %vm144, %v3657, 0
    %v4124 = vsel %vm144, %v3772, 0
    %4126 = vmatprep.subr.mxu0 0.0
    %4127 = vmatpush1.xpose.msra.mxu0 0.0
    %4128 = vmatprep.subr.mxu0 0.0
    %4129 = vmatpush1.xpose.msra.mxu0 0.0
    %4130 = vmatprep.subr.mxu0 0.0
    %4131 = vmatpush1.xpose.msra.mxu0 0.0
    %4132 = vmatprep.subr.mxu0 0.0
    %4133 = vmatpush1.xpose.msra.mxu0 0.0
    %4134 = vmatprep.subr.mxu0 0.0
    %4135 = vmatpush1.xpose.msra.mxu0 0.0
    %4136 = vmatprep.subr.mxu0 0.0
    %4137 = vmatpush1.xpose.msra.mxu0 0.0
    %4138 = vmatprep.subr.mxu0 0.0
    %4139 = vmatpush1.xpose.msra.mxu0 0.0
    %4140 = vmatprep.subr.mxu0 0.0
    %4141 = vmatpush1.xpose.msra.mxu0 0.0
    %4142 = vmatprep.subr.mxu0 0.0
    %4143 = vmatpush1.xpose.msra.mxu0 0.0
    %4144 = vmatprep.subr.mxu0 0.0
    %4145 = vmatpush1.xpose.msra.mxu0 0.0
    %4146 = vmatprep.subr.mxu0 0.0
    %4147 = vmatpush1.xpose.msra.mxu0 0.0
    %4148 = vmatprep.subr.mxu0 0.0
    %4149 = vmatpush1.xpose.msra.mxu0 0.0
    %4150 = vmatprep.subr.mxu0 0.0
    %4151 = vmatpush1.xpose.msra.mxu0 0.0
    %4152 = vmatprep.subr.mxu0 0.0
    %4153 = vmatpush1.xpose.msra.mxu0 0.0
    %4154 = vmatprep.subr.mxu0 0.0
    %4155 = vmatpush1.xpose.msra.mxu0 0.0
    %4156 = vmatprep.subr.mxu0 0.0
    %4157 = vmatpush1.xpose.msra.mxu0 %v4124
    %4158 = vmatprep.subr.mxu0 0.0
    %4159 = vmatpush2.xpose.msra.mxu0 0.0
    %4160 = vmatprep.subr.mxu0 0.0
    %4161 = vmatpush2.xpose.msra.mxu0 0.0
    %4162 = vmatprep.subr.mxu0 0.0
    %4163 = vmatpush2.xpose.msra.mxu0 0.0
    %4164 = vmatprep.subr.mxu0 0.0
    %4165 = vmatpush2.xpose.msra.mxu0 0.0
    %4166 = vmatprep.subr.mxu0 0.0
    %4167 = vmatpush2.xpose.msra.mxu0 0.0
    %4168 = vmatprep.subr.mxu0 0.0
    %4169 = vmatpush2.xpose.msra.mxu0 0.0
    %4170 = vmatprep.subr.mxu0 0.0
    %4171 = vmatpush2.xpose.msra.mxu0 0.0
    %4172 = vmatprep.subr.mxu0 0.0
    %4173 = vmatpush2.xpose.msra.mxu0 0.0
    %4174 = vmatprep.subr.mxu0 0.0
    %4175 = vmatpush2.xpose.msra.mxu0 0.0
    %4176 = vmatprep.subr.mxu0 0.0
    %4177 = vmatpush2.xpose.msra.mxu0 0.0
    %4178 = vmatprep.subr.mxu0 0.0
    %4179 = vmatpush2.xpose.msra.mxu0 0.0
    %4180 = vmatprep.subr.mxu0 0.0
    %4181 = vmatpush2.xpose.msra.mxu0 0.0
    %4182 = vmatprep.subr.mxu0 0.0
    %4183 = vmatpush2.xpose.msra.mxu0 0.0
    %4184 = vmatprep.subr.mxu0 0.0
    %4185 = vmatpush2.xpose.msra.mxu0 0.0
    %4186 = vmatprep.subr.mxu0 0.0
    %4187 = vmatpush2.xpose.msra.mxu0 0.0
    %4188 = vmatprep.subr.mxu0 0.0
    %4189 = vmatpush2.xpose.msra.mxu0 0.0
    %4190 = vmatprep.mubr.f32.mxu0 0.0
    %4191 = vmatmul.mubr.f32.gmra.mxu0 %v4121
    %v4192 = vpop.f32.mrf.mxu0
    %v4193 = vadd.f32 %v3867, %v4192
    %v4194 = vpop.f32.mrf.mxu0
    %4195 = vdwg.mxu0
    %v4197 = vsel %vm144, %v3658, 0
    %v4200 = vsel %vm144, %v3777, 0
    %4202 = vmatprep.subr.mxu0 0.0
    %4203 = vmatpush1.xpose.msra.mxu0 0.0
    %4204 = vmatprep.subr.mxu0 0.0
    %4205 = vmatpush1.xpose.msra.mxu0 0.0
    %4206 = vmatprep.subr.mxu0 0.0
    %4207 = vmatpush1.xpose.msra.mxu0 0.0
    %4208 = vmatprep.subr.mxu0 0.0
    %4209 = vmatpush1.xpose.msra.mxu0 0.0
    %4210 = vmatprep.subr.mxu0 0.0
    %4211 = vmatpush1.xpose.msra.mxu0 0.0
    %4212 = vmatprep.subr.mxu0 0.0
    %4213 = vmatpush1.xpose.msra.mxu0 0.0
    %4214 = vmatprep.subr.mxu0 0.0
    %4215 = vmatpush1.xpose.msra.mxu0 0.0
    %4216 = vmatprep.subr.mxu0 0.0
    %4217 = vmatpush1.xpose.msra.mxu0 0.0
    %4218 = vmatprep.subr.mxu0 0.0
    %4219 = vmatpush1.xpose.msra.mxu0 0.0
    %4220 = vmatprep.subr.mxu0 0.0
    %4221 = vmatpush1.xpose.msra.mxu0 0.0
    %4222 = vmatprep.subr.mxu0 0.0
    %4223 = vmatpush1.xpose.msra.mxu0 0.0
    %4224 = vmatprep.subr.mxu0 0.0
    %4225 = vmatpush1.xpose.msra.mxu0 0.0
    %4226 = vmatprep.subr.mxu0 0.0
    %4227 = vmatpush1.xpose.msra.mxu0 0.0
    %4228 = vmatprep.subr.mxu0 0.0
    %4229 = vmatpush1.xpose.msra.mxu0 0.0
    %4230 = vmatprep.subr.mxu0 0.0
    %4231 = vmatpush1.xpose.msra.mxu0 0.0
    %4232 = vmatprep.subr.mxu0 0.0
    %4233 = vmatpush1.xpose.msra.mxu0 %v4200
    %4234 = vmatprep.subr.mxu0 0.0
    %4235 = vmatpush2.xpose.msra.mxu0 0.0
    %4236 = vmatprep.subr.mxu0 0.0
    %4237 = vmatpush2.xpose.msra.mxu0 0.0
    %4238 = vmatprep.subr.mxu0 0.0
    %4239 = vmatpush2.xpose.msra.mxu0 0.0
    %4240 = vmatprep.subr.mxu0 0.0
    %4241 = vmatpush2.xpose.msra.mxu0 0.0
    %4242 = vmatprep.subr.mxu0 0.0
    %4243 = vmatpush2.xpose.msra.mxu0 0.0
    %4244 = vmatprep.subr.mxu0 0.0
    %4245 = vmatpush2.xpose.msra.mxu0 0.0
    %4246 = vmatprep.subr.mxu0 0.0
    %4247 = vmatpush2.xpose.msra.mxu0 0.0
    %4248 = vmatprep.subr.mxu0 0.0
    %4249 = vmatpush2.xpose.msra.mxu0 0.0
    %4250 = vmatprep.subr.mxu0 0.0
    %4251 = vmatpush2.xpose.msra.mxu0 0.0
    %4252 = vmatprep.subr.mxu0 0.0
    %4253 = vmatpush2.xpose.msra.mxu0 0.0
    %4254 = vmatprep.subr.mxu0 0.0
    %4255 = vmatpush2.xpose.msra.mxu0 0.0
    %4256 = vmatprep.subr.mxu0 0.0
    %4257 = vmatpush2.xpose.msra.mxu0 0.0
    %4258 = vmatprep.subr.mxu0 0.0
    %4259 = vmatpush2.xpose.msra.mxu0 0.0
    %4260 = vmatprep.subr.mxu0 0.0
    %4261 = vmatpush2.xpose.msra.mxu0 0.0
    %4262 = vmatprep.subr.mxu0 0.0
    %4263 = vmatpush2.xpose.msra.mxu0 0.0
    %4264 = vmatprep.subr.mxu0 0.0
    %4265 = vmatpush2.xpose.msra.mxu0 0.0
    %4266 = vmatprep.mubr.f32.mxu0 0.0
    %4267 = vmatmul.mubr.f32.gmra.mxu0 %v4197
    %v4268 = vpop.f32.mrf.mxu0
    %v4269 = vadd.f32 %v3871, %v4268
    %v4270 = vpop.f32.mrf.mxu0
    %4271 = vdwg.mxu0
    %v4273 = vsel %vm144, %v3659, 0
    %v4276 = vsel %vm144, %v3782, 0
    %4278 = vmatprep.subr.mxu0 0.0
    %4279 = vmatpush1.xpose.msra.mxu0 0.0
    %4280 = vmatprep.subr.mxu0 0.0
    %4281 = vmatpush1.xpose.msra.mxu0 0.0
    %4282 = vmatprep.subr.mxu0 0.0
    %4283 = vmatpush1.xpose.msra.mxu0 0.0
    %4284 = vmatprep.subr.mxu0 0.0
    %4285 = vmatpush1.xpose.msra.mxu0 0.0
    %4286 = vmatprep.subr.mxu0 0.0
    %4287 = vmatpush1.xpose.msra.mxu0 0.0
    %4288 = vmatprep.subr.mxu0 0.0
    %4289 = vmatpush1.xpose.msra.mxu0 0.0
    %4290 = vmatprep.subr.mxu0 0.0
    %4291 = vmatpush1.xpose.msra.mxu0 0.0
    %4292 = vmatprep.subr.mxu0 0.0
    %4293 = vmatpush1.xpose.msra.mxu0 0.0
    %4294 = vmatprep.subr.mxu0 0.0
    %4295 = vmatpush1.xpose.msra.mxu0 0.0
    %4296 = vmatprep.subr.mxu0 0.0
    %4297 = vmatpush1.xpose.msra.mxu0 0.0
    %4298 = vmatprep.subr.mxu0 0.0
    %4299 = vmatpush1.xpose.msra.mxu0 0.0
    %4300 = vmatprep.subr.mxu0 0.0
    %4301 = vmatpush1.xpose.msra.mxu0 0.0
    %4302 = vmatprep.subr.mxu0 0.0
    %4303 = vmatpush1.xpose.msra.mxu0 0.0
    %4304 = vmatprep.subr.mxu0 0.0
    %4305 = vmatpush1.xpose.msra.mxu0 0.0
    %4306 = vmatprep.subr.mxu0 0.0
    %4307 = vmatpush1.xpose.msra.mxu0 0.0
    %4308 = vmatprep.subr.mxu0 0.0
    %4309 = vmatpush1.xpose.msra.mxu0 %v4276
    %4310 = vmatprep.subr.mxu0 0.0
    %4311 = vmatpush2.xpose.msra.mxu0 0.0
    %4312 = vmatprep.subr.mxu0 0.0
    %4313 = vmatpush2.xpose.msra.mxu0 0.0
    %4314 = vmatprep.subr.mxu0 0.0
    %4315 = vmatpush2.xpose.msra.mxu0 0.0
    %4316 = vmatprep.subr.mxu0 0.0
    %4317 = vmatpush2.xpose.msra.mxu0 0.0
    %4318 = vmatprep.subr.mxu0 0.0
    %4319 = vmatpush2.xpose.msra.mxu0 0.0
    %4320 = vmatprep.subr.mxu0 0.0
    %4321 = vmatpush2.xpose.msra.mxu0 0.0
    %4322 = vmatprep.subr.mxu0 0.0
    %4323 = vmatpush2.xpose.msra.mxu0 0.0
    %4324 = vmatprep.subr.mxu0 0.0
    %4325 = vmatpush2.xpose.msra.mxu0 0.0
    %4326 = vmatprep.subr.mxu0 0.0
    %4327 = vmatpush2.xpose.msra.mxu0 0.0
    %4328 = vmatprep.subr.mxu0 0.0
    %4329 = vmatpush2.xpose.msra.mxu0 0.0
    %4330 = vmatprep.subr.mxu0 0.0
    %4331 = vmatpush2.xpose.msra.mxu0 0.0
    %4332 = vmatprep.subr.mxu0 0.0
    %4333 = vmatpush2.xpose.msra.mxu0 0.0
    %4334 = vmatprep.subr.mxu0 0.0
    %4335 = vmatpush2.xpose.msra.mxu0 0.0
    %4336 = vmatprep.subr.mxu0 0.0
    %4337 = vmatpush2.xpose.msra.mxu0 0.0
    %4338 = vmatprep.subr.mxu0 0.0
    %4339 = vmatpush2.xpose.msra.mxu0 0.0
    %4340 = vmatprep.subr.mxu0 0.0
    %4341 = vmatpush2.xpose.msra.mxu0 0.0
    %4342 = vmatprep.mubr.f32.mxu0 0.0
    %4343 = vmatmul.mubr.f32.gmra.mxu0 %v4273
    %v4344 = vpop.f32.mrf.mxu0
    %v4345 = vadd.f32 %v3875, %v4344
    %v4346 = vpop.f32.mrf.mxu0
    %4347 = vdwg.mxu0
    %v4349 = vsel %vm144, %v3660, 0
    %v4352 = vsel %vm144, %v3787, 0
    %4354 = vmatprep.subr.mxu0 0.0
    %4355 = vmatpush1.xpose.msra.mxu0 0.0
    %4356 = vmatprep.subr.mxu0 0.0
    %4357 = vmatpush1.xpose.msra.mxu0 0.0
    %4358 = vmatprep.subr.mxu0 0.0
    %4359 = vmatpush1.xpose.msra.mxu0 0.0
    %4360 = vmatprep.subr.mxu0 0.0
    %4361 = vmatpush1.xpose.msra.mxu0 0.0
    %4362 = vmatprep.subr.mxu0 0.0
    %4363 = vmatpush1.xpose.msra.mxu0 0.0
    %4364 = vmatprep.subr.mxu0 0.0
    %4365 = vmatpush1.xpose.msra.mxu0 0.0
    %4366 = vmatprep.subr.mxu0 0.0
    %4367 = vmatpush1.xpose.msra.mxu0 0.0
    %4368 = vmatprep.subr.mxu0 0.0
    %4369 = vmatpush1.xpose.msra.mxu0 0.0
    %4370 = vmatprep.subr.mxu0 0.0
    %4371 = vmatpush1.xpose.msra.mxu0 0.0
    %4372 = vmatprep.subr.mxu0 0.0
    %4373 = vmatpush1.xpose.msra.mxu0 0.0
    %4374 = vmatprep.subr.mxu0 0.0
    %4375 = vmatpush1.xpose.msra.mxu0 0.0
    %4376 = vmatprep.subr.mxu0 0.0
    %4377 = vmatpush1.xpose.msra.mxu0 0.0
    %4378 = vmatprep.subr.mxu0 0.0
    %4379 = vmatpush1.xpose.msra.mxu0 0.0
    %4380 = vmatprep.subr.mxu0 0.0
    %4381 = vmatpush1.xpose.msra.mxu0 0.0
    %4382 = vmatprep.subr.mxu0 0.0
    %4383 = vmatpush1.xpose.msra.mxu0 0.0
    %4384 = vmatprep.subr.mxu0 0.0
    %4385 = vmatpush1.xpose.msra.mxu0 %v4352
    %4386 = vmatprep.subr.mxu0 0.0
    %4387 = vmatpush2.xpose.msra.mxu0 0.0
    %4388 = vmatprep.subr.mxu0 0.0
    %4389 = vmatpush2.xpose.msra.mxu0 0.0
    %4390 = vmatprep.subr.mxu0 0.0
    %4391 = vmatpush2.xpose.msra.mxu0 0.0
    %4392 = vmatprep.subr.mxu0 0.0
    %4393 = vmatpush2.xpose.msra.mxu0 0.0
    %4394 = vmatprep.subr.mxu0 0.0
    %4395 = vmatpush2.xpose.msra.mxu0 0.0
    %4396 = vmatprep.subr.mxu0 0.0
    %4397 = vmatpush2.xpose.msra.mxu0 0.0
    %4398 = vmatprep.subr.mxu0 0.0
    %4399 = vmatpush2.xpose.msra.mxu0 0.0
    %4400 = vmatprep.subr.mxu0 0.0
    %4401 = vmatpush2.xpose.msra.mxu0 0.0
    %4402 = vmatprep.subr.mxu0 0.0
    %4403 = vmatpush2.xpose.msra.mxu0 0.0
    %4404 = vmatprep.subr.mxu0 0.0
    %4405 = vmatpush2.xpose.msra.mxu0 0.0
    %4406 = vmatprep.subr.mxu0 0.0
    %4407 = vmatpush2.xpose.msra.mxu0 0.0
    %4408 = vmatprep.subr.mxu0 0.0
    %4409 = vmatpush2.xpose.msra.mxu0 0.0
    %4410 = vmatprep.subr.mxu0 0.0
    %4411 = vmatpush2.xpose.msra.mxu0 0.0
    %4412 = vmatprep.subr.mxu0 0.0
    %4413 = vmatpush2.xpose.msra.mxu0 0.0
    %4414 = vmatprep.subr.mxu0 0.0
    %4415 = vmatpush2.xpose.msra.mxu0 0.0
    %4416 = vmatprep.subr.mxu0 0.0
    %4417 = vmatpush2.xpose.msra.mxu0 0.0
    %4418 = vmatprep.mubr.f32.mxu0 0.0
    %4419 = vmatmul.mubr.f32.gmra.mxu0 %v4349
    %v4420 = vpop.f32.mrf.mxu0
    %v4421 = vadd.f32 %v3879, %v4420
    %v4422 = vpop.f32.mrf.mxu0
    %4423 = vdwg.mxu0
    %v4425 = vsel %vm144, %v3661, 0
    %v4428 = vsel %vm144, %v3792, 0
    %4430 = vmatprep.subr.mxu0 0.0
    %4431 = vmatpush1.xpose.msra.mxu0 0.0
    %4432 = vmatprep.subr.mxu0 0.0
    %4433 = vmatpush1.xpose.msra.mxu0 0.0
    %4434 = vmatprep.subr.mxu0 0.0
    %4435 = vmatpush1.xpose.msra.mxu0 0.0
    %4436 = vmatprep.subr.mxu0 0.0
    %4437 = vmatpush1.xpose.msra.mxu0 0.0
    %4438 = vmatprep.subr.mxu0 0.0
    %4439 = vmatpush1.xpose.msra.mxu0 0.0
    %4440 = vmatprep.subr.mxu0 0.0
    %4441 = vmatpush1.xpose.msra.mxu0 0.0
    %4442 = vmatprep.subr.mxu0 0.0
    %4443 = vmatpush1.xpose.msra.mxu0 0.0
    %4444 = vmatprep.subr.mxu0 0.0
    %4445 = vmatpush1.xpose.msra.mxu0 0.0
    %4446 = vmatprep.subr.mxu0 0.0
    %4447 = vmatpush1.xpose.msra.mxu0 0.0
    %4448 = vmatprep.subr.mxu0 0.0
    %4449 = vmatpush1.xpose.msra.mxu0 0.0
    %4450 = vmatprep.subr.mxu0 0.0
    %4451 = vmatpush1.xpose.msra.mxu0 0.0
    %4452 = vmatprep.subr.mxu0 0.0
    %4453 = vmatpush1.xpose.msra.mxu0 0.0
    %4454 = vmatprep.subr.mxu0 0.0
    %4455 = vmatpush1.xpose.msra.mxu0 0.0
    %4456 = vmatprep.subr.mxu0 0.0
    %4457 = vmatpush1.xpose.msra.mxu0 0.0
    %4458 = vmatprep.subr.mxu0 0.0
    %4459 = vmatpush1.xpose.msra.mxu0 0.0
    %4460 = vmatprep.subr.mxu0 0.0
    %4461 = vmatpush1.xpose.msra.mxu0 %v4428
    %4462 = vmatprep.subr.mxu0 0.0
    %4463 = vmatpush2.xpose.msra.mxu0 0.0
    %4464 = vmatprep.subr.mxu0 0.0
    %4465 = vmatpush2.xpose.msra.mxu0 0.0
    %4466 = vmatprep.subr.mxu0 0.0
    %4467 = vmatpush2.xpose.msra.mxu0 0.0
    %4468 = vmatprep.subr.mxu0 0.0
    %4469 = vmatpush2.xpose.msra.mxu0 0.0
    %4470 = vmatprep.subr.mxu0 0.0
    %4471 = vmatpush2.xpose.msra.mxu0 0.0
    %4472 = vmatprep.subr.mxu0 0.0
    %4473 = vmatpush2.xpose.msra.mxu0 0.0
    %4474 = vmatprep.subr.mxu0 0.0
    %4475 = vmatpush2.xpose.msra.mxu0 0.0
    %4476 = vmatprep.subr.mxu0 0.0
    %4477 = vmatpush2.xpose.msra.mxu0 0.0
    %4478 = vmatprep.subr.mxu0 0.0
    %4479 = vmatpush2.xpose.msra.mxu0 0.0
    %4480 = vmatprep.subr.mxu0 0.0
    %4481 = vmatpush2.xpose.msra.mxu0 0.0
    %4482 = vmatprep.subr.mxu0 0.0
    %4483 = vmatpush2.xpose.msra.mxu0 0.0
    %4484 = vmatprep.subr.mxu0 0.0
    %4485 = vmatpush2.xpose.msra.mxu0 0.0
    %4486 = vmatprep.subr.mxu0 0.0
    %4487 = vmatpush2.xpose.msra.mxu0 0.0
    %4488 = vmatprep.subr.mxu0 0.0
    %4489 = vmatpush2.xpose.msra.mxu0 0.0
    %4490 = vmatprep.subr.mxu0 0.0
    %4491 = vmatpush2.xpose.msra.mxu0 0.0
    %4492 = vmatprep.subr.mxu0 0.0
    %4493 = vmatpush2.xpose.msra.mxu0 0.0
    %4494 = vmatprep.mubr.f32.mxu0 0.0
    %4495 = vmatmul.mubr.f32.gmra.mxu0 %v4425
    %v4496 = vpop.f32.mrf.mxu0
    %v4497 = vadd.f32 %v3883, %v4496
    %v4498 = vpop.f32.mrf.mxu0
    %4499 = vdwg.mxu0
    %vm4500 = vcmask 64512
    %v4501 = vsel %vm4500, %v3965, -inf
    %4502 = vmax.xlane.f32.xlu0 %v4501
    %v4503 = vpop.xlane.xlu0 %4502
    %v4504 = vsel %vm4500, %v4041, -inf
    %4505 = vmax.xlane.f32.xlu0 %v4504
    %v4506 = vpop.xlane.xlu0 %4505
    %v4507 = vsel %vm4500, %v4117, -inf
    %4508 = vmax.xlane.f32.xlu0 %v4507
    %v4509 = vpop.xlane.xlu0 %4508
    %v4510 = vsel %vm4500, %v4193, -inf
    %4511 = vmax.xlane.f32.xlu0 %v4510
    %v4512 = vpop.xlane.xlu0 %4511
    %v4513 = vsel %vm4500, %v4269, -inf
    %4514 = vmax.xlane.f32.xlu0 %v4513
    %v4515 = vpop.xlane.xlu0 %4514
    %v4516 = vsel %vm4500, %v4345, -inf
    %4517 = vmax.xlane.f32.xlu0 %v4516
    %v4518 = vpop.xlane.xlu0 %4517
    %v4519 = vsel %vm4500, %v4421, -inf
    %4520 = vmax.xlane.f32.xlu0 %v4519
    %v4521 = vpop.xlane.xlu0 %4520
    %v4522 = vsel %vm4500, %v4497, -inf
    %4523 = vmax.xlane.f32.xlu0 %v4522
    %v4524 = vpop.xlane.xlu0 %4523
    %v4525 = vsub.f32 %v3965, %v4503
    %v4526 = vsub.f32 %v4041, %v4506
    %v4527 = vsub.f32 %v4117, %v4509
    %v4528 = vsub.f32 %v4193, %v4512
    %v4529 = vsub.f32 %v4269, %v4515
    %v4530 = vsub.f32 %v4345, %v4518
    %v4531 = vsub.f32 %v4421, %v4521
    %v4532 = vsub.f32 %v4497, %v4524
    %v4533 = vmul.f32 %v4525, 1.442695
    %v4534 = vpow.pop %v4533
    %v4535 = vmul.f32 %v4526, 1.442695
    %v4536 = vpow.pop %v4535
    %v4537 = vmul.f32 %v4527, 1.442695
    %v4538 = vpow.pop %v4537
    %v4539 = vmul.f32 %v4528, 1.442695
    %v4540 = vpow.pop %v4539
    %v4541 = vmul.f32 %v4529, 1.442695
    %v4542 = vpow.pop %v4541
    %v4543 = vmul.f32 %v4530, 1.442695
    %v4544 = vpow.pop %v4543
    %v4545 = vmul.f32 %v4531, 1.442695
    %v4546 = vpow.pop %v4545
    %v4547 = vmul.f32 %v4532, 1.442695
    %v4548 = vpow.pop %v4547
    %v4549 = vsel %vm4500, %v4534, 0.0
    %4550 = vadd.xlane.f32.xlu0 %v4549
    %v4551 = vpop.xlane.xlu0 %4550
    %v4552 = vsel %vm4500, %v4536, 0.0
    %4553 = vadd.xlane.f32.xlu0 %v4552
    %v4554 = vpop.xlane.xlu0 %4553
    %v4555 = vsel %vm4500, %v4538, 0.0
    %4556 = vadd.xlane.f32.xlu0 %v4555
    %v4557 = vpop.xlane.xlu0 %4556
    %v4558 = vsel %vm4500, %v4540, 0.0
    %4559 = vadd.xlane.f32.xlu0 %v4558
    %v4560 = vpop.xlane.xlu0 %4559
    %v4561 = vsel %vm4500, %v4542, 0.0
    %4562 = vadd.xlane.f32.xlu0 %v4561
    %v4563 = vpop.xlane.xlu0 %4562
    %v4564 = vsel %vm4500, %v4544, 0.0
    %4565 = vadd.xlane.f32.xlu0 %v4564
    %v4566 = vpop.xlane.xlu0 %4565
    %v4567 = vsel %vm4500, %v4546, 0.0
    %4568 = vadd.xlane.f32.xlu0 %v4567
    %v4569 = vpop.xlane.xlu0 %4568
    %v4570 = vsel %vm4500, %v4548, 0.0
    %4571 = vadd.xlane.f32.xlu0 %v4570
    %v4572 = vpop.xlane.xlu0 %4571
    %v4573 = vrcp.pop %v4551
    %v4574 = vrcp.pop %v4554
    %v4575 = vrcp.pop %v4557
    %v4576 = vrcp.pop %v4560
    %v4577 = vrcp.pop %v4563
    %v4578 = vrcp.pop %v4566
    %v4579 = vrcp.pop %v4569
    %v4580 = vrcp.pop %v4572
    %v4581 = vmul.f32 %v4534, %v4573
    %v4582 = vmul.f32 %v4536, %v4574
    %v4583 = vmul.f32 %v4538, %v4575
    %v4584 = vmul.f32 %v4540, %v4576
    %v4585 = vmul.f32 %v4542, %v4577
    %v4586 = vmul.f32 %v4544, %v4578
    %v4587 = vmul.f32 %v4546, %v4579
    %v4588 = vmul.f32 %v4548, %v4580
    %v4590 = vsel %vm4500, %v4581, 0
    %4592 = vmatprep.subr.mxu0 0.0
    %4593 = vmatpush1.msra.mxu0 0.0
    %4594 = vmatprep.subr.mxu0 0.0
    %4595 = vmatpush1.msra.mxu0 0.0
    %4596 = vmatprep.subr.mxu0 0.0
    %4597 = vmatpush1.msra.mxu0 0.0
    %4598 = vmatprep.subr.mxu0 0.0
    %4599 = vmatpush1.msra.mxu0 0.0
    %4600 = vmatprep.subr.mxu0 0.0
    %4601 = vmatpush1.msra.mxu0 0.0
    %4602 = vmatprep.subr.mxu0 0.0
    %4603 = vmatpush1.msra.mxu0 0.0
    %4604 = vmatprep.subr.mxu0 0.0
    %4605 = vmatpush1.msra.mxu0 0.0
    %4606 = vmatprep.subr.mxu0 0.0
    %4607 = vmatpush1.msra.mxu0 0.0
    %4608 = vmatprep.subr.mxu0 0.0
    %4609 = vmatpush1.msra.mxu0 0.0
    %4610 = vmatprep.subr.mxu0 0.0
    %4611 = vmatpush1.msra.mxu0 0.0
    %4612 = vmatprep.subr.mxu0 0.0
    %4613 = vmatpush1.msra.mxu0 0.0
    %4614 = vmatprep.subr.mxu0 0.0
    %4615 = vmatpush1.msra.mxu0 0.0
    %4616 = vmatprep.subr.mxu0 0.0
    %4617 = vmatpush1.msra.mxu0 0.0
    %4618 = vmatprep.subr.mxu0 0.0
    %4619 = vmatpush1.msra.mxu0 0.0
    %4620 = vmatprep.subr.mxu0 0.0
    %4621 = vmatpush1.msra.mxu0 0.0
    %4622 = vmatprep.subr.mxu0 0.0
    %4623 = vmatpush1.msra.mxu0 %v3646
    %4624 = vmatprep.subr.mxu0 0.0
    %4625 = vmatpush2.msra.mxu0 0.0
    %4626 = vmatprep.subr.mxu0 0.0
    %4627 = vmatpush2.msra.mxu0 0.0
    %4628 = vmatprep.subr.mxu0 0.0
    %4629 = vmatpush2.msra.mxu0 0.0
    %4630 = vmatprep.subr.mxu0 0.0
    %4631 = vmatpush2.msra.mxu0 0.0
    %4632 = vmatprep.subr.mxu0 0.0
    %4633 = vmatpush2.msra.mxu0 0.0
    %4634 = vmatprep.subr.mxu0 0.0
    %4635 = vmatpush2.msra.mxu0 0.0
    %4636 = vmatprep.subr.mxu0 0.0
    %4637 = vmatpush2.msra.mxu0 0.0
    %4638 = vmatprep.subr.mxu0 0.0
    %4639 = vmatpush2.msra.mxu0 0.0
    %4640 = vmatprep.subr.mxu0 0.0
    %4641 = vmatpush2.msra.mxu0 0.0
    %4642 = vmatprep.subr.mxu0 0.0
    %4643 = vmatpush2.msra.mxu0 0.0
    %4644 = vmatprep.subr.mxu0 0.0
    %4645 = vmatpush2.msra.mxu0 0.0
    %4646 = vmatprep.subr.mxu0 0.0
    %4647 = vmatpush2.msra.mxu0 0.0
    %4648 = vmatprep.subr.mxu0 0.0
    %4649 = vmatpush2.msra.mxu0 0.0
    %4650 = vmatprep.subr.mxu0 0.0
    %4651 = vmatpush2.msra.mxu0 0.0
    %4652 = vmatprep.subr.mxu0 0.0
    %4653 = vmatpush2.msra.mxu0 0.0
    %4654 = vmatprep.subr.mxu0 0.0
    %4655 = vmatpush2.msra.mxu0 0.0
    %4656 = vmatprep.mubr.f32.mxu0 0.0
    %4657 = vmatmul.mubr.f32.gmra.mxu0 %v4590
    %v4658 = vpop.f32.mrf.mxu0
    %v4659 = vadd.f32 0.0, %v4658
    %v4660 = vpop.f32.mrf.mxu0
    %4661 = vdwg.mxu0
    %v4663 = vsel %vm4500, %v4582, 0
    %4665 = vmatprep.subr.mxu0 0.0
    %4666 = vmatpush1.msra.mxu0 0.0
    %4667 = vmatprep.subr.mxu0 0.0
    %4668 = vmatpush1.msra.mxu0 0.0
    %4669 = vmatprep.subr.mxu0 0.0
    %4670 = vmatpush1.msra.mxu0 0.0
    %4671 = vmatprep.subr.mxu0 0.0
    %4672 = vmatpush1.msra.mxu0 0.0
    %4673 = vmatprep.subr.mxu0 0.0
    %4674 = vmatpush1.msra.mxu0 0.0
    %4675 = vmatprep.subr.mxu0 0.0
    %4676 = vmatpush1.msra.mxu0 0.0
    %4677 = vmatprep.subr.mxu0 0.0
    %4678 = vmatpush1.msra.mxu0 0.0
    %4679 = vmatprep.subr.mxu0 0.0
    %4680 = vmatpush1.msra.mxu0 0.0
    %4681 = vmatprep.subr.mxu0 0.0
    %4682 = vmatpush1.msra.mxu0 0.0
    %4683 = vmatprep.subr.mxu0 0.0
    %4684 = vmatpush1.msra.mxu0 0.0
    %4685 = vmatprep.subr.mxu0 0.0
    %4686 = vmatpush1.msra.mxu0 0.0
    %4687 = vmatprep.subr.mxu0 0.0
    %4688 = vmatpush1.msra.mxu0 0.0
    %4689 = vmatprep.subr.mxu0 0.0
    %4690 = vmatpush1.msra.mxu0 0.0
    %4691 = vmatprep.subr.mxu0 0.0
    %4692 = vmatpush1.msra.mxu0 0.0
    %4693 = vmatprep.subr.mxu0 0.0
    %4694 = vmatpush1.msra.mxu0 0.0
    %4695 = vmatprep.subr.mxu0 0.0
    %4696 = vmatpush1.msra.mxu0 %v3647
    %4697 = vmatprep.subr.mxu0 0.0
    %4698 = vmatpush2.msra.mxu0 0.0
    %4699 = vmatprep.subr.mxu0 0.0
    %4700 = vmatpush2.msra.mxu0 0.0
    %4701 = vmatprep.subr.mxu0 0.0
    %4702 = vmatpush2.msra.mxu0 0.0
    %4703 = vmatprep.subr.mxu0 0.0
    %4704 = vmatpush2.msra.mxu0 0.0
    %4705 = vmatprep.subr.mxu0 0.0
    %4706 = vmatpush2.msra.mxu0 0.0
    %4707 = vmatprep.subr.mxu0 0.0
    %4708 = vmatpush2.msra.mxu0 0.0
    %4709 = vmatprep.subr.mxu0 0.0
    %4710 = vmatpush2.msra.mxu0 0.0
    %4711 = vmatprep.subr.mxu0 0.0
    %4712 = vmatpush2.msra.mxu0 0.0
    %4713 = vmatprep.subr.mxu0 0.0
    %4714 = vmatpush2.msra.mxu0 0.0
    %4715 = vmatprep.subr.mxu0 0.0
    %4716 = vmatpush2.msra.mxu0 0.0
    %4717 = vmatprep.subr.mxu0 0.0
    %4718 = vmatpush2.msra.mxu0 0.0
    %4719 = vmatprep.subr.mxu0 0.0
    %4720 = vmatpush2.msra.mxu0 0.0
    %4721 = vmatprep.subr.mxu0 0.0
    %4722 = vmatpush2.msra.mxu0 0.0
    %4723 = vmatprep.subr.mxu0 0.0
    %4724 = vmatpush2.msra.mxu0 0.0
    %4725 = vmatprep.subr.mxu0 0.0
    %4726 = vmatpush2.msra.mxu0 0.0
    %4727 = vmatprep.subr.mxu0 0.0
    %4728 = vmatpush2.msra.mxu0 0.0
    %4729 = vmatprep.mubr.f32.mxu0 0.0
    %4730 = vmatmul.mubr.f32.gmra.mxu0 %v4663
    %v4731 = vpop.f32.mrf.mxu0
    %v4732 = vadd.f32 0.0, %v4731
    %v4733 = vpop.f32.mrf.mxu0
    %4734 = vdwg.mxu0
    %v4736 = vsel %vm4500, %v4583, 0
    %4738 = vmatprep.subr.mxu0 0.0
    %4739 = vmatpush1.msra.mxu0 0.0
    %4740 = vmatprep.subr.mxu0 0.0
    %4741 = vmatpush1.msra.mxu0 0.0
    %4742 = vmatprep.subr.mxu0 0.0
    %4743 = vmatpush1.msra.mxu0 0.0
    %4744 = vmatprep.subr.mxu0 0.0
    %4745 = vmatpush1.msra.mxu0 0.0
    %4746 = vmatprep.subr.mxu0 0.0
    %4747 = vmatpush1.msra.mxu0 0.0
    %4748 = vmatprep.subr.mxu0 0.0
    %4749 = vmatpush1.msra.mxu0 0.0
    %4750 = vmatprep.subr.mxu0 0.0
    %4751 = vmatpush1.msra.mxu0 0.0
    %4752 = vmatprep.subr.mxu0 0.0
    %4753 = vmatpush1.msra.mxu0 0.0
    %4754 = vmatprep.subr.mxu0 0.0
    %4755 = vmatpush1.msra.mxu0 0.0
    %4756 = vmatprep.subr.mxu0 0.0
    %4757 = vmatpush1.msra.mxu0 0.0
    %4758 = vmatprep.subr.mxu0 0.0
    %4759 = vmatpush1.msra.mxu0 0.0
    %4760 = vmatprep.subr.mxu0 0.0
    %4761 = vmatpush1.msra.mxu0 0.0
    %4762 = vmatprep.subr.mxu0 0.0
    %4763 = vmatpush1.msra.mxu0 0.0
    %4764 = vmatprep.subr.mxu0 0.0
    %4765 = vmatpush1.msra.mxu0 0.0
    %4766 = vmatprep.subr.mxu0 0.0
    %4767 = vmatpush1.msra.mxu0 0.0
    %4768 = vmatprep.subr.mxu0 0.0
    %4769 = vmatpush1.msra.mxu0 %v3648
    %4770 = vmatprep.subr.mxu0 0.0
    %4771 = vmatpush2.msra.mxu0 0.0
    %4772 = vmatprep.subr.mxu0 0.0
    %4773 = vmatpush2.msra.mxu0 0.0
    %4774 = vmatprep.subr.mxu0 0.0
    %4775 = vmatpush2.msra.mxu0 0.0
    %4776 = vmatprep.subr.mxu0 0.0
    %4777 = vmatpush2.msra.mxu0 0.0
    %4778 = vmatprep.subr.mxu0 0.0
    %4779 = vmatpush2.msra.mxu0 0.0
    %4780 = vmatprep.subr.mxu0 0.0
    %4781 = vmatpush2.msra.mxu0 0.0
    %4782 = vmatprep.subr.mxu0 0.0
    %4783 = vmatpush2.msra.mxu0 0.0
    %4784 = vmatprep.subr.mxu0 0.0
    %4785 = vmatpush2.msra.mxu0 0.0
    %4786 = vmatprep.subr.mxu0 0.0
    %4787 = vmatpush2.msra.mxu0 0.0
    %4788 = vmatprep.subr.mxu0 0.0
    %4789 = vmatpush2.msra.mxu0 0.0
    %4790 = vmatprep.subr.mxu0 0.0
    %4791 = vmatpush2.msra.mxu0 0.0
    %4792 = vmatprep.subr.mxu0 0.0
    %4793 = vmatpush2.msra.mxu0 0.0
    %4794 = vmatprep.subr.mxu0 0.0
    %4795 = vmatpush2.msra.mxu0 0.0
    %4796 = vmatprep.subr.mxu0 0.0
    %4797 = vmatpush2.msra.mxu0 0.0
    %4798 = vmatprep.subr.mxu0 0.0
    %4799 = vmatpush2.msra.mxu0 0.0
    %4800 = vmatprep.subr.mxu0 0.0
    %4801 = vmatpush2.msra.mxu0 0.0
    %4802 = vmatprep.mubr.f32.mxu0 0.0
    %4803 = vmatmul.mubr.f32.gmra.mxu0 %v4736
    %v4804 = vpop.f32.mrf.mxu0
    %v4805 = vadd.f32 0.0, %v4804
    %v4806 = vpop.f32.mrf.mxu0
    %4807 = vdwg.mxu0
    %v4809 = vsel %vm4500, %v4584, 0
    %4811 = vmatprep.subr.mxu0 0.0
    %4812 = vmatpush1.msra.mxu0 0.0
    %4813 = vmatprep.subr.mxu0 0.0
    %4814 = vmatpush1.msra.mxu0 0.0
    %4815 = vmatprep.subr.mxu0 0.0
    %4816 = vmatpush1.msra.mxu0 0.0
    %4817 = vmatprep.subr.mxu0 0.0
    %4818 = vmatpush1.msra.mxu0 0.0
    %4819 = vmatprep.subr.mxu0 0.0
    %4820 = vmatpush1.msra.mxu0 0.0
    %4821 = vmatprep.subr.mxu0 0.0
    %4822 = vmatpush1.msra.mxu0 0.0
    %4823 = vmatprep.subr.mxu0 0.0
    %4824 = vmatpush1.msra.mxu0 0.0
    %4825 = vmatprep.subr.mxu0 0.0
    %4826 = vmatpush1.msra.mxu0 0.0
    %4827 = vmatprep.subr.mxu0 0.0
    %4828 = vmatpush1.msra.mxu0 0.0
    %4829 = vmatprep.subr.mxu0 0.0
    %4830 = vmatpush1.msra.mxu0 0.0
    %4831 = vmatprep.subr.mxu0 0.0
    %4832 = vmatpush1.msra.mxu0 0.0
    %4833 = vmatprep.subr.mxu0 0.0
    %4834 = vmatpush1.msra.mxu0 0.0
    %4835 = vmatprep.subr.mxu0 0.0
    %4836 = vmatpush1.msra.mxu0 0.0
    %4837 = vmatprep.subr.mxu0 0.0
    %4838 = vmatpush1.msra.mxu0 0.0
    %4839 = vmatprep.subr.mxu0 0.0
    %4840 = vmatpush1.msra.mxu0 0.0
    %4841 = vmatprep.subr.mxu0 0.0
    %4842 = vmatpush1.msra.mxu0 %v3649
    %4843 = vmatprep.subr.mxu0 0.0
    %4844 = vmatpush2.msra.mxu0 0.0
    %4845 = vmatprep.subr.mxu0 0.0
    %4846 = vmatpush2.msra.mxu0 0.0
    %4847 = vmatprep.subr.mxu0 0.0
    %4848 = vmatpush2.msra.mxu0 0.0
    %4849 = vmatprep.subr.mxu0 0.0
    %4850 = vmatpush2.msra.mxu0 0.0
    %4851 = vmatprep.subr.mxu0 0.0
    %4852 = vmatpush2.msra.mxu0 0.0
    %4853 = vmatprep.subr.mxu0 0.0
    %4854 = vmatpush2.msra.mxu0 0.0
    %4855 = vmatprep.subr.mxu0 0.0
    %4856 = vmatpush2.msra.mxu0 0.0
    %4857 = vmatprep.subr.mxu0 0.0
    %4858 = vmatpush2.msra.mxu0 0.0
    %4859 = vmatprep.subr.mxu0 0.0
    %4860 = vmatpush2.msra.mxu0 0.0
    %4861 = vmatprep.subr.mxu0 0.0
    %4862 = vmatpush2.msra.mxu0 0.0
    %4863 = vmatprep.subr.mxu0 0.0
    %4864 = vmatpush2.msra.mxu0 0.0
    %4865 = vmatprep.subr.mxu0 0.0
    %4866 = vmatpush2.msra.mxu0 0.0
    %4867 = vmatprep.subr.mxu0 0.0
    %4868 = vmatpush2.msra.mxu0 0.0
    %4869 = vmatprep.subr.mxu0 0.0
    %4870 = vmatpush2.msra.mxu0 0.0
    %4871 = vmatprep.subr.mxu0 0.0
    %4872 = vmatpush2.msra.mxu0 0.0
    %4873 = vmatprep.subr.mxu0 0.0
    %4874 = vmatpush2.msra.mxu0 0.0
    %4875 = vmatprep.mubr.f32.mxu0 0.0
    %4876 = vmatmul.mubr.f32.gmra.mxu0 %v4809
    %v4877 = vpop.f32.mrf.mxu0
    %v4878 = vadd.f32 0.0, %v4877
    %v4879 = vpop.f32.mrf.mxu0
    %4880 = vdwg.mxu0
    %v4882 = vsel %vm4500, %v4585, 0
    %4884 = vmatprep.subr.mxu0 0.0
    %4885 = vmatpush1.msra.mxu0 0.0
    %4886 = vmatprep.subr.mxu0 0.0
    %4887 = vmatpush1.msra.mxu0 0.0
    %4888 = vmatprep.subr.mxu0 0.0
    %4889 = vmatpush1.msra.mxu0 0.0
    %4890 = vmatprep.subr.mxu0 0.0
    %4891 = vmatpush1.msra.mxu0 0.0
    %4892 = vmatprep.subr.mxu0 0.0
    %4893 = vmatpush1.msra.mxu0 0.0
    %4894 = vmatprep.subr.mxu0 0.0
    %4895 = vmatpush1.msra.mxu0 0.0
    %4896 = vmatprep.subr.mxu0 0.0
    %4897 = vmatpush1.msra.mxu0 0.0
    %4898 = vmatprep.subr.mxu0 0.0
    %4899 = vmatpush1.msra.mxu0 0.0
    %4900 = vmatprep.subr.mxu0 0.0
    %4901 = vmatpush1.msra.mxu0 0.0
    %4902 = vmatprep.subr.mxu0 0.0
    %4903 = vmatpush1.msra.mxu0 0.0
    %4904 = vmatprep.subr.mxu0 0.0
    %4905 = vmatpush1.msra.mxu0 0.0
    %4906 = vmatprep.subr.mxu0 0.0
    %4907 = vmatpush1.msra.mxu0 0.0
    %4908 = vmatprep.subr.mxu0 0.0
    %4909 = vmatpush1.msra.mxu0 0.0
    %4910 = vmatprep.subr.mxu0 0.0
    %4911 = vmatpush1.msra.mxu0 0.0
    %4912 = vmatprep.subr.mxu0 0.0
    %4913 = vmatpush1.msra.mxu0 0.0
    %4914 = vmatprep.subr.mxu0 0.0
    %4915 = vmatpush1.msra.mxu0 %v3650
    %4916 = vmatprep.subr.mxu0 0.0
    %4917 = vmatpush2.msra.mxu0 0.0
    %4918 = vmatprep.subr.mxu0 0.0
    %4919 = vmatpush2.msra.mxu0 0.0
    %4920 = vmatprep.subr.mxu0 0.0
    %4921 = vmatpush2.msra.mxu0 0.0
    %4922 = vmatprep.subr.mxu0 0.0
    %4923 = vmatpush2.msra.mxu0 0.0
    %4924 = vmatprep.subr.mxu0 0.0
    %4925 = vmatpush2.msra.mxu0 0.0
    %4926 = vmatprep.subr.mxu0 0.0
    %4927 = vmatpush2.msra.mxu0 0.0
    %4928 = vmatprep.subr.mxu0 0.0
    %4929 = vmatpush2.msra.mxu0 0.0
    %4930 = vmatprep.subr.mxu0 0.0
    %4931 = vmatpush2.msra.mxu0 0.0
    %4932 = vmatprep.subr.mxu0 0.0
    %4933 = vmatpush2.msra.mxu0 0.0
    %4934 = vmatprep.subr.mxu0 0.0
    %4935 = vmatpush2.msra.mxu0 0.0
    %4936 = vmatprep.subr.mxu0 0.0
    %4937 = vmatpush2.msra.mxu0 0.0
    %4938 = vmatprep.subr.mxu0 0.0
    %4939 = vmatpush2.msra.mxu0 0.0
    %4940 = vmatprep.subr.mxu0 0.0
    %4941 = vmatpush2.msra.mxu0 0.0
    %4942 = vmatprep.subr.mxu0 0.0
    %4943 = vmatpush2.msra.mxu0 0.0
    %4944 = vmatprep.subr.mxu0 0.0
    %4945 = vmatpush2.msra.mxu0 0.0
    %4946 = vmatprep.subr.mxu0 0.0
    %4947 = vmatpush2.msra.mxu0 0.0
    %4948 = vmatprep.mubr.f32.mxu0 0.0
    %4949 = vmatmul.mubr.f32.gmra.mxu0 %v4882
    %v4950 = vpop.f32.mrf.mxu0
    %v4951 = vadd.f32 0.0, %v4950
    %v4952 = vpop.f32.mrf.mxu0
    %4953 = vdwg.mxu0
    %v4955 = vsel %vm4500, %v4586, 0
    %4957 = vmatprep.subr.mxu0 0.0
    %4958 = vmatpush1.msra.mxu0 0.0
    %4959 = vmatprep.subr.mxu0 0.0
    %4960 = vmatpush1.msra.mxu0 0.0
    %4961 = vmatprep.subr.mxu0 0.0
    %4962 = vmatpush1.msra.mxu0 0.0
    %4963 = vmatprep.subr.mxu0 0.0
    %4964 = vmatpush1.msra.mxu0 0.0
    %4965 = vmatprep.subr.mxu0 0.0
    %4966 = vmatpush1.msra.mxu0 0.0
    %4967 = vmatprep.subr.mxu0 0.0
    %4968 = vmatpush1.msra.mxu0 0.0
    %4969 = vmatprep.subr.mxu0 0.0
    %4970 = vmatpush1.msra.mxu0 0.0
    %4971 = vmatprep.subr.mxu0 0.0
    %4972 = vmatpush1.msra.mxu0 0.0
    %4973 = vmatprep.subr.mxu0 0.0
    %4974 = vmatpush1.msra.mxu0 0.0
    %4975 = vmatprep.subr.mxu0 0.0
    %4976 = vmatpush1.msra.mxu0 0.0
    %4977 = vmatprep.subr.mxu0 0.0
    %4978 = vmatpush1.msra.mxu0 0.0
    %4979 = vmatprep.subr.mxu0 0.0
    %4980 = vmatpush1.msra.mxu0 0.0
    %4981 = vmatprep.subr.mxu0 0.0
    %4982 = vmatpush1.msra.mxu0 0.0
    %4983 = vmatprep.subr.mxu0 0.0
    %4984 = vmatpush1.msra.mxu0 0.0
    %4985 = vmatprep.subr.mxu0 0.0
    %4986 = vmatpush1.msra.mxu0 0.0
    %4987 = vmatprep.subr.mxu0 0.0
    %4988 = vmatpush1.msra.mxu0 %v3651
    %4989 = vmatprep.subr.mxu0 0.0
    %4990 = vmatpush2.msra.mxu0 0.0
    %4991 = vmatprep.subr.mxu0 0.0
    %4992 = vmatpush2.msra.mxu0 0.0
    %4993 = vmatprep.subr.mxu0 0.0
    %4994 = vmatpush2.msra.mxu0 0.0
    %4995 = vmatprep.subr.mxu0 0.0
    %4996 = vmatpush2.msra.mxu0 0.0
    %4997 = vmatprep.subr.mxu0 0.0
    %4998 = vmatpush2.msra.mxu0 0.0
    %4999 = vmatprep.subr.mxu0 0.0
    %5000 = vmatpush2.msra.mxu0 0.0
    %5001 = vmatprep.subr.mxu0 0.0
    %5002 = vmatpush2.msra.mxu0 0.0
    %5003 = vmatprep.subr.mxu0 0.0
    %5004 = vmatpush2.msra.mxu0 0.0
    %5005 = vmatprep.subr.mxu0 0.0
    %5006 = vmatpush2.msra.mxu0 0.0
    %5007 = vmatprep.subr.mxu0 0.0
    %5008 = vmatpush2.msra.mxu0 0.0
    %5009 = vmatprep.subr.mxu0 0.0
    %5010 = vmatpush2.msra.mxu0 0.0
    %5011 = vmatprep.subr.mxu0 0.0
    %5012 = vmatpush2.msra.mxu0 0.0
    %5013 = vmatprep.subr.mxu0 0.0
    %5014 = vmatpush2.msra.mxu0 0.0
    %5015 = vmatprep.subr.mxu0 0.0
    %5016 = vmatpush2.msra.mxu0 0.0
    %5017 = vmatprep.subr.mxu0 0.0
    %5018 = vmatpush2.msra.mxu0 0.0
    %5019 = vmatprep.subr.mxu0 0.0
    %5020 = vmatpush2.msra.mxu0 0.0
    %5021 = vmatprep.mubr.f32.mxu0 0.0
    %5022 = vmatmul.mubr.f32.gmra.mxu0 %v4955
    %v5023 = vpop.f32.mrf.mxu0
    %v5024 = vadd.f32 0.0, %v5023
    %v5025 = vpop.f32.mrf.mxu0
    %5026 = vdwg.mxu0
    %v5028 = vsel %vm4500, %v4587, 0
    %5030 = vmatprep.subr.mxu0 0.0
    %5031 = vmatpush1.msra.mxu0 0.0
    %5032 = vmatprep.subr.mxu0 0.0
    %5033 = vmatpush1.msra.mxu0 0.0
    %5034 = vmatprep.subr.mxu0 0.0
    %5035 = vmatpush1.msra.mxu0 0.0
    %5036 = vmatprep.subr.mxu0 0.0
    %5037 = vmatpush1.msra.mxu0 0.0
    %5038 = vmatprep.subr.mxu0 0.0
    %5039 = vmatpush1.msra.mxu0 0.0
    %5040 = vmatprep.subr.mxu0 0.0
    %5041 = vmatpush1.msra.mxu0 0.0
    %5042 = vmatprep.subr.mxu0 0.0
    %5043 = vmatpush1.msra.mxu0 0.0
    %5044 = vmatprep.subr.mxu0 0.0
    %5045 = vmatpush1.msra.mxu0 0.0
    %5046 = vmatprep.subr.mxu0 0.0
    %5047 = vmatpush1.msra.mxu0 0.0
    %5048 = vmatprep.subr.mxu0 0.0
    %5049 = vmatpush1.msra.mxu0 0.0
    %5050 = vmatprep.subr.mxu0 0.0
    %5051 = vmatpush1.msra.mxu0 0.0
    %5052 = vmatprep.subr.mxu0 0.0
    %5053 = vmatpush1.msra.mxu0 0.0
    %5054 = vmatprep.subr.mxu0 0.0
    %5055 = vmatpush1.msra.mxu0 0.0
    %5056 = vmatprep.subr.mxu0 0.0
    %5057 = vmatpush1.msra.mxu0 0.0
    %5058 = vmatprep.subr.mxu0 0.0
    %5059 = vmatpush1.msra.mxu0 0.0
    %5060 = vmatprep.subr.mxu0 0.0
    %5061 = vmatpush1.msra.mxu0 %v3652
    %5062 = vmatprep.subr.mxu0 0.0
    %5063 = vmatpush2.msra.mxu0 0.0
    %5064 = vmatprep.subr.mxu0 0.0
    %5065 = vmatpush2.msra.mxu0 0.0
    %5066 = vmatprep.subr.mxu0 0.0
    %5067 = vmatpush2.msra.mxu0 0.0
    %5068 = vmatprep.subr.mxu0 0.0
    %5069 = vmatpush2.msra.mxu0 0.0
    %5070 = vmatprep.subr.mxu0 0.0
    %5071 = vmatpush2.msra.mxu0 0.0
    %5072 = vmatprep.subr.mxu0 0.0
    %5073 = vmatpush2.msra.mxu0 0.0
    %5074 = vmatprep.subr.mxu0 0.0
    %5075 = vmatpush2.msra.mxu0 0.0
    %5076 = vmatprep.subr.mxu0 0.0
    %5077 = vmatpush2.msra.mxu0 0.0
    %5078 = vmatprep.subr.mxu0 0.0
    %5079 = vmatpush2.msra.mxu0 0.0
    %5080 = vmatprep.subr.mxu0 0.0
    %5081 = vmatpush2.msra.mxu0 0.0
    %5082 = vmatprep.subr.mxu0 0.0
    %5083 = vmatpush2.msra.mxu0 0.0
    %5084 = vmatprep.subr.mxu0 0.0
    %5085 = vmatpush2.msra.mxu0 0.0
    %5086 = vmatprep.subr.mxu0 0.0
    %5087 = vmatpush2.msra.mxu0 0.0
    %5088 = vmatprep.subr.mxu0 0.0
    %5089 = vmatpush2.msra.mxu0 0.0
    %5090 = vmatprep.subr.mxu0 0.0
    %5091 = vmatpush2.msra.mxu0 0.0
    %5092 = vmatprep.subr.mxu0 0.0
    %5093 = vmatpush2.msra.mxu0 0.0
    %5094 = vmatprep.mubr.f32.mxu0 0.0
    %5095 = vmatmul.mubr.f32.gmra.mxu0 %v5028
    %v5096 = vpop.f32.mrf.mxu0
    %v5097 = vadd.f32 0.0, %v5096
    %v5098 = vpop.f32.mrf.mxu0
    %5099 = vdwg.mxu0
    %v5101 = vsel %vm4500, %v4588, 0
    %5103 = vmatprep.subr.mxu0 0.0
    %5104 = vmatpush1.msra.mxu0 0.0
    %5105 = vmatprep.subr.mxu0 0.0
    %5106 = vmatpush1.msra.mxu0 0.0
    %5107 = vmatprep.subr.mxu0 0.0
    %5108 = vmatpush1.msra.mxu0 0.0
    %5109 = vmatprep.subr.mxu0 0.0
    %5110 = vmatpush1.msra.mxu0 0.0
    %5111 = vmatprep.subr.mxu0 0.0
    %5112 = vmatpush1.msra.mxu0 0.0
    %5113 = vmatprep.subr.mxu0 0.0
    %5114 = vmatpush1.msra.mxu0 0.0
    %5115 = vmatprep.subr.mxu0 0.0
    %5116 = vmatpush1.msra.mxu0 0.0
    %5117 = vmatprep.subr.mxu0 0.0
    %5118 = vmatpush1.msra.mxu0 0.0
    %5119 = vmatprep.subr.mxu0 0.0
    %5120 = vmatpush1.msra.mxu0 0.0
    %5121 = vmatprep.subr.mxu0 0.0
    %5122 = vmatpush1.msra.mxu0 0.0
    %5123 = vmatprep.subr.mxu0 0.0
    %5124 = vmatpush1.msra.mxu0 0.0
    %5125 = vmatprep.subr.mxu0 0.0
    %5126 = vmatpush1.msra.mxu0 0.0
    %5127 = vmatprep.subr.mxu0 0.0
    %5128 = vmatpush1.msra.mxu0 0.0
    %5129 = vmatprep.subr.mxu0 0.0
    %5130 = vmatpush1.msra.mxu0 0.0
    %5131 = vmatprep.subr.mxu0 0.0
    %5132 = vmatpush1.msra.mxu0 0.0
    %5133 = vmatprep.subr.mxu0 0.0
    %5134 = vmatpush1.msra.mxu0 %v3653
    %5135 = vmatprep.subr.mxu0 0.0
    %5136 = vmatpush2.msra.mxu0 0.0
    %5137 = vmatprep.subr.mxu0 0.0
    %5138 = vmatpush2.msra.mxu0 0.0
    %5139 = vmatprep.subr.mxu0 0.0
    %5140 = vmatpush2.msra.mxu0 0.0
    %5141 = vmatprep.subr.mxu0 0.0
    %5142 = vmatpush2.msra.mxu0 0.0
    %5143 = vmatprep.subr.mxu0 0.0
    %5144 = vmatpush2.msra.mxu0 0.0
    %5145 = vmatprep.subr.mxu0 0.0
    %5146 = vmatpush2.msra.mxu0 0.0
    %5147 = vmatprep.subr.mxu0 0.0
    %5148 = vmatpush2.msra.mxu0 0.0
    %5149 = vmatprep.subr.mxu0 0.0
    %5150 = vmatpush2.msra.mxu0 0.0
    %5151 = vmatprep.subr.mxu0 0.0
    %5152 = vmatpush2.msra.mxu0 0.0
    %5153 = vmatprep.subr.mxu0 0.0
    %5154 = vmatpush2.msra.mxu0 0.0
    %5155 = vmatprep.subr.mxu0 0.0
    %5156 = vmatpush2.msra.mxu0 0.0
    %5157 = vmatprep.subr.mxu0 0.0
    %5158 = vmatpush2.msra.mxu0 0.0
    %5159 = vmatprep.subr.mxu0 0.0
    %5160 = vmatpush2.msra.mxu0 0.0
    %5161 = vmatprep.subr.mxu0 0.0
    %5162 = vmatpush2.msra.mxu0 0.0
    %5163 = vmatprep.subr.mxu0 0.0
    %5164 = vmatpush2.msra.mxu0 0.0
    %5165 = vmatprep.subr.mxu0 0.0
    %5166 = vmatpush2.msra.mxu0 0.0
    %5167 = vmatprep.mubr.f32.mxu0 0.0
    %5168 = vmatmul.mubr.f32.gmra.mxu0 %v5101
    %v5169 = vpop.f32.mrf.mxu0
    %v5170 = vadd.f32 0.0, %v5169
    %v5171 = vpop.f32.mrf.mxu0
    %5172 = vdwg.mxu0
    %v5173 = vld [vmem:[#allocation12] sm:$0xff]
    %v5174 = vld [vmem:[#allocation12 + $0x8] sm:$0xff]
    %v5175 = vld [vmem:[#allocation12 + $0x10] sm:$0xff]
    %v5176 = vld [vmem:[#allocation12 + $0x18] sm:$0xff]
    %v5177 = vld [vmem:[#allocation13] sm:$0xff]
    %v5178 = vld [vmem:[#allocation13 + $0x8] sm:$0xff]
    %v5179 = vld [vmem:[#allocation13 + $0x10] sm:$0xff]
    %v5180 = vld [vmem:[#allocation13 + $0x18] sm:$0xff]
    %5181 = vmatprep.subr.mxu0 0.0
    %5182 = vmatpush1.msra.mxu0 0.0
    %5183 = vmatprep.subr.mxu0 0.0
    %5184 = vmatpush1.msra.mxu0 0.0
    %5185 = vmatprep.subr.mxu0 0.0
    %5186 = vmatpush1.msra.mxu0 0.0
    %5187 = vmatprep.subr.mxu0 0.0
    %5188 = vmatpush1.msra.mxu0 0.0
    %5189 = vmatprep.subr.mxu0 0.0
    %5190 = vmatpush1.msra.mxu0 0.0
    %5191 = vmatprep.subr.mxu0 0.0
    %5192 = vmatpush1.msra.mxu0 0.0
    %5193 = vmatprep.subr.mxu0 0.0
    %5194 = vmatpush1.msra.mxu0 0.0
    %5195 = vmatprep.subr.mxu0 0.0
    %5196 = vmatpush1.msra.mxu0 0.0
    %5197 = vmatprep.subr.mxu0 0.0
    %5198 = vmatpush1.msra.mxu0 0.0
    %5199 = vmatprep.subr.mxu0 0.0
    %5200 = vmatpush1.msra.mxu0 0.0
    %5201 = vmatprep.subr.mxu0 0.0
    %5202 = vmatpush1.msra.mxu0 0.0
    %5203 = vmatprep.subr.mxu0 0.0
    %5204 = vmatpush1.msra.mxu0 0.0
    %5205 = vmatprep.subr.mxu0 0.0
    %5206 = vmatpush1.msra.mxu0 %v5180
    %5207 = vmatprep.subr.mxu0 0.0
    %5208 = vmatpush1.msra.mxu0 %v5179
    %5209 = vmatprep.subr.mxu0 0.0
    %5210 = vmatpush1.msra.mxu0 %v5178
    %5211 = vmatprep.subr.mxu0 0.0
    %5212 = vmatpush1.msra.mxu0 %v5177
    %5213 = vmatprep.subr.mxu0 0.0
    %5214 = vmatpush2.msra.mxu0 0.0
    %5215 = vmatprep.subr.mxu0 0.0
    %5216 = vmatpush2.msra.mxu0 0.0
    %5217 = vmatprep.subr.mxu0 0.0
    %5218 = vmatpush2.msra.mxu0 0.0
    %5219 = vmatprep.subr.mxu0 0.0
    %5220 = vmatpush2.msra.mxu0 0.0
    %5221 = vmatprep.subr.mxu0 0.0
    %5222 = vmatpush2.msra.mxu0 0.0
    %5223 = vmatprep.subr.mxu0 0.0
    %5224 = vmatpush2.msra.mxu0 0.0
    %5225 = vmatprep.subr.mxu0 0.0
    %5226 = vmatpush2.msra.mxu0 0.0
    %5227 = vmatprep.subr.mxu0 0.0
    %5228 = vmatpush2.msra.mxu0 0.0
    %5229 = vmatprep.subr.mxu0 0.0
    %5230 = vmatpush2.msra.mxu0 0.0
    %5231 = vmatprep.subr.mxu0 0.0
    %5232 = vmatpush2.msra.mxu0 0.0
    %5233 = vmatprep.subr.mxu0 0.0
    %5234 = vmatpush2.msra.mxu0 0.0
    %5235 = vmatprep.subr.mxu0 0.0
    %5236 = vmatpush2.msra.mxu0 0.0
    %5237 = vmatprep.subr.mxu0 0.0
    %5238 = vmatpush2.msra.mxu0 0.0
    %5239 = vmatprep.subr.mxu0 0.0
    %5240 = vmatpush2.msra.mxu0 0.0
    %5241 = vmatprep.subr.mxu0 0.0
    %5242 = vmatpush2.msra.mxu0 0.0
    %5243 = vmatprep.subr.mxu0 0.0
    %5244 = vmatpush2.msra.mxu0 0.0
    %5245 = vmatprep.mubr.f32.mxu0 0.0
    %5246 = vmatmul.mubr.f32.gmra.mxu0 %v3893
    %v5247 = vpop.f32.mrf.mxu0
    %v5248 = vadd.f32 0.0, %v5247
    %v5249 = vpop.f32.mrf.mxu0
    %5250 = vmatprep.mubr.f32.mxu0 0.0
    %5251 = vmatmul.mubr.f32.gmra.mxu0 %v3969
    %v5252 = vpop.f32.mrf.mxu0
    %v5253 = vadd.f32 0.0, %v5252
    %v5254 = vpop.f32.mrf.mxu0
    %5255 = vmatprep.mubr.f32.mxu0 0.0
    %5256 = vmatmul.mubr.f32.gmra.mxu0 %v4045
    %v5257 = vpop.f32.mrf.mxu0
    %v5258 = vadd.f32 0.0, %v5257
    %v5259 = vpop.f32.mrf.mxu0
    %5260 = vmatprep.mubr.f32.mxu0 0.0
    %5261 = vmatmul.mubr.f32.gmra.mxu0 %v4121
    %v5262 = vpop.f32.mrf.mxu0
    %v5263 = vadd.f32 0.0, %v5262
    %v5264 = vpop.f32.mrf.mxu0
    %5265 = vmatprep.mubr.f32.mxu0 0.0
    %5266 = vmatmul.mubr.f32.gmra.mxu0 %v4197
    %v5267 = vpop.f32.mrf.mxu0
    %v5268 = vadd.f32 0.0, %v5267
    %v5269 = vpop.f32.mrf.mxu0
    %5270 = vmatprep.mubr.f32.mxu0 0.0
    %5271 = vmatmul.mubr.f32.gmra.mxu0 %v4273
    %v5272 = vpop.f32.mrf.mxu0
    %v5273 = vadd.f32 0.0, %v5272
    %v5274 = vpop.f32.mrf.mxu0
    %5275 = vmatprep.mubr.f32.mxu0 0.0
    %5276 = vmatmul.mubr.f32.gmra.mxu0 %v4349
    %v5277 = vpop.f32.mrf.mxu0
    %v5278 = vadd.f32 0.0, %v5277
    %v5279 = vpop.f32.mrf.mxu0
    %5280 = vmatprep.mubr.f32.mxu0 0.0
    %5281 = vmatmul.mubr.f32.gmra.mxu0 %v4425
    %v5282 = vpop.f32.mrf.mxu0
    %v5283 = vadd.f32 0.0, %v5282
    %v5284 = vpop.f32.mrf.mxu0
    %5285 = vdwg.mxu0
    %v5287 = vsel %vm144, %v4659, 0
    %v5290 = vsel %vm144, %v4732, 0
    %v5293 = vsel %vm144, %v4805, 0
    %v5296 = vsel %vm144, %v4878, 0
    %v5299 = vsel %vm144, %v4951, 0
    %v5302 = vsel %vm144, %v5024, 0
    %v5305 = vsel %vm144, %v5097, 0
    %v5308 = vsel %vm144, %v5170, 0
    %5310 = vmatprep.subr.mxu0 0.0
    %5311 = vmatpush1.msra.mxu0 0.0
    %5312 = vmatprep.subr.mxu0 0.0
    %5313 = vmatpush1.msra.mxu0 0.0
    %5314 = vmatprep.subr.mxu0 0.0
    %5315 = vmatpush1.msra.mxu0 0.0
    %5316 = vmatprep.subr.mxu0 0.0
    %5317 = vmatpush1.msra.mxu0 0.0
    %5318 = vmatprep.subr.mxu0 0.0
    %5319 = vmatpush1.msra.mxu0 0.0
    %5320 = vmatprep.subr.mxu0 0.0
    %5321 = vmatpush1.msra.mxu0 0.0
    %5322 = vmatprep.subr.mxu0 0.0
    %5323 = vmatpush1.msra.mxu0 0.0
    %5324 = vmatprep.subr.mxu0 0.0
    %5325 = vmatpush1.msra.mxu0 0.0
    %5326 = vmatprep.subr.mxu0 0.0
    %5327 = vmatpush1.msra.mxu0 0.0
    %5328 = vmatprep.subr.mxu0 0.0
    %5329 = vmatpush1.msra.mxu0 0.0
    %5330 = vmatprep.subr.mxu0 0.0
    %5331 = vmatpush1.msra.mxu0 0.0
    %5332 = vmatprep.subr.mxu0 0.0
    %5333 = vmatpush1.msra.mxu0 0.0
    %5334 = vmatprep.subr.mxu0 0.0
    %5335 = vmatpush1.msra.mxu0 %v5176
    %5336 = vmatprep.subr.mxu0 0.0
    %5337 = vmatpush1.msra.mxu0 %v5175
    %5338 = vmatprep.subr.mxu0 0.0
    %5339 = vmatpush1.msra.mxu0 %v5174
    %5340 = vmatprep.subr.mxu0 0.0
    %5341 = vmatpush1.msra.mxu0 %v5173
    %5342 = vmatprep.subr.mxu0 0.0
    %5343 = vmatpush2.msra.mxu0 0.0
    %5344 = vmatprep.subr.mxu0 0.0
    %5345 = vmatpush2.msra.mxu0 0.0
    %5346 = vmatprep.subr.mxu0 0.0
    %5347 = vmatpush2.msra.mxu0 0.0
    %5348 = vmatprep.subr.mxu0 0.0
    %5349 = vmatpush2.msra.mxu0 0.0
    %5350 = vmatprep.subr.mxu0 0.0
    %5351 = vmatpush2.msra.mxu0 0.0
    %5352 = vmatprep.subr.mxu0 0.0
    %5353 = vmatpush2.msra.mxu0 0.0
    %5354 = vmatprep.subr.mxu0 0.0
    %5355 = vmatpush2.msra.mxu0 0.0
    %5356 = vmatprep.subr.mxu0 0.0
    %5357 = vmatpush2.msra.mxu0 0.0
    %5358 = vmatprep.subr.mxu0 0.0
    %5359 = vmatpush2.msra.mxu0 0.0
    %5360 = vmatprep.subr.mxu0 0.0
    %5361 = vmatpush2.msra.mxu0 0.0
    %5362 = vmatprep.subr.mxu0 0.0
    %5363 = vmatpush2.msra.mxu0 0.0
    %5364 = vmatprep.subr.mxu0 0.0
    %5365 = vmatpush2.msra.mxu0 0.0
    %5366 = vmatprep.subr.mxu0 0.0
    %5367 = vmatpush2.msra.mxu0 0.0
    %5368 = vmatprep.subr.mxu0 0.0
    %5369 = vmatpush2.msra.mxu0 0.0
    %5370 = vmatprep.subr.mxu0 0.0
    %5371 = vmatpush2.msra.mxu0 0.0
    %5372 = vmatprep.subr.mxu0 0.0
    %5373 = vmatpush2.msra.mxu0 0.0
    %5374 = vmatprep.mubr.f32.mxu0 0.0
    %5375 = vmatmul.mubr.f32.gmra.mxu0 %v5287
    %v5376 = vpop.f32.mrf.mxu0
    %v5377 = vadd.f32 %v5248, %v5376
    %v5378 = vpop.f32.mrf.mxu0
    %5379 = vmatprep.mubr.f32.mxu0 0.0
    %5380 = vmatmul.mubr.f32.gmra.mxu0 %v5290
    %v5381 = vpop.f32.mrf.mxu0
    %v5382 = vadd.f32 %v5253, %v5381
    %v5383 = vpop.f32.mrf.mxu0
    %5384 = vmatprep.mubr.f32.mxu0 0.0
    %5385 = vmatmul.mubr.f32.gmra.mxu0 %v5293
    %v5386 = vpop.f32.mrf.mxu0
    %v5387 = vadd.f32 %v5258, %v5386
    %v5388 = vpop.f32.mrf.mxu0
    %5389 = vmatprep.mubr.f32.mxu0 0.0
    %5390 = vmatmul.mubr.f32.gmra.mxu0 %v5296
    %v5391 = vpop.f32.mrf.mxu0
    %v5392 = vadd.f32 %v5263, %v5391
    %v5393 = vpop.f32.mrf.mxu0
    %5394 = vmatprep.mubr.f32.mxu0 0.0
    %5395 = vmatmul.mubr.f32.gmra.mxu0 %v5299
    %v5396 = vpop.f32.mrf.mxu0
    %v5397 = vadd.f32 %v5268, %v5396
    %v5398 = vpop.f32.mrf.mxu0
    %5399 = vmatprep.mubr.f32.mxu0 0.0
    %5400 = vmatmul.mubr.f32.gmra.mxu0 %v5302
    %v5401 = vpop.f32.mrf.mxu0
    %v5402 = vadd.f32 %v5273, %v5401
    %v5403 = vpop.f32.mrf.mxu0
    %5404 = vmatprep.mubr.f32.mxu0 0.0
    %5405 = vmatmul.mubr.f32.gmra.mxu0 %v5305
    %v5406 = vpop.f32.mrf.mxu0
    %v5407 = vadd.f32 %v5278, %v5406
    %v5408 = vpop.f32.mrf.mxu0
    %5409 = vmatprep.mubr.f32.mxu0 0.0
    %5410 = vmatmul.mubr.f32.gmra.mxu0 %v5308
    %v5411 = vpop.f32.mrf.mxu0
    %v5412 = vadd.f32 %v5283, %v5411
    %v5413 = vpop.f32.mrf.mxu0
    %5414 = vdwg.mxu0
    %v5415 = vtanh.pop %v5377
    %v5416 = vtanh.pop %v5382
    %v5417 = vtanh.pop %v5387
    %v5418 = vtanh.pop %v5392
    %v5419 = vtanh.pop %v5397
    %v5420 = vtanh.pop %v5402
    %v5421 = vtanh.pop %v5407
    %v5422 = vtanh.pop %v5412
    %v5423 = vld [vmem:[#allocation15] sm:$0xff]
    %v5424 = vld [vmem:[#allocation15 + $0x8] sm:$0xff]
    %v5425 = vld [vmem:[#allocation15 + $0x10] sm:$0xff]
    %v5426 = vld [vmem:[#allocation15 + $0x18] sm:$0xff]
    %v5427 = vld [vmem:[%s10] sm:$0x1]
    %v5429 = vlaneseq
    %v5430 = vshrl.u32 %v5429, 7
    %v5431 = vsub.s32 0, %v5430
    %v5432 = vrot.slane %v5427, %v5431
    %v5435 = vsel %vm144, %v5415, 0
    %v5438 = vsel %vm144, %v5416, 0
    %v5441 = vsel %vm144, %v5417, 0
    %v5444 = vsel %vm144, %v5418, 0
    %v5447 = vsel %vm144, %v5419, 0
    %v5450 = vsel %vm144, %v5420, 0
    %v5453 = vsel %vm144, %v5421, 0
    %v5456 = vsel %vm144, %v5422, 0
    %5458 = vmatprep.subr.mxu0 0.0
    %5459 = vmatpush1.msra.mxu0 0.0
    %5460 = vmatprep.subr.mxu0 0.0
    %5461 = vmatpush1.msra.mxu0 0.0
    %5462 = vmatprep.subr.mxu0 0.0
    %5463 = vmatpush1.msra.mxu0 0.0
    %5464 = vmatprep.subr.mxu0 0.0
    %5465 = vmatpush1.msra.mxu0 0.0
    %5466 = vmatprep.subr.mxu0 0.0
    %5467 = vmatpush1.msra.mxu0 0.0
    %5468 = vmatprep.subr.mxu0 0.0
    %5469 = vmatpush1.msra.mxu0 0.0
    %5470 = vmatprep.subr.mxu0 0.0
    %5471 = vmatpush1.msra.mxu0 0.0
    %5472 = vmatprep.subr.mxu0 0.0
    %5473 = vmatpush1.msra.mxu0 0.0
    %5474 = vmatprep.subr.mxu0 0.0
    %5475 = vmatpush1.msra.mxu0 0.0
    %5476 = vmatprep.subr.mxu0 0.0
    %5477 = vmatpush1.msra.mxu0 0.0
    %5478 = vmatprep.subr.mxu0 0.0
    %5479 = vmatpush1.msra.mxu0 0.0
    %5480 = vmatprep.subr.mxu0 0.0
    %5481 = vmatpush1.msra.mxu0 0.0
    %5482 = vmatprep.subr.mxu0 0.0
    %5483 = vmatpush1.msra.mxu0 %v5426
    %5484 = vmatprep.subr.mxu0 0.0
    %5485 = vmatpush1.msra.mxu0 %v5425
    %5486 = vmatprep.subr.mxu0 0.0
    %5487 = vmatpush1.msra.mxu0 %v5424
    %5488 = vmatprep.subr.mxu0 0.0
    %5489 = vmatpush1.msra.mxu0 %v5423
    %5490 = vmatprep.subr.mxu0 0.0
    %5491 = vmatpush2.msra.mxu0 0.0
    %5492 = vmatprep.subr.mxu0 0.0
    %5493 = vmatpush2.msra.mxu0 0.0
    %5494 = vmatprep.subr.mxu0 0.0
    %5495 = vmatpush2.msra.mxu0 0.0
    %5496 = vmatprep.subr.mxu0 0.0
    %5497 = vmatpush2.msra.mxu0 0.0
    %5498 = vmatprep.subr.mxu0 0.0
    %5499 = vmatpush2.msra.mxu0 0.0
    %5500 = vmatprep.subr.mxu0 0.0
    %5501 = vmatpush2.msra.mxu0 0.0
    %5502 = vmatprep.subr.mxu0 0.0
    %5503 = vmatpush2.msra.mxu0 0.0
    %5504 = vmatprep.subr.mxu0 0.0
    %5505 = vmatpush2.msra.mxu0 0.0
    %5506 = vmatprep.subr.mxu0 0.0
    %5507 = vmatpush2.msra.mxu0 0.0
    %5508 = vmatprep.subr.mxu0 0.0
    %5509 = vmatpush2.msra.mxu0 0.0
    %5510 = vmatprep.subr.mxu0 0.0
    %5511 = vmatpush2.msra.mxu0 0.0
    %5512 = vmatprep.subr.mxu0 0.0
    %5513 = vmatpush2.msra.mxu0 0.0
    %5514 = vmatprep.subr.mxu0 0.0
    %5515 = vmatpush2.msra.mxu0 0.0
    %5516 = vmatprep.subr.mxu0 0.0
    %5517 = vmatpush2.msra.mxu0 0.0
    %5518 = vmatprep.subr.mxu0 0.0
    %5519 = vmatpush2.msra.mxu0 0.0
    %5520 = vmatprep.subr.mxu0 0.0
    %5521 = vmatpush2.msra.mxu0 0.0
    %5522 = vmatprep.mubr.f32.mxu0 0.0
    %5523 = vmatmul.mubr.f32.gmra.mxu0 %v5435
    %v5524 = vpop.f32.mrf.mxu0
    %v5525 = vadd.f32 %v5432, %v5524
    %v5526 = vpop.f32.mrf.mxu0
    %5527 = vmatprep.mubr.f32.mxu0 0.0
    %5528 = vmatmul.mubr.f32.gmra.mxu0 %v5438
    %v5529 = vpop.f32.mrf.mxu0
    %v5530 = vadd.f32 %v5432, %v5529
    %v5531 = vpop.f32.mrf.mxu0
    %5532 = vmatprep.mubr.f32.mxu0 0.0
    %5533 = vmatmul.mubr.f32.gmra.mxu0 %v5441
    %v5534 = vpop.f32.mrf.mxu0
    %v5535 = vadd.f32 %v5432, %v5534
    %v5536 = vpop.f32.mrf.mxu0
    %5537 = vmatprep.mubr.f32.mxu0 0.0
    %5538 = vmatmul.mubr.f32.gmra.mxu0 %v5444
    %v5539 = vpop.f32.mrf.mxu0
    %v5540 = vadd.f32 %v5432, %v5539
    %v5541 = vpop.f32.mrf.mxu0
    %5542 = vmatprep.mubr.f32.mxu0 0.0
    %5543 = vmatmul.mubr.f32.gmra.mxu0 %v5447
    %v5544 = vpop.f32.mrf.mxu0
    %v5545 = vadd.f32 %v5432, %v5544
    %v5546 = vpop.f32.mrf.mxu0
    %5547 = vmatprep.mubr.f32.mxu0 0.0
    %5548 = vmatmul.mubr.f32.gmra.mxu0 %v5450
    %v5549 = vpop.f32.mrf.mxu0
    %v5550 = vadd.f32 %v5432, %v5549
    %v5551 = vpop.f32.mrf.mxu0
    %5552 = vmatprep.mubr.f32.mxu0 0.0
    %5553 = vmatmul.mubr.f32.gmra.mxu0 %v5453
    %v5554 = vpop.f32.mrf.mxu0
    %v5555 = vadd.f32 %v5432, %v5554
    %v5556 = vpop.f32.mrf.mxu0
    %5557 = vmatprep.mubr.f32.mxu0 0.0
    %5558 = vmatmul.mubr.f32.gmra.mxu0 %v5456
    %v5559 = vpop.f32.mrf.mxu0
    %v5560 = vadd.f32 %v5432, %v5559
    %v5561 = vpop.f32.mrf.mxu0
    %5562 = vdwg.mxu0
    %5563 = vmax.xlane.f32.xlu0 %v5525
    %v5564 = vpop.xlane.xlu0 %5563
    %5565 = vmax.xlane.f32.xlu0 %v5530
    %v5566 = vpop.xlane.xlu0 %5565
    %5567 = vmax.xlane.f32.xlu0 %v5535
    %v5568 = vpop.xlane.xlu0 %5567
    %5569 = vmax.xlane.f32.xlu0 %v5540
    %v5570 = vpop.xlane.xlu0 %5569
    %5571 = vmax.xlane.f32.xlu0 %v5545
    %v5572 = vpop.xlane.xlu0 %5571
    %5573 = vmax.xlane.f32.xlu0 %v5550
    %v5574 = vpop.xlane.xlu0 %5573
    %5575 = vmax.xlane.f32.xlu0 %v5555
    %v5576 = vpop.xlane.xlu0 %5575
    %5577 = vmax.xlane.f32.xlu0 %v5560
    %v5578 = vpop.xlane.xlu0 %5577
    %v5579 = vsub.f32 %v5525, %v5564
    %v5580 = vsub.f32 %v5530, %v5566
    %v5581 = vsub.f32 %v5535, %v5568
    %v5582 = vsub.f32 %v5540, %v5570
    %v5583 = vsub.f32 %v5545, %v5572
    %v5584 = vsub.f32 %v5550, %v5574
    %v5585 = vsub.f32 %v5555, %v5576
    %v5586 = vsub.f32 %v5560, %v5578
    %v5587 = vmul.f32 %v5579, 1.442695
    %v5588 = vpow.pop %v5587
    %v5589 = vmul.f32 %v5580, 1.442695
    %v5590 = vpow.pop %v5589
    %v5591 = vmul.f32 %v5581, 1.442695
    %v5592 = vpow.pop %v5591
    %v5593 = vmul.f32 %v5582, 1.442695
    %v5594 = vpow.pop %v5593
    %v5595 = vmul.f32 %v5583, 1.442695
    %v5596 = vpow.pop %v5595
    %v5597 = vmul.f32 %v5584, 1.442695
    %v5598 = vpow.pop %v5597
    %v5599 = vmul.f32 %v5585, 1.442695
    %v5600 = vpow.pop %v5599
    %v5601 = vmul.f32 %v5586, 1.442695
    %v5602 = vpow.pop %v5601
    %5603 = vadd.xlane.f32.xlu0 %v5588
    %v5604 = vpop.xlane.xlu0 %5603
    %5605 = vadd.xlane.f32.xlu0 %v5590
    %v5606 = vpop.xlane.xlu0 %5605
    %5607 = vadd.xlane.f32.xlu0 %v5592
    %v5608 = vpop.xlane.xlu0 %5607
    %5609 = vadd.xlane.f32.xlu0 %v5594
    %v5610 = vpop.xlane.xlu0 %5609
    %5611 = vadd.xlane.f32.xlu0 %v5596
    %v5612 = vpop.xlane.xlu0 %5611
    %5613 = vadd.xlane.f32.xlu0 %v5598
    %v5614 = vpop.xlane.xlu0 %5613
    %5615 = vadd.xlane.f32.xlu0 %v5600
    %v5616 = vpop.xlane.xlu0 %5615
    %5617 = vadd.xlane.f32.xlu0 %v5602
    %v5618 = vpop.xlane.xlu0 %5617
    %v5619 = vlog2.pop %v5604
    %v5620 = vmul.f32 %v5619, 0.6931472
    %v5621 = vlog2.pop %v5606
    %v5622 = vmul.f32 %v5621, 0.6931472
    %v5623 = vlog2.pop %v5608
    %v5624 = vmul.f32 %v5623, 0.6931472
    %v5625 = vlog2.pop %v5610
    %v5626 = vmul.f32 %v5625, 0.6931472
    %v5627 = vlog2.pop %v5612
    %v5628 = vmul.f32 %v5627, 0.6931472
    %v5629 = vlog2.pop %v5614
    %v5630 = vmul.f32 %v5629, 0.6931472
    %v5631 = vlog2.pop %v5616
    %v5632 = vmul.f32 %v5631, 0.6931472
    %v5633 = vlog2.pop %v5618
    %v5634 = vmul.f32 %v5633, 0.6931472
    %v5635 = vadd.f32 %v5564, %v5620
    %v5636 = vadd.f32 %v5566, %v5622
    %v5637 = vadd.f32 %v5568, %v5624
    %v5638 = vadd.f32 %v5570, %v5626
    %v5639 = vadd.f32 %v5572, %v5628
    %v5640 = vadd.f32 %v5574, %v5630
    %v5641 = vadd.f32 %v5576, %v5632
    %v5642 = vadd.f32 %v5578, %v5634
    %v5643 = vsub.f32 %v5525, %v5635
    %v5644 = vsub.f32 %v5530, %v5636
    %v5645 = vsub.f32 %v5535, %v5637
    %v5646 = vsub.f32 %v5540, %v5638
    %v5647 = vsub.f32 %v5545, %v5639
    %v5648 = vsub.f32 %v5550, %v5640
    %v5649 = vsub.f32 %v5555, %v5641
    %v5650 = vsub.f32 %v5560, %v5642
    %v5651 = vld [vmem:[%s3] sm:$0xff]
    %v5652 = vld [vmem:[%s3 + $0x8] sm:$0xff]
    %v5653 = vld [vmem:[%s3 + $0x10] sm:$0xff]
    %v5654 = vld [vmem:[%s3 + $0x18] sm:$0xff]
    %v5655 = vld [vmem:[%s3 + $0x20] sm:$0xff]
    %v5656 = vld [vmem:[%s3 + $0x28] sm:$0xff]
    %v5657 = vld [vmem:[%s3 + $0x30] sm:$0xff]
    %v5658 = vld [vmem:[%s3 + $0x38] sm:$0xff]
    %5659 = vset.pattern.permute.xlu0 0
    %5660 = vperm.xlu0 %5659, %v5651
    %v5661 = vpop.permute.xlu0 %5660
    %5662 = vset.pattern.permute.xlu0 0
    %5663 = vperm.xlu0 %5662, %v5652
    %v5664 = vpop.permute.xlu0 %5663
    %5665 = vset.pattern.permute.xlu0 0
    %5666 = vperm.xlu0 %5665, %v5653
    %v5667 = vpop.permute.xlu0 %5666
    %5668 = vset.pattern.permute.xlu0 0
    %5669 = vperm.xlu0 %5668, %v5654
    %v5670 = vpop.permute.xlu0 %5669
    %5671 = vset.pattern.permute.xlu0 0
    %5672 = vperm.xlu0 %5671, %v5655
    %v5673 = vpop.permute.xlu0 %5672
    %5674 = vset.pattern.permute.xlu0 0
    %5675 = vperm.xlu0 %5674, %v5656
    %v5676 = vpop.permute.xlu0 %5675
    %5677 = vset.pattern.permute.xlu0 0
    %5678 = vperm.xlu0 %5677, %v5657
    %v5679 = vpop.permute.xlu0 %5678
    %5680 = vset.pattern.permute.xlu0 0
    %5681 = vperm.xlu0 %5680, %v5658
    %v5682 = vpop.permute.xlu0 %5681
    %vm5683 = vcmp.eq.s32.totalorder %v3796, %v5661
    %vm5684 = vcmp.eq.s32.totalorder %v3796, %v5664
    %vm5685 = vcmp.eq.s32.totalorder %v3796, %v5667
    %vm5686 = vcmp.eq.s32.totalorder %v3796, %v5670
    %vm5687 = vcmp.eq.s32.totalorder %v3796, %v5673
    %vm5688 = vcmp.eq.s32.totalorder %v3796, %v5676
    %vm5689 = vcmp.eq.s32.totalorder %v3796, %v5679
    %vm5690 = vcmp.eq.s32.totalorder %v3796, %v5682
    %v5691 = vsel %vm5683, %v5643, 0.0
    %v5692 = vsel %vm5684, %v5644, 0.0
    %v5693 = vsel %vm5685, %v5645, 0.0
    %v5694 = vsel %vm5686, %v5646, 0.0
    %v5695 = vsel %vm5687, %v5647, 0.0
    %v5696 = vsel %vm5688, %v5648, 0.0
    %v5697 = vsel %vm5689, %v5649, 0.0
    %v5698 = vsel %vm5690, %v5650, 0.0
    %5699 = vadd.xlane.f32.xlu0 %v5691
    %v5700 = vpop.xlane.xlu0 %5699
    %5701 = vadd.xlane.f32.xlu0 %v5692
    %v5702 = vpop.xlane.xlu0 %5701
    %5703 = vadd.xlane.f32.xlu0 %v5693
    %v5704 = vpop.xlane.xlu0 %5703
    %5705 = vadd.xlane.f32.xlu0 %v5694
    %v5706 = vpop.xlane.xlu0 %5705
    %5707 = vadd.xlane.f32.xlu0 %v5695
    %v5708 = vpop.xlane.xlu0 %5707
    %5709 = vadd.xlane.f32.xlu0 %v5696
    %v5710 = vpop.xlane.xlu0 %5709
    %5711 = vadd.xlane.f32.xlu0 %v5697
    %v5712 = vpop.xlane.xlu0 %5711
    %5713 = vadd.xlane.f32.xlu0 %v5698
    %v5714 = vpop.xlane.xlu0 %5713
    %v5715 = vsub.f32 0.0, %v5700
    %v5716 = vsub.f32 0.0, %v5702
    %v5717 = vsub.f32 0.0, %v5704
    %v5718 = vsub.f32 0.0, %v5706
    %v5719 = vsub.f32 0.0, %v5708
    %v5720 = vsub.f32 0.0, %v5710
    %v5721 = vsub.f32 0.0, %v5712
    %v5722 = vsub.f32 0.0, %v5714
    %vm5723 = vcmp.ne.s32.totalorder %v5651, 0
    %vm5724 = vcmp.ne.s32.totalorder %v5652, 0
    %vm5725 = vcmp.ne.s32.totalorder %v5653, 0
    %vm5726 = vcmp.ne.s32.totalorder %v5654, 0
    %vm5727 = vcmp.ne.s32.totalorder %v5655, 0
    %vm5728 = vcmp.ne.s32.totalorder %v5656, 0
    %vm5729 = vcmp.ne.s32.totalorder %v5657, 0
    %vm5730 = vcmp.ne.s32.totalorder %v5658, 0
    %v5731 = vsel %vm5723, 1, 0
    %v5732 = vsel %vm5724, 1, 0
    %v5733 = vsel %vm5725, 1, 0
    %v5734 = vsel %vm5726, 1, 0
    %v5735 = vsel %vm5727, 1, 0
    %v5736 = vsel %vm5728, 1, 0
    %v5737 = vsel %vm5729, 1, 0
    %v5738 = vsel %vm5730, 1, 0
    %v5739 = vcvt.s32.f32 %v5731
    %v5740 = vcvt.s32.f32 %v5732
    %v5741 = vcvt.s32.f32 %v5733
    %v5742 = vcvt.s32.f32 %v5734
    %v5743 = vcvt.s32.f32 %v5735
    %v5744 = vcvt.s32.f32 %v5736
    %v5745 = vcvt.s32.f32 %v5737
    %v5746 = vcvt.s32.f32 %v5738
    %v5747 = vmul.f32 %v5715, %v5739
    %v5748 = vmul.f32 %v5716, %v5740
    %v5749 = vmul.f32 %v5717, %v5741
    %v5750 = vmul.f32 %v5718, %v5742
    %v5751 = vmul.f32 %v5719, %v5743
    %v5752 = vmul.f32 %v5720, %v5744
    %v5753 = vmul.f32 %v5721, %v5745
    %v5754 = vmul.f32 %v5722, %v5746
    %vm5755 = vcmask 7168
    %v5756 = vsel %vm5755, %v5747, 0.0
    %v5757 = vsel %vm5755, %v5748, 0.0
    %v5758 = vadd.f32 %v5756, %v5757
    %v5759 = vsel %vm5755, %v5749, 0.0
    %v5760 = vadd.f32 %v5758, %v5759
    %v5761 = vsel %vm5755, %v5750, 0.0
    %v5762 = vadd.f32 %v5760, %v5761
    %v5763 = vsel %vm5755, %v5751, 0.0
    %v5764 = vadd.f32 %v5762, %v5763
    %v5765 = vsel %vm5755, %v5752, 0.0
    %v5766 = vadd.f32 %v5764, %v5765
    %v5767 = vsel %vm5755, %v5753, 0.0
    %v5768 = vadd.f32 %v5766, %v5767
    %v5769 = vsel %vm5755, %v5754, 0.0
    %v5770 = vadd.f32 %v5768, %v5769
    %5771 = vadd.xlane.f32.xlu0 %v5770
    %v5772 = vpop.xlane.xlu0 %5771
    %v5773 = vrot.slane %v5772, 4
    %v5774 = vadd.f32 %v5772, %v5773
    %v5775 = vrot.slane %v5774, 2
    %v5776 = vadd.f32 %v5774, %v5775
    %v5777 = vrot.slane %v5776, 1
    %v5778 = vadd.f32 %v5776, %v5777
    %s5779 = vtos %v5778
    %v5780 = vstv %s5779
    %v5781 = vmul.f32 %v5780, 0.5
    %vm5782 = vcmask 0
    %5783 = vst.msk [vmem:[#allocation16] sm:$0x1] %vm5782, %v5781
    // Predicated region
    $region74: #{tpu_custom_call.1} parent=1 // pred_check
      _
    $region75: #{tpu_custom_call.1} parent=1 // pred_check_branch
      %5785 = sbr.rel (0) target = $region77
    $region76: #{tpu_custom_call.1} parent=1 // pred_region
      %s5787 = ssub.s32 16, 16
      %5788 = vsyncadd [#allocation6], %s5787
      %s5790 = sshll.u32 [#allocation16], 4
      %s5791 = int_to_ptr.vmem [resolvable:$true] %s5790
      %5793 = dma.vmem_to_hbm [thread:$0]  %s5791, 16, %s11, [#allocation6]
    $region77: #{tpu_custom_call.1} parent=1 // pred_fallthru
      _
    // Predicated region
    $region78: #{tpu_custom_call.1} parent=1 // pred_check
      _
    $region79: #{tpu_custom_call.1} parent=1 // pred_check_branch
      %5795 = sbr.rel (0) target = $region81
    $region80: #{tpu_custom_call.1} parent=1 // pred_region
      %5796 = dma.done [#allocation6], 16
    $region81: #{tpu_custom_call.1} parent=1 // pred_fallthru
      _
    %5797 = vsyncpa [#allocation5], 1
    %5798 = vsyncpa [#allocation8], 1
    %5799 = vsyncpa [#allocation11], 1
    %5800 = vsyncpa [#allocation14], 1
    %5801 = vsyncpa [#allocation6], 1

</llo_original>
